<compile_context>
chip_gen: v7x
topology: tpu7x:2x2x1
jax: 0.10.0
libtpu: 0.0.40
codegen_flags: <defaults>
</compile_context>

<pallas_src>
import functools
import math

import jax
import jax.numpy as jnp
from jax.experimental import pallas as pl
from jax.experimental.pallas import tpu as pltpu

# ---- model dimensions (small, consistent with hid_in_features=128) ----
B = 2            # batch
S = 8            # sequence length
H = 128          # hidden size (== hid_in_features)
NH = 2           # attention heads
DH = H // NH     # head dim
FFN = 4 * H      # feed-forward dim
OUT = 128        # num_outputs of final Linear
VOCAB = 64
N_LAYERS = 2
LN_EPS = 1e-12
BS = B * S       # batch folded into sublanes


# ---------------------------------------------------------------------------
# in-kernel helpers (all elementwise math stays f32)
# ---------------------------------------------------------------------------
def _layernorm(x, g, b):
    mu = jnp.mean(x, axis=-1, keepdims=True)
    var = jnp.mean((x - mu) ** 2, axis=-1, keepdims=True)
    return (x - mu) * jax.lax.rsqrt(var + LN_EPS) * g + b


def _gelu(x):
    # TODO(synk): PyTorch nn.GELU defaults to the exact erf form; tanh approx
    # differs at ~1e-3 level.
    c = math.sqrt(2.0 / math.pi)
    return 0.5 * x * (1.0 + jnp.tanh(c * (x + 0.044715 * x * x * x)))


def _mm(x, w_bf16, b_f32):
    # bf16 MXU operands, f32 accumulation, f32 bias add.
    return jnp.dot(x.astype(jnp.bfloat16), w_bf16,
                   preferred_element_type=jnp.float32) + b_f32


# ---------------------------------------------------------------------------
# fused kernel: embedding LN -> N transformer layers -> output Linear
# ---------------------------------------------------------------------------
def fused_bert_kernel(vl_ref,                     # SMEM (B,) int32
                      emb_ref,                    # (BS, H) f32
                      emb_ln_g, emb_ln_b,         # (1, H) f32
                      wqkv, bqkv,                 # (L, H, 3H) bf16 / (L, 1, 3H) f32
                      wo, bo,                     # (L, H, H) bf16 / (L, 1, H) f32
                      ln1g, ln1b,                 # (L, 1, H) f32
                      w1, b1,                     # (L, H, FFN) bf16 / (L, 1, FFN) f32
                      w2, b2,                     # (L, FFN, H) bf16 / (L, 1, H) f32
                      ln2g, ln2b,                 # (L, 1, H) f32
                      out_w, out_b,               # (H, OUT) bf16 / (1, OUT) f32
                      o_ref,                      # (BS, OUT) f32
                      ctx_ref):                   # VMEM scratch (BS, H) f32
    # Additive key masks per batch, built from SMEM scalars + iota.
    kpos = jax.lax.broadcasted_iota(jnp.int32, (1, S), 1)
    add_mask = [jnp.where(kpos < vl_ref[b], 0.0, -1e9).astype(jnp.float32)
                for b in range(B)]

    # embedding LayerNorm
    h = _layernorm(emb_ref[...], emb_ln_g[...], emb_ln_b[...])       # (BS, H) f32

    scale = 1.0 / math.sqrt(DH)
    for l in range(N_LAYERS):                    # static unroll over layers
        # fused QKV projection: single (BS, H) @ (H, 3H) MXU pass
        qkv = _mm(h, wqkv[l], bqkv[l])           # (BS, 3H) f32

        # multi-head attention: tiny (S, S) score blocks per (batch, head);
        # contexts go straight into the VMEM scratch (no lane concatenate).
        for b in range(B):
            r0, r1 = b * S, (b + 1) * S
            for hd in range(NH):
                c0, c1 = hd * DH, (hd + 1) * DH
                qh = qkv[r0:r1, c0:c1]
                kh = qkv[r0:r1, H + c0:H + c1]
                vh = qkv[r0:r1, 2 * H + c0:2 * H + c1]
                s = jnp.dot(qh, kh.T, preferred_element_type=jnp.float32) * scale
                s = s + add_mask[b]
                s = s - jnp.max(s, axis=-1, keepdims=True)
                e = jnp.exp(s)
                p = e * pl.reciprocal(jnp.sum(e, axis=-1, keepdims=True),
                                      approx=True)
                ctx_ref[r0:r1, c0:c1] = jnp.dot(
                    p, vh, preferred_element_type=jnp.float32)

        attn = _mm(ctx_ref[...], wo[l], bo[l])                        # (BS, H)
        h1 = _layernorm(h + attn, ln1g[l], ln1b[l])

        f = _gelu(_mm(h1, w1[l], b1[l]))                              # (BS, FFN)
        f = _mm(f, w2[l], b2[l])                                      # (BS, H)
        h = _layernorm(h1 + f, ln2g[l], ln2b[l])

    # final nn.Linear(H, OUT) on the last hidden state
    o_ref[...] = _mm(h, out_w[...], out_b[...])


# ---------------------------------------------------------------------------
# parameter construction (deterministic)
# ---------------------------------------------------------------------------
def init_params(key):
    def nrm(k, shape, dtype=jnp.float32):
        return (0.02 * jax.random.normal(k, shape, dtype=jnp.float32)).astype(dtype)

    keys = iter(jax.random.split(key, 32))
    L = N_LAYERS
    return {
        "word_emb": nrm(next(keys), (VOCAB, H)),
        "pos_emb": nrm(next(keys), (S, H)),
        "type_emb": nrm(next(keys), (2, H)),
        "emb_ln_g": jnp.ones((1, H), jnp.float32),
        "emb_ln_b": jnp.zeros((1, H), jnp.float32),
        # MXU-operand weights in bf16; biases / LN params in f32.
        "wqkv": nrm(next(keys), (L, H, 3 * H), jnp.bfloat16),
        "bqkv": jnp.zeros((L, 1, 3 * H), jnp.float32),
        "wo": nrm(next(keys), (L, H, H), jnp.bfloat16),
        "bo": jnp.zeros((L, 1, H), jnp.float32),
        "ln1g": jnp.ones((L, 1, H), jnp.float32),
        "ln1b": jnp.zeros((L, 1, H), jnp.float32),
        "w1": nrm(next(keys), (L, H, FFN), jnp.bfloat16),
        "b1": jnp.zeros((L, 1, FFN), jnp.float32),
        "w2": nrm(next(keys), (L, FFN, H), jnp.bfloat16),
        "b2": jnp.zeros((L, 1, H), jnp.float32),
        "ln2g": jnp.ones((L, 1, H), jnp.float32),
        "ln2b": jnp.zeros((L, 1, H), jnp.float32),
        "out_w": nrm(next(keys), (H, OUT), jnp.bfloat16),
        "out_b": jnp.zeros((1, OUT), jnp.float32),
    }


_WEIGHT_ORDER = ("emb_ln_g", "emb_ln_b", "wqkv", "bqkv", "wo", "bo",
                 "ln1g", "ln1b", "w1", "b1", "w2", "b2", "ln2g", "ln2b",
                 "out_w", "out_b")


# ---------------------------------------------------------------------------
# forward pass (mirrors BERTEncoder.forward)
# ---------------------------------------------------------------------------
def bert_encoder_forward(params, X, valid_lens):
    # token_type_ids = zeros_like(X) -> token_type embedding row 0 everywhere.
    # Embedding gather kept as plain-JAX glue; everything else is one kernel.
    emb = (jnp.take(params["word_emb"], X, axis=0)
           + params["pos_emb"][None, :, :]
           + params["type_emb"][0][None, None, :])
    emb = emb.reshape(BS, H)                                   # fold batch

    vmem = functools.partial(pl.BlockSpec, memory_space=pltpu.MemorySpace.VMEM)
    smem = pl.BlockSpec(memory_space=pltpu.MemorySpace.SMEM)
    weights = [params[k] for k in _WEIGHT_ORDER]

    out = pl.pallas_call(
        fused_bert_kernel,
        in_specs=[smem, vmem()] + [vmem() for _ in weights],
        out_specs=vmem(),
        out_shape=jax.ShapeDtypeStruct((BS, OUT), jnp.float32),
        scratch_shapes=[pltpu.VMEM((BS, H), jnp.float32)],
    )(valid_lens.astype(jnp.int32), emb, *weights)
    return out.reshape(B, S, OUT)


if __name__ == "__main__":
    key = jax.random.PRNGKey(0)
    k_param, k_tok = jax.random.split(key)
    params = init_params(k_param)

    X = jax.random.randint(k_tok, (B, S), 0, VOCAB, dtype=jnp.int32)
    valid_lens = jnp.array([S, 5], dtype=jnp.int32)

    fwd = jax.jit(bert_encoder_forward)
    out = fwd(params, X, valid_lens)
    jax.block_until_ready(out)
    assert out.shape == (B, S, OUT)
    print("KERNEL_OK")
</pallas_src>

<mosaic_0001>
module attributes {stable_mosaic.version = 11 : i64} {
  func.func @fused_bert_kernel(%arg0: memref<2xi32, #tpu.memory_space<smem>>, %arg1: memref<16x128xf32, #tpu.memory_space<vmem>>, %arg2: memref<1x128xf32, #tpu.memory_space<vmem>>, %arg3: memref<1x128xf32, #tpu.memory_space<vmem>>, %arg4: memref<2x128x384xbf16, #tpu.memory_space<vmem>>, %arg5: memref<2x1x384xf32, #tpu.memory_space<vmem>>, %arg6: memref<2x128x128xbf16, #tpu.memory_space<vmem>>, %arg7: memref<2x1x128xf32, #tpu.memory_space<vmem>>, %arg8: memref<2x1x128xf32, #tpu.memory_space<vmem>>, %arg9: memref<2x1x128xf32, #tpu.memory_space<vmem>>, %arg10: memref<2x128x512xbf16, #tpu.memory_space<vmem>>, %arg11: memref<2x1x512xf32, #tpu.memory_space<vmem>>, %arg12: memref<2x512x128xbf16, #tpu.memory_space<vmem>>, %arg13: memref<2x1x128xf32, #tpu.memory_space<vmem>>, %arg14: memref<2x1x128xf32, #tpu.memory_space<vmem>>, %arg15: memref<2x1x128xf32, #tpu.memory_space<vmem>>, %arg16: memref<128x128xbf16, #tpu.memory_space<vmem>>, %arg17: memref<1x128xf32, #tpu.memory_space<vmem>>, %arg18: memref<16x128xf32, #tpu.memory_space<vmem>>, %arg19: memref<16x128xf32, #tpu.memory_space<vmem>>) attributes {dimension_semantics = [], scalar_prefetch = 0 : i64, scratch_operands = 1 : i64, tpu.core_type = #tpu.core_type<tc>} {
    %0 = tpu.iota {dimensions = array<i32: 1>} : vector<1x8xi32>
    %c0 = arith.constant 0 : index
    %1 = memref.load %arg0[%c0] : memref<2xi32, #tpu.memory_space<smem>>
    %2 = vector.broadcast %1 : i32 to vector<1x8xi32>
    %3 = arith.cmpi slt, %0, %2 : vector<1x8xi32>
    %cst = arith.constant 0.000000e+00 : f32
    %cst_0 = arith.constant -1.000000e+09 : f32
    %4 = vector.broadcast %cst : f32 to vector<1x8xf32>
    %5 = vector.broadcast %cst_0 : f32 to vector<1x8xf32>
    %6 = arith.select %3, %4, %5 : vector<1x8xi1>, vector<1x8xf32>
    %c1 = arith.constant 1 : index
    %7 = memref.load %arg0[%c1] : memref<2xi32, #tpu.memory_space<smem>>
    %8 = vector.broadcast %7 : i32 to vector<1x8xi32>
    %9 = arith.cmpi slt, %0, %8 : vector<1x8xi32>
    %cst_1 = arith.constant 0.000000e+00 : f32
    %cst_2 = arith.constant -1.000000e+09 : f32
    %10 = vector.broadcast %cst_1 : f32 to vector<1x8xf32>
    %11 = vector.broadcast %cst_2 : f32 to vector<1x8xf32>
    %12 = arith.select %9, %10, %11 : vector<1x8xi1>, vector<1x8xf32>
    %c0_3 = arith.constant 0 : index
    %c0_4 = arith.constant 0 : index
    %13 = vector.load %arg1[%c0_3, %c0_4] : memref<16x128xf32, #tpu.memory_space<vmem>>, vector<16x128xf32>
    %c0_5 = arith.constant 0 : index
    %c0_6 = arith.constant 0 : index
    %14 = vector.load %arg2[%c0_5, %c0_6] : memref<1x128xf32, #tpu.memory_space<vmem>>, vector<1x128xf32>
    %c0_7 = arith.constant 0 : index
    %c0_8 = arith.constant 0 : index
    %15 = vector.load %arg3[%c0_7, %c0_8] : memref<1x128xf32, #tpu.memory_space<vmem>>, vector<1x128xf32>
    %cst_9 = arith.constant dense<0.000000e+00> : vector<16xf32>
    %16 = vector.multi_reduction <add>, %13, %cst_9 [1] : vector<16x128xf32> to vector<16xf32>
    %17 = vector.shape_cast %16 : vector<16xf32> to vector<16x1xf32>
    %cst_10 = arith.constant 1.280000e+02 : f32
    %18 = vector.broadcast %cst_10 : f32 to vector<16x1xf32>
    %19 = arith.divf %17, %18 : vector<16x1xf32>
    %20 = vector.broadcast %19 : vector<16x1xf32> to vector<16x128xf32>
    %21 = arith.subf %13, %20 : vector<16x128xf32>
    %22 = arith.mulf %21, %21 : vector<16x128xf32>
    %cst_11 = arith.constant dense<0.000000e+00> : vector<16xf32>
    %23 = vector.multi_reduction <add>, %22, %cst_11 [1] : vector<16x128xf32> to vector<16xf32>
    %24 = vector.shape_cast %23 : vector<16xf32> to vector<16x1xf32>
    %cst_12 = arith.constant 1.280000e+02 : f32
    %25 = vector.broadcast %cst_12 : f32 to vector<16x1xf32>
    %26 = arith.divf %24, %25 : vector<16x1xf32>
    %27 = vector.broadcast %19 : vector<16x1xf32> to vector<16x128xf32>
    %28 = arith.subf %13, %27 : vector<16x128xf32>
    %cst_13 = arith.constant 9.99999996E-13 : f32
    %29 = vector.broadcast %cst_13 : f32 to vector<16x1xf32>
    %30 = arith.addf %26, %29 : vector<16x1xf32>
    %31 = math.rsqrt %30 : vector<16x1xf32>
    %32 = vector.broadcast %31 : vector<16x1xf32> to vector<16x128xf32>
    %33 = arith.mulf %28, %32 : vector<16x128xf32>
    %34 = vector.broadcast %14 : vector<1x128xf32> to vector<16x128xf32>
    %35 = arith.mulf %33, %34 : vector<16x128xf32>
    %36 = vector.broadcast %15 : vector<1x128xf32> to vector<16x128xf32>
    %37 = arith.addf %35, %36 : vector<16x128xf32>
    %c0_14 = arith.constant 0 : index
    %c0_15 = arith.constant 0 : index
    %c0_16 = arith.constant 0 : index
    %38 = vector.load %arg4[%c0_14, %c0_15, %c0_16] : memref<2x128x384xbf16, #tpu.memory_space<vmem>>, vector<1x128x384xbf16>
    %39 = vector.shape_cast %38 : vector<1x128x384xbf16> to vector<128x384xbf16>
    %c0_17 = arith.constant 0 : index
    %c0_18 = arith.constant 0 : index
    %c0_19 = arith.constant 0 : index
    %40 = vector.load %arg5[%c0_17, %c0_18, %c0_19] : memref<2x1x384xf32, #tpu.memory_space<vmem>>, vector<1x1x384xf32>
    %41 = vector.shape_cast %40 : vector<1x1x384xf32> to vector<1x384xf32>
    %42 = arith.truncf %37 : vector<16x128xf32> to vector<16x128xbf16>
    %cst_20 = arith.constant dense<0.000000e+00> : vector<16x384xf32>
    %43 = tpu.matmul %42, %39, %cst_20 {dimension_numbers = #tpu.dot_dimension_numbers<[1], [0], [0], [1], [0, 0, 1, 1], [], []>} : vector<16x128xbf16>, vector<128x384xbf16>, vector<16x384xf32> -> vector<16x384xf32>
    %44 = vector.broadcast %41 : vector<1x384xf32> to vector<16x384xf32>
    %45 = arith.addf %43, %44 : vector<16x384xf32>
    %46 = vector.extract_strided_slice %45 {offsets = [0, 0], sizes = [8, 64], strides = [1, 1]} : vector<16x384xf32> to vector<8x64xf32>
    %47 = vector.extract_strided_slice %45 {offsets = [0, 128], sizes = [8, 64], strides = [1, 1]} : vector<16x384xf32> to vector<8x64xf32>
    %48 = vector.extract_strided_slice %45 {offsets = [0, 256], sizes = [8, 64], strides = [1, 1]} : vector<16x384xf32> to vector<8x64xf32>
    %49 = tpu.transpose %47, [1, 0] : vector<8x64xf32> -> vector<64x8xf32>
    %cst_21 = arith.constant dense<0.000000e+00> : vector<8x8xf32>
    %50 = tpu.matmul %46, %49, %cst_21 {dimension_numbers = #tpu.dot_dimension_numbers<[1], [0], [0], [1], [0, 0, 1, 1], [], []>} : vector<8x64xf32>, vector<64x8xf32>, vector<8x8xf32> -> vector<8x8xf32>
    %cst_22 = arith.constant 1.250000e-01 : f32
    %51 = vector.broadcast %cst_22 : f32 to vector<8x8xf32>
    %52 = arith.mulf %50, %51 : vector<8x8xf32>
    %53 = vector.broadcast %6 : vector<1x8xf32> to vector<8x8xf32>
    %54 = arith.addf %52, %53 : vector<8x8xf32>
    %cst_23 = arith.constant dense<0xFF800000> : vector<8xf32>
    %55 = vector.multi_reduction <maximumf>, %54, %cst_23 [1] : vector<8x8xf32> to vector<8xf32>
    %56 = vector.shape_cast %55 : vector<8xf32> to vector<8x1xf32>
    %57 = vector.broadcast %56 : vector<8x1xf32> to vector<8x8xf32>
    %58 = arith.subf %54, %57 : vector<8x8xf32>
    %59 = math.exp %58 : vector<8x8xf32>
    %cst_24 = arith.constant dense<0.000000e+00> : vector<8xf32>
    %60 = vector.multi_reduction <add>, %59, %cst_24 [1] : vector<8x8xf32> to vector<8xf32>
    %61 = vector.shape_cast %60 : vector<8xf32> to vector<8x1xf32>
    %62 = tpu.reciprocal %61 {approx = true} : vector<8x1xf32> -> vector<8x1xf32>
    %63 = vector.broadcast %62 : vector<8x1xf32> to vector<8x8xf32>
    %64 = arith.mulf %59, %63 : vector<8x8xf32>
    %cst_25 = arith.constant dense<0.000000e+00> : vector<8x64xf32>
    %65 = tpu.matmul %64, %48, %cst_25 {dimension_numbers = #tpu.dot_dimension_numbers<[1], [0], [0], [1], [0, 0, 1, 1], [], []>} : vector<8x8xf32>, vector<8x64xf32>, vector<8x64xf32> -> vector<8x64xf32>
    %c0_26 = arith.constant 0 : index
    %c0_27 = arith.constant 0 : index
    %66 = vector.load %arg19[%c0_26, %c0_27] : memref<16x128xf32, #tpu.memory_space<vmem>>, vector<8x64xf32>
    tpu.vector_store %arg19[%c0_26, %c0_27], %65 {strides = array<i32>} : memref<16x128xf32, #tpu.memory_space<vmem>>, vector<8x64xf32>,
    %67 = vector.extract_strided_slice %45 {offsets = [0, 64], sizes = [8, 64], strides = [1, 1]} : vector<16x384xf32> to vector<8x64xf32>
    %68 = vector.extract_strided_slice %45 {offsets = [0, 192], sizes = [8, 64], strides = [1, 1]} : vector<16x384xf32> to vector<8x64xf32>
    %69 = vector.extract_strided_slice %45 {offsets = [0, 320], sizes = [8, 64], strides = [1, 1]} : vector<16x384xf32> to vector<8x64xf32>
    %70 = tpu.transpose %68, [1, 0] : vector<8x64xf32> -> vector<64x8xf32>
    %cst_28 = arith.constant dense<0.000000e+00> : vector<8x8xf32>
    %71 = tpu.matmul %67, %70, %cst_28 {dimension_numbers = #tpu.dot_dimension_numbers<[1], [0], [0], [1], [0, 0, 1, 1], [], []>} : vector<8x64xf32>, vector<64x8xf32>, vector<8x8xf32> -> vector<8x8xf32>
    %cst_29 = arith.constant 1.250000e-01 : f32
    %72 = vector.broadcast %cst_29 : f32 to vector<8x8xf32>
    %73 = arith.mulf %71, %72 : vector<8x8xf32>
    %74 = vector.broadcast %6 : vector<1x8xf32> to vector<8x8xf32>
    %75 = arith.addf %73, %74 : vector<8x8xf32>
    %cst_30 = arith.constant dense<0xFF800000> : vector<8xf32>
    %76 = vector.multi_reduction <maximumf>, %75, %cst_30 [1] : vector<8x8xf32> to vector<8xf32>
    %77 = vector.shape_cast %76 : vector<8xf32> to vector<8x1xf32>
    %78 = vector.broadcast %77 : vector<8x1xf32> to vector<8x8xf32>
    %79 = arith.subf %75, %78 : vector<8x8xf32>
    %80 = math.exp %79 : vector<8x8xf32>
    %cst_31 = arith.constant dense<0.000000e+00> : vector<8xf32>
    %81 = vector.multi_reduction <add>, %80, %cst_31 [1] : vector<8x8xf32> to vector<8xf32>
    %82 = vector.shape_cast %81 : vector<8xf32> to vector<8x1xf32>
    %83 = tpu.reciprocal %82 {approx = true} : vector<8x1xf32> -> vector<8x1xf32>
    %84 = vector.broadcast %83 : vector<8x1xf32> to vector<8x8xf32>
    %85 = arith.mulf %80, %84 : vector<8x8xf32>
    %cst_32 = arith.constant dense<0.000000e+00> : vector<8x64xf32>
    %86 = tpu.matmul %85, %69, %cst_32 {dimension_numbers = #tpu.dot_dimension_numbers<[1], [0], [0], [1], [0, 0, 1, 1], [], []>} : vector<8x8xf32>, vector<8x64xf32>, vector<8x64xf32> -> vector<8x64xf32>
    %c0_33 = arith.constant 0 : index
    %c64 = arith.constant 64 : index
    %87 = vector.load %arg19[%c0_33, %c64] : memref<16x128xf32, #tpu.memory_space<vmem>>, vector<8x64xf32>
    tpu.vector_store %arg19[%c0_33, %c64], %86 {strides = array<i32>} : memref<16x128xf32, #tpu.memory_space<vmem>>, vector<8x64xf32>,
    %88 = vector.extract_strided_slice %45 {offsets = [8, 0], sizes = [8, 64], strides = [1, 1]} : vector<16x384xf32> to vector<8x64xf32>
    %89 = vector.extract_strided_slice %45 {offsets = [8, 128], sizes = [8, 64], strides = [1, 1]} : vector<16x384xf32> to vector<8x64xf32>
    %90 = vector.extract_strided_slice %45 {offsets = [8, 256], sizes = [8, 64], strides = [1, 1]} : vector<16x384xf32> to vector<8x64xf32>
    %91 = tpu.transpose %89, [1, 0] : vector<8x64xf32> -> vector<64x8xf32>
    %cst_34 = arith.constant dense<0.000000e+00> : vector<8x8xf32>
    %92 = tpu.matmul %88, %91, %cst_34 {dimension_numbers = #tpu.dot_dimension_numbers<[1], [0], [0], [1], [0, 0, 1, 1], [], []>} : vector<8x64xf32>, vector<64x8xf32>, vector<8x8xf32> -> vector<8x8xf32>
    %cst_35 = arith.constant 1.250000e-01 : f32
    %93 = vector.broadcast %cst_35 : f32 to vector<8x8xf32>
    %94 = arith.mulf %92, %93 : vector<8x8xf32>
    %95 = vector.broadcast %12 : vector<1x8xf32> to vector<8x8xf32>
    %96 = arith.addf %94, %95 : vector<8x8xf32>
    %cst_36 = arith.constant dense<0xFF800000> : vector<8xf32>
    %97 = vector.multi_reduction <maximumf>, %96, %cst_36 [1] : vector<8x8xf32> to vector<8xf32>
    %98 = vector.shape_cast %97 : vector<8xf32> to vector<8x1xf32>
    %99 = vector.broadcast %98 : vector<8x1xf32> to vector<8x8xf32>
    %100 = arith.subf %96, %99 : vector<8x8xf32>
    %101 = math.exp %100 : vector<8x8xf32>
    %cst_37 = arith.constant dense<0.000000e+00> : vector<8xf32>
    %102 = vector.multi_reduction <add>, %101, %cst_37 [1] : vector<8x8xf32> to vector<8xf32>
    %103 = vector.shape_cast %102 : vector<8xf32> to vector<8x1xf32>
    %104 = tpu.reciprocal %103 {approx = true} : vector<8x1xf32> -> vector<8x1xf32>
    %105 = vector.broadcast %104 : vector<8x1xf32> to vector<8x8xf32>
    %106 = arith.mulf %101, %105 : vector<8x8xf32>
    %cst_38 = arith.constant dense<0.000000e+00> : vector<8x64xf32>
    %107 = tpu.matmul %106, %90, %cst_38 {dimension_numbers = #tpu.dot_dimension_numbers<[1], [0], [0], [1], [0, 0, 1, 1], [], []>} : vector<8x8xf32>, vector<8x64xf32>, vector<8x64xf32> -> vector<8x64xf32>
    %c8 = arith.constant 8 : index
    %c0_39 = arith.constant 0 : index
    %108 = vector.load %arg19[%c8, %c0_39] : memref<16x128xf32, #tpu.memory_space<vmem>>, vector<8x64xf32>
    tpu.vector_store %arg19[%c8, %c0_39], %107 {strides = array<i32>} : memref<16x128xf32, #tpu.memory_space<vmem>>, vector<8x64xf32>,
    %109 = vector.extract_strided_slice %45 {offsets = [8, 64], sizes = [8, 64], strides = [1, 1]} : vector<16x384xf32> to vector<8x64xf32>
    %110 = vector.extract_strided_slice %45 {offsets = [8, 192], sizes = [8, 64], strides = [1, 1]} : vector<16x384xf32> to vector<8x64xf32>
    %111 = vector.extract_strided_slice %45 {offsets = [8, 320], sizes = [8, 64], strides = [1, 1]} : vector<16x384xf32> to vector<8x64xf32>
    %112 = tpu.transpose %110, [1, 0] : vector<8x64xf32> -> vector<64x8xf32>
    %cst_40 = arith.constant dense<0.000000e+00> : vector<8x8xf32>
    %113 = tpu.matmul %109, %112, %cst_40 {dimension_numbers = #tpu.dot_dimension_numbers<[1], [0], [0], [1], [0, 0, 1, 1], [], []>} : vector<8x64xf32>, vector<64x8xf32>, vector<8x8xf32> -> vector<8x8xf32>
    %cst_41 = arith.constant 1.250000e-01 : f32
    %114 = vector.broadcast %cst_41 : f32 to vector<8x8xf32>
    %115 = arith.mulf %113, %114 : vector<8x8xf32>
    %116 = vector.broadcast %12 : vector<1x8xf32> to vector<8x8xf32>
    %117 = arith.addf %115, %116 : vector<8x8xf32>
    %cst_42 = arith.constant dense<0xFF800000> : vector<8xf32>
    %118 = vector.multi_reduction <maximumf>, %117, %cst_42 [1] : vector<8x8xf32> to vector<8xf32>
    %119 = vector.shape_cast %118 : vector<8xf32> to vector<8x1xf32>
    %120 = vector.broadcast %119 : vector<8x1xf32> to vector<8x8xf32>
    %121 = arith.subf %117, %120 : vector<8x8xf32>
    %122 = math.exp %121 : vector<8x8xf32>
    %cst_43 = arith.constant dense<0.000000e+00> : vector<8xf32>
    %123 = vector.multi_reduction <add>, %122, %cst_43 [1] : vector<8x8xf32> to vector<8xf32>
    %124 = vector.shape_cast %123 : vector<8xf32> to vector<8x1xf32>
    %125 = tpu.reciprocal %124 {approx = true} : vector<8x1xf32> -> vector<8x1xf32>
    %126 = vector.broadcast %125 : vector<8x1xf32> to vector<8x8xf32>
    %127 = arith.mulf %122, %126 : vector<8x8xf32>
    %cst_44 = arith.constant dense<0.000000e+00> : vector<8x64xf32>
    %128 = tpu.matmul %127, %111, %cst_44 {dimension_numbers = #tpu.dot_dimension_numbers<[1], [0], [0], [1], [0, 0, 1, 1], [], []>} : vector<8x8xf32>, vector<8x64xf32>, vector<8x64xf32> -> vector<8x64xf32>
    %c8_45 = arith.constant 8 : index
    %c64_46 = arith.constant 64 : index
    %129 = vector.load %arg19[%c8_45, %c64_46] : memref<16x128xf32, #tpu.memory_space<vmem>>, vector<8x64xf32>
    tpu.vector_store %arg19[%c8_45, %c64_46], %128 {strides = array<i32>} : memref<16x128xf32, #tpu.memory_space<vmem>>, vector<8x64xf32>,
    %c0_47 = arith.constant 0 : index
    %c0_48 = arith.constant 0 : index
    %130 = vector.load %arg19[%c0_47, %c0_48] : memref<16x128xf32, #tpu.memory_space<vmem>>, vector<16x128xf32>
    %c0_49 = arith.constant 0 : index
    %c0_50 = arith.constant 0 : index
    %c0_51 = arith.constant 0 : index
    %131 = vector.load %arg6[%c0_49, %c0_50, %c0_51] : memref<2x128x128xbf16, #tpu.memory_space<vmem>>, vector<1x128x128xbf16>
    %132 = vector.shape_cast %131 : vector<1x128x128xbf16> to vector<128x128xbf16>
    %c0_52 = arith.constant 0 : index
    %c0_53 = arith.constant 0 : index
    %c0_54 = arith.constant 0 : index
    %133 = vector.load %arg7[%c0_52, %c0_53, %c0_54] : memref<2x1x128xf32, #tpu.memory_space<vmem>>, vector<1x1x128xf32>
    %134 = vector.shape_cast %133 : vector<1x1x128xf32> to vector<1x128xf32>
    %135 = arith.truncf %130 : vector<16x128xf32> to vector<16x128xbf16>
    %cst_55 = arith.constant dense<0.000000e+00> : vector<16x128xf32>
    %136 = tpu.matmul %135, %132, %cst_55 {dimension_numbers = #tpu.dot_dimension_numbers<[1], [0], [0], [1], [0, 0, 1, 1], [], []>} : vector<16x128xbf16>, vector<128x128xbf16>, vector<16x128xf32> -> vector<16x128xf32>
    %137 = vector.broadcast %134 : vector<1x128xf32> to vector<16x128xf32>
    %138 = arith.addf %136, %137 : vector<16x128xf32>
    %139 = arith.addf %37, %138 : vector<16x128xf32>
    %c0_56 = arith.constant 0 : index
    %c0_57 = arith.constant 0 : index
    %c0_58 = arith.constant 0 : index
    %140 = vector.load %arg8[%c0_56, %c0_57, %c0_58] : memref<2x1x128xf32, #tpu.memory_space<vmem>>, vector<1x1x128xf32>
    %141 = vector.shape_cast %140 : vector<1x1x128xf32> to vector<1x128xf32>
    %c0_59 = arith.constant 0 : index
    %c0_60 = arith.constant 0 : index
    %c0_61 = arith.constant 0 : index
    %142 = vector.load %arg9[%c0_59, %c0_60, %c0_61] : memref<2x1x128xf32, #tpu.memory_space<vmem>>, vector<1x1x128xf32>
    %143 = vector.shape_cast %142 : vector<1x1x128xf32> to vector<1x128xf32>
    %cst_62 = arith.constant dense<0.000000e+00> : vector<16xf32>
    %144 = vector.multi_reduction <add>, %139, %cst_62 [1] : vector<16x128xf32> to vector<16xf32>
    %145 = vector.shape_cast %144 : vector<16xf32> to vector<16x1xf32>
    %cst_63 = arith.constant 1.280000e+02 : f32
    %146 = vector.broadcast %cst_63 : f32 to vector<16x1xf32>
    %147 = arith.divf %145, %146 : vector<16x1xf32>
    %148 = vector.broadcast %147 : vector<16x1xf32> to vector<16x128xf32>
    %149 = arith.subf %139, %148 : vector<16x128xf32>
    %150 = arith.mulf %149, %149 : vector<16x128xf32>
    %cst_64 = arith.constant dense<0.000000e+00> : vector<16xf32>
    %151 = vector.multi_reduction <add>, %150, %cst_64 [1] : vector<16x128xf32> to vector<16xf32>
    %152 = vector.shape_cast %151 : vector<16xf32> to vector<16x1xf32>
    %cst_65 = arith.constant 1.280000e+02 : f32
    %153 = vector.broadcast %cst_65 : f32 to vector<16x1xf32>
    %154 = arith.divf %152, %153 : vector<16x1xf32>
    %155 = vector.broadcast %147 : vector<16x1xf32> to vector<16x128xf32>
    %156 = arith.subf %139, %155 : vector<16x128xf32>
    %cst_66 = arith.constant 9.99999996E-13 : f32
    %157 = vector.broadcast %cst_66 : f32 to vector<16x1xf32>
    %158 = arith.addf %154, %157 : vector<16x1xf32>
    %159 = math.rsqrt %158 : vector<16x1xf32>
    %160 = vector.broadcast %159 : vector<16x1xf32> to vector<16x128xf32>
    %161 = arith.mulf %156, %160 : vector<16x128xf32>
    %162 = vector.broadcast %141 : vector<1x128xf32> to vector<16x128xf32>
    %163 = arith.mulf %161, %162 : vector<16x128xf32>
    %164 = vector.broadcast %143 : vector<1x128xf32> to vector<16x128xf32>
    %165 = arith.addf %163, %164 : vector<16x128xf32>
    %c0_67 = arith.constant 0 : index
    %c0_68 = arith.constant 0 : index
    %c0_69 = arith.constant 0 : index
    %166 = vector.load %arg10[%c0_67, %c0_68, %c0_69] : memref<2x128x512xbf16, #tpu.memory_space<vmem>>, vector<1x128x512xbf16>
    %167 = vector.shape_cast %166 : vector<1x128x512xbf16> to vector<128x512xbf16>
    %c0_70 = arith.constant 0 : index
    %c0_71 = arith.constant 0 : index
    %c0_72 = arith.constant 0 : index
    %168 = vector.load %arg11[%c0_70, %c0_71, %c0_72] : memref<2x1x512xf32, #tpu.memory_space<vmem>>, vector<1x1x512xf32>
    %169 = vector.shape_cast %168 : vector<1x1x512xf32> to vector<1x512xf32>
    %170 = arith.truncf %165 : vector<16x128xf32> to vector<16x128xbf16>
    %cst_73 = arith.constant dense<0.000000e+00> : vector<16x512xf32>
    %171 = tpu.matmul %170, %167, %cst_73 {dimension_numbers = #tpu.dot_dimension_numbers<[1], [0], [0], [1], [0, 0, 1, 1], [], []>} : vector<16x128xbf16>, vector<128x512xbf16>, vector<16x512xf32> -> vector<16x512xf32>
    %172 = vector.broadcast %169 : vector<1x512xf32> to vector<16x512xf32>
    %173 = arith.addf %171, %172 : vector<16x512xf32>
    %cst_74 = arith.constant 5.000000e-01 : f32
    %174 = vector.broadcast %cst_74 : f32 to vector<16x512xf32>
    %175 = arith.mulf %174, %173 : vector<16x512xf32>
    %cst_75 = arith.constant 4.471500e-02 : f32
    %176 = vector.broadcast %cst_75 : f32 to vector<16x512xf32>
    %177 = arith.mulf %176, %173 : vector<16x512xf32>
    %178 = arith.mulf %177, %173 : vector<16x512xf32>
    %179 = arith.mulf %178, %173 : vector<16x512xf32>
    %180 = arith.addf %173, %179 : vector<16x512xf32>
    %cst_76 = arith.constant 0.797884583 : f32
    %181 = vector.broadcast %cst_76 : f32 to vector<16x512xf32>
    %182 = arith.mulf %181, %180 : vector<16x512xf32>
    %183 = math.tanh %182 : vector<16x512xf32>
    %cst_77 = arith.constant 1.000000e+00 : f32
    %184 = vector.broadcast %cst_77 : f32 to vector<16x512xf32>
    %185 = arith.addf %184, %183 : vector<16x512xf32>
    %186 = arith.mulf %175, %185 : vector<16x512xf32>
    %c0_78 = arith.constant 0 : index
    %c0_79 = arith.constant 0 : index
    %c0_80 = arith.constant 0 : index
    %187 = vector.load %arg12[%c0_78, %c0_79, %c0_80] : memref<2x512x128xbf16, #tpu.memory_space<vmem>>, vector<1x512x128xbf16>
    %188 = vector.shape_cast %187 : vector<1x512x128xbf16> to vector<512x128xbf16>
    %c0_81 = arith.constant 0 : index
    %c0_82 = arith.constant 0 : index
    %c0_83 = arith.constant 0 : index
    %189 = vector.load %arg13[%c0_81, %c0_82, %c0_83] : memref<2x1x128xf32, #tpu.memory_space<vmem>>, vector<1x1x128xf32>
    %190 = vector.shape_cast %189 : vector<1x1x128xf32> to vector<1x128xf32>
    %191 = arith.truncf %186 : vector<16x512xf32> to vector<16x512xbf16>
    %cst_84 = arith.constant dense<0.000000e+00> : vector<16x128xf32>
    %192 = tpu.matmul %191, %188, %cst_84 {dimension_numbers = #tpu.dot_dimension_numbers<[1], [0], [0], [1], [0, 0, 1, 1], [], []>} : vector<16x512xbf16>, vector<512x128xbf16>, vector<16x128xf32> -> vector<16x128xf32>
    %193 = vector.broadcast %190 : vector<1x128xf32> to vector<16x128xf32>
    %194 = arith.addf %192, %193 : vector<16x128xf32>
    %195 = arith.addf %165, %194 : vector<16x128xf32>
    %c0_85 = arith.constant 0 : index
    %c0_86 = arith.constant 0 : index
    %c0_87 = arith.constant 0 : index
    %196 = vector.load %arg14[%c0_85, %c0_86, %c0_87] : memref<2x1x128xf32, #tpu.memory_space<vmem>>, vector<1x1x128xf32>
    %197 = vector.shape_cast %196 : vector<1x1x128xf32> to vector<1x128xf32>
    %c0_88 = arith.constant 0 : index
    %c0_89 = arith.constant 0 : index
    %c0_90 = arith.constant 0 : index
    %198 = vector.load %arg15[%c0_88, %c0_89, %c0_90] : memref<2x1x128xf32, #tpu.memory_space<vmem>>, vector<1x1x128xf32>
    %199 = vector.shape_cast %198 : vector<1x1x128xf32> to vector<1x128xf32>
    %cst_91 = arith.constant dense<0.000000e+00> : vector<16xf32>
    %200 = vector.multi_reduction <add>, %195, %cst_91 [1] : vector<16x128xf32> to vector<16xf32>
    %201 = vector.shape_cast %200 : vector<16xf32> to vector<16x1xf32>
    %cst_92 = arith.constant 1.280000e+02 : f32
    %202 = vector.broadcast %cst_92 : f32 to vector<16x1xf32>
    %203 = arith.divf %201, %202 : vector<16x1xf32>
    %204 = vector.broadcast %203 : vector<16x1xf32> to vector<16x128xf32>
    %205 = arith.subf %195, %204 : vector<16x128xf32>
    %206 = arith.mulf %205, %205 : vector<16x128xf32>
    %cst_93 = arith.constant dense<0.000000e+00> : vector<16xf32>
    %207 = vector.multi_reduction <add>, %206, %cst_93 [1] : vector<16x128xf32> to vector<16xf32>
    %208 = vector.shape_cast %207 : vector<16xf32> to vector<16x1xf32>
    %cst_94 = arith.constant 1.280000e+02 : f32
    %209 = vector.broadcast %cst_94 : f32 to vector<16x1xf32>
    %210 = arith.divf %208, %209 : vector<16x1xf32>
    %211 = vector.broadcast %203 : vector<16x1xf32> to vector<16x128xf32>
    %212 = arith.subf %195, %211 : vector<16x128xf32>
    %cst_95 = arith.constant 9.99999996E-13 : f32
    %213 = vector.broadcast %cst_95 : f32 to vector<16x1xf32>
    %214 = arith.addf %210, %213 : vector<16x1xf32>
    %215 = math.rsqrt %214 : vector<16x1xf32>
    %216 = vector.broadcast %215 : vector<16x1xf32> to vector<16x128xf32>
    %217 = arith.mulf %212, %216 : vector<16x128xf32>
    %218 = vector.broadcast %197 : vector<1x128xf32> to vector<16x128xf32>
    %219 = arith.mulf %217, %218 : vector<16x128xf32>
    %220 = vector.broadcast %199 : vector<1x128xf32> to vector<16x128xf32>
    %221 = arith.addf %219, %220 : vector<16x128xf32>
    %c1_96 = arith.constant 1 : index
    %c0_97 = arith.constant 0 : index
    %c0_98 = arith.constant 0 : index
    %222 = vector.load %arg4[%c1_96, %c0_97, %c0_98] : memref<2x128x384xbf16, #tpu.memory_space<vmem>>, vector<1x128x384xbf16>
    %223 = vector.shape_cast %222 : vector<1x128x384xbf16> to vector<128x384xbf16>
    %c1_99 = arith.constant 1 : index
    %c0_100 = arith.constant 0 : index
    %c0_101 = arith.constant 0 : index
    %224 = vector.load %arg5[%c1_99, %c0_100, %c0_101] : memref<2x1x384xf32, #tpu.memory_space<vmem>>, vector<1x1x384xf32>
    %225 = vector.shape_cast %224 : vector<1x1x384xf32> to vector<1x384xf32>
    %226 = arith.truncf %221 : vector<16x128xf32> to vector<16x128xbf16>
    %cst_102 = arith.constant dense<0.000000e+00> : vector<16x384xf32>
    %227 = tpu.matmul %226, %223, %cst_102 {dimension_numbers = #tpu.dot_dimension_numbers<[1], [0], [0], [1], [0, 0, 1, 1], [], []>} : vector<16x128xbf16>, vector<128x384xbf16>, vector<16x384xf32> -> vector<16x384xf32>
    %228 = vector.broadcast %225 : vector<1x384xf32> to vector<16x384xf32>
    %229 = arith.addf %227, %228 : vector<16x384xf32>
    %230 = vector.extract_strided_slice %229 {offsets = [0, 0], sizes = [8, 64], strides = [1, 1]} : vector<16x384xf32> to vector<8x64xf32>
    %231 = vector.extract_strided_slice %229 {offsets = [0, 128], sizes = [8, 64], strides = [1, 1]} : vector<16x384xf32> to vector<8x64xf32>
    %232 = vector.extract_strided_slice %229 {offsets = [0, 256], sizes = [8, 64], strides = [1, 1]} : vector<16x384xf32> to vector<8x64xf32>
    %233 = tpu.transpose %231, [1, 0] : vector<8x64xf32> -> vector<64x8xf32>
    %cst_103 = arith.constant dense<0.000000e+00> : vector<8x8xf32>
    %234 = tpu.matmul %230, %233, %cst_103 {dimension_numbers = #tpu.dot_dimension_numbers<[1], [0], [0], [1], [0, 0, 1, 1], [], []>} : vector<8x64xf32>, vector<64x8xf32>, vector<8x8xf32> -> vector<8x8xf32>
    %cst_104 = arith.constant 1.250000e-01 : f32
    %235 = vector.broadcast %cst_104 : f32 to vector<8x8xf32>
    %236 = arith.mulf %234, %235 : vector<8x8xf32>
    %237 = vector.broadcast %6 : vector<1x8xf32> to vector<8x8xf32>
    %238 = arith.addf %236, %237 : vector<8x8xf32>
    %cst_105 = arith.constant dense<0xFF800000> : vector<8xf32>
    %239 = vector.multi_reduction <maximumf>, %238, %cst_105 [1] : vector<8x8xf32> to vector<8xf32>
    %240 = vector.shape_cast %239 : vector<8xf32> to vector<8x1xf32>
    %241 = vector.broadcast %240 : vector<8x1xf32> to vector<8x8xf32>
    %242 = arith.subf %238, %241 : vector<8x8xf32>
    %243 = math.exp %242 : vector<8x8xf32>
    %cst_106 = arith.constant dense<0.000000e+00> : vector<8xf32>
    %244 = vector.multi_reduction <add>, %243, %cst_106 [1] : vector<8x8xf32> to vector<8xf32>
    %245 = vector.shape_cast %244 : vector<8xf32> to vector<8x1xf32>
    %246 = tpu.reciprocal %245 {approx = true} : vector<8x1xf32> -> vector<8x1xf32>
    %247 = vector.broadcast %246 : vector<8x1xf32> to vector<8x8xf32>
    %248 = arith.mulf %243, %247 : vector<8x8xf32>
    %cst_107 = arith.constant dense<0.000000e+00> : vector<8x64xf32>
    %249 = tpu.matmul %248, %232, %cst_107 {dimension_numbers = #tpu.dot_dimension_numbers<[1], [0], [0], [1], [0, 0, 1, 1], [], []>} : vector<8x8xf32>, vector<8x64xf32>, vector<8x64xf32> -> vector<8x64xf32>
    %c0_108 = arith.constant 0 : index
    %c0_109 = arith.constant 0 : index
    %250 = vector.load %arg19[%c0_108, %c0_109] : memref<16x128xf32, #tpu.memory_space<vmem>>, vector<8x64xf32>
    tpu.vector_store %arg19[%c0_108, %c0_109], %249 {strides = array<i32>} : memref<16x128xf32, #tpu.memory_space<vmem>>, vector<8x64xf32>,
    %251 = vector.extract_strided_slice %229 {offsets = [0, 64], sizes = [8, 64], strides = [1, 1]} : vector<16x384xf32> to vector<8x64xf32>
    %252 = vector.extract_strided_slice %229 {offsets = [0, 192], sizes = [8, 64], strides = [1, 1]} : vector<16x384xf32> to vector<8x64xf32>
    %253 = vector.extract_strided_slice %229 {offsets = [0, 320], sizes = [8, 64], strides = [1, 1]} : vector<16x384xf32> to vector<8x64xf32>
    %254 = tpu.transpose %252, [1, 0] : vector<8x64xf32> -> vector<64x8xf32>
    %cst_110 = arith.constant dense<0.000000e+00> : vector<8x8xf32>
    %255 = tpu.matmul %251, %254, %cst_110 {dimension_numbers = #tpu.dot_dimension_numbers<[1], [0], [0], [1], [0, 0, 1, 1], [], []>} : vector<8x64xf32>, vector<64x8xf32>, vector<8x8xf32> -> vector<8x8xf32>
    %cst_111 = arith.constant 1.250000e-01 : f32
    %256 = vector.broadcast %cst_111 : f32 to vector<8x8xf32>
    %257 = arith.mulf %255, %256 : vector<8x8xf32>
    %258 = vector.broadcast %6 : vector<1x8xf32> to vector<8x8xf32>
    %259 = arith.addf %257, %258 : vector<8x8xf32>
    %cst_112 = arith.constant dense<0xFF800000> : vector<8xf32>
    %260 = vector.multi_reduction <maximumf>, %259, %cst_112 [1] : vector<8x8xf32> to vector<8xf32>
    %261 = vector.shape_cast %260 : vector<8xf32> to vector<8x1xf32>
    %262 = vector.broadcast %261 : vector<8x1xf32> to vector<8x8xf32>
    %263 = arith.subf %259, %262 : vector<8x8xf32>
    %264 = math.exp %263 : vector<8x8xf32>
    %cst_113 = arith.constant dense<0.000000e+00> : vector<8xf32>
    %265 = vector.multi_reduction <add>, %264, %cst_113 [1] : vector<8x8xf32> to vector<8xf32>
    %266 = vector.shape_cast %265 : vector<8xf32> to vector<8x1xf32>
    %267 = tpu.reciprocal %266 {approx = true} : vector<8x1xf32> -> vector<8x1xf32>
    %268 = vector.broadcast %267 : vector<8x1xf32> to vector<8x8xf32>
    %269 = arith.mulf %264, %268 : vector<8x8xf32>
    %cst_114 = arith.constant dense<0.000000e+00> : vector<8x64xf32>
    %270 = tpu.matmul %269, %253, %cst_114 {dimension_numbers = #tpu.dot_dimension_numbers<[1], [0], [0], [1], [0, 0, 1, 1], [], []>} : vector<8x8xf32>, vector<8x64xf32>, vector<8x64xf32> -> vector<8x64xf32>
    %c0_115 = arith.constant 0 : index
    %c64_116 = arith.constant 64 : index
    %271 = vector.load %arg19[%c0_115, %c64_116] : memref<16x128xf32, #tpu.memory_space<vmem>>, vector<8x64xf32>
    tpu.vector_store %arg19[%c0_115, %c64_116], %270 {strides = array<i32>} : memref<16x128xf32, #tpu.memory_space<vmem>>, vector<8x64xf32>,
    %272 = vector.extract_strided_slice %229 {offsets = [8, 0], sizes = [8, 64], strides = [1, 1]} : vector<16x384xf32> to vector<8x64xf32>
    %273 = vector.extract_strided_slice %229 {offsets = [8, 128], sizes = [8, 64], strides = [1, 1]} : vector<16x384xf32> to vector<8x64xf32>
    %274 = vector.extract_strided_slice %229 {offsets = [8, 256], sizes = [8, 64], strides = [1, 1]} : vector<16x384xf32> to vector<8x64xf32>
    %275 = tpu.transpose %273, [1, 0] : vector<8x64xf32> -> vector<64x8xf32>
    %cst_117 = arith.constant dense<0.000000e+00> : vector<8x8xf32>
    %276 = tpu.matmul %272, %275, %cst_117 {dimension_numbers = #tpu.dot_dimension_numbers<[1], [0], [0], [1], [0, 0, 1, 1], [], []>} : vector<8x64xf32>, vector<64x8xf32>, vector<8x8xf32> -> vector<8x8xf32>
    %cst_118 = arith.constant 1.250000e-01 : f32
    %277 = vector.broadcast %cst_118 : f32 to vector<8x8xf32>
    %278 = arith.mulf %276, %277 : vector<8x8xf32>
    %279 = vector.broadcast %12 : vector<1x8xf32> to vector<8x8xf32>
    %280 = arith.addf %278, %279 : vector<8x8xf32>
    %cst_119 = arith.constant dense<0xFF800000> : vector<8xf32>
    %281 = vector.multi_reduction <maximumf>, %280, %cst_119 [1] : vector<8x8xf32> to vector<8xf32>
    %282 = vector.shape_cast %281 : vector<8xf32> to vector<8x1xf32>
    %283 = vector.broadcast %282 : vector<8x1xf32> to vector<8x8xf32>
    %284 = arith.subf %280, %283 : vector<8x8xf32>
    %285 = math.exp %284 : vector<8x8xf32>
    %cst_120 = arith.constant dense<0.000000e+00> : vector<8xf32>
    %286 = vector.multi_reduction <add>, %285, %cst_120 [1] : vector<8x8xf32> to vector<8xf32>
    %287 = vector.shape_cast %286 : vector<8xf32> to vector<8x1xf32>
    %288 = tpu.reciprocal %287 {approx = true} : vector<8x1xf32> -> vector<8x1xf32>
    %289 = vector.broadcast %288 : vector<8x1xf32> to vector<8x8xf32>
    %290 = arith.mulf %285, %289 : vector<8x8xf32>
    %cst_121 = arith.constant dense<0.000000e+00> : vector<8x64xf32>
    %291 = tpu.matmul %290, %274, %cst_121 {dimension_numbers = #tpu.dot_dimension_numbers<[1], [0], [0], [1], [0, 0, 1, 1], [], []>} : vector<8x8xf32>, vector<8x64xf32>, vector<8x64xf32> -> vector<8x64xf32>
    %c8_122 = arith.constant 8 : index
    %c0_123 = arith.constant 0 : index
    %292 = vector.load %arg19[%c8_122, %c0_123] : memref<16x128xf32, #tpu.memory_space<vmem>>, vector<8x64xf32>
    tpu.vector_store %arg19[%c8_122, %c0_123], %291 {strides = array<i32>} : memref<16x128xf32, #tpu.memory_space<vmem>>, vector<8x64xf32>,
    %293 = vector.extract_strided_slice %229 {offsets = [8, 64], sizes = [8, 64], strides = [1, 1]} : vector<16x384xf32> to vector<8x64xf32>
    %294 = vector.extract_strided_slice %229 {offsets = [8, 192], sizes = [8, 64], strides = [1, 1]} : vector<16x384xf32> to vector<8x64xf32>
    %295 = vector.extract_strided_slice %229 {offsets = [8, 320], sizes = [8, 64], strides = [1, 1]} : vector<16x384xf32> to vector<8x64xf32>
    %296 = tpu.transpose %294, [1, 0] : vector<8x64xf32> -> vector<64x8xf32>
    %cst_124 = arith.constant dense<0.000000e+00> : vector<8x8xf32>
    %297 = tpu.matmul %293, %296, %cst_124 {dimension_numbers = #tpu.dot_dimension_numbers<[1], [0], [0], [1], [0, 0, 1, 1], [], []>} : vector<8x64xf32>, vector<64x8xf32>, vector<8x8xf32> -> vector<8x8xf32>
    %cst_125 = arith.constant 1.250000e-01 : f32
    %298 = vector.broadcast %cst_125 : f32 to vector<8x8xf32>
    %299 = arith.mulf %297, %298 : vector<8x8xf32>
    %300 = vector.broadcast %12 : vector<1x8xf32> to vector<8x8xf32>
    %301 = arith.addf %299, %300 : vector<8x8xf32>
    %cst_126 = arith.constant dense<0xFF800000> : vector<8xf32>
    %302 = vector.multi_reduction <maximumf>, %301, %cst_126 [1] : vector<8x8xf32> to vector<8xf32>
    %303 = vector.shape_cast %302 : vector<8xf32> to vector<8x1xf32>
    %304 = vector.broadcast %303 : vector<8x1xf32> to vector<8x8xf32>
    %305 = arith.subf %301, %304 : vector<8x8xf32>
    %306 = math.exp %305 : vector<8x8xf32>
    %cst_127 = arith.constant dense<0.000000e+00> : vector<8xf32>
    %307 = vector.multi_reduction <add>, %306, %cst_127 [1] : vector<8x8xf32> to vector<8xf32>
    %308 = vector.shape_cast %307 : vector<8xf32> to vector<8x1xf32>
    %309 = tpu.reciprocal %308 {approx = true} : vector<8x1xf32> -> vector<8x1xf32>
    %310 = vector.broadcast %309 : vector<8x1xf32> to vector<8x8xf32>
    %311 = arith.mulf %306, %310 : vector<8x8xf32>
    %cst_128 = arith.constant dense<0.000000e+00> : vector<8x64xf32>
    %312 = tpu.matmul %311, %295, %cst_128 {dimension_numbers = #tpu.dot_dimension_numbers<[1], [0], [0], [1], [0, 0, 1, 1], [], []>} : vector<8x8xf32>, vector<8x64xf32>, vector<8x64xf32> -> vector<8x64xf32>
    %c8_129 = arith.constant 8 : index
    %c64_130 = arith.constant 64 : index
    %313 = vector.load %arg19[%c8_129, %c64_130] : memref<16x128xf32, #tpu.memory_space<vmem>>, vector<8x64xf32>
    tpu.vector_store %arg19[%c8_129, %c64_130], %312 {strides = array<i32>} : memref<16x128xf32, #tpu.memory_space<vmem>>, vector<8x64xf32>,
    %c0_131 = arith.constant 0 : index
    %c0_132 = arith.constant 0 : index
    %314 = vector.load %arg19[%c0_131, %c0_132] : memref<16x128xf32, #tpu.memory_space<vmem>>, vector<16x128xf32>
    %c1_133 = arith.constant 1 : index
    %c0_134 = arith.constant 0 : index
    %c0_135 = arith.constant 0 : index
    %315 = vector.load %arg6[%c1_133, %c0_134, %c0_135] : memref<2x128x128xbf16, #tpu.memory_space<vmem>>, vector<1x128x128xbf16>
    %316 = vector.shape_cast %315 : vector<1x128x128xbf16> to vector<128x128xbf16>
    %c1_136 = arith.constant 1 : index
    %c0_137 = arith.constant 0 : index
    %c0_138 = arith.constant 0 : index
    %317 = vector.load %arg7[%c1_136, %c0_137, %c0_138] : memref<2x1x128xf32, #tpu.memory_space<vmem>>, vector<1x1x128xf32>
    %318 = vector.shape_cast %317 : vector<1x1x128xf32> to vector<1x128xf32>
    %319 = arith.truncf %314 : vector<16x128xf32> to vector<16x128xbf16>
    %cst_139 = arith.constant dense<0.000000e+00> : vector<16x128xf32>
    %320 = tpu.matmul %319, %316, %cst_139 {dimension_numbers = #tpu.dot_dimension_numbers<[1], [0], [0], [1], [0, 0, 1, 1], [], []>} : vector<16x128xbf16>, vector<128x128xbf16>, vector<16x128xf32> -> vector<16x128xf32>
    %321 = vector.broadcast %318 : vector<1x128xf32> to vector<16x128xf32>
    %322 = arith.addf %320, %321 : vector<16x128xf32>
    %323 = arith.addf %221, %322 : vector<16x128xf32>
    %c1_140 = arith.constant 1 : index
    %c0_141 = arith.constant 0 : index
    %c0_142 = arith.constant 0 : index
    %324 = vector.load %arg8[%c1_140, %c0_141, %c0_142] : memref<2x1x128xf32, #tpu.memory_space<vmem>>, vector<1x1x128xf32>
    %325 = vector.shape_cast %324 : vector<1x1x128xf32> to vector<1x128xf32>
    %c1_143 = arith.constant 1 : index
    %c0_144 = arith.constant 0 : index
    %c0_145 = arith.constant 0 : index
    %326 = vector.load %arg9[%c1_143, %c0_144, %c0_145] : memref<2x1x128xf32, #tpu.memory_space<vmem>>, vector<1x1x128xf32>
    %327 = vector.shape_cast %326 : vector<1x1x128xf32> to vector<1x128xf32>
    %cst_146 = arith.constant dense<0.000000e+00> : vector<16xf32>
    %328 = vector.multi_reduction <add>, %323, %cst_146 [1] : vector<16x128xf32> to vector<16xf32>
    %329 = vector.shape_cast %328 : vector<16xf32> to vector<16x1xf32>
    %cst_147 = arith.constant 1.280000e+02 : f32
    %330 = vector.broadcast %cst_147 : f32 to vector<16x1xf32>
    %331 = arith.divf %329, %330 : vector<16x1xf32>
    %332 = vector.broadcast %331 : vector<16x1xf32> to vector<16x128xf32>
    %333 = arith.subf %323, %332 : vector<16x128xf32>
    %334 = arith.mulf %333, %333 : vector<16x128xf32>
    %cst_148 = arith.constant dense<0.000000e+00> : vector<16xf32>
    %335 = vector.multi_reduction <add>, %334, %cst_148 [1] : vector<16x128xf32> to vector<16xf32>
    %336 = vector.shape_cast %335 : vector<16xf32> to vector<16x1xf32>
    %cst_149 = arith.constant 1.280000e+02 : f32
    %337 = vector.broadcast %cst_149 : f32 to vector<16x1xf32>
    %338 = arith.divf %336, %337 : vector<16x1xf32>
    %339 = vector.broadcast %331 : vector<16x1xf32> to vector<16x128xf32>
    %340 = arith.subf %323, %339 : vector<16x128xf32>
    %cst_150 = arith.constant 9.99999996E-13 : f32
    %341 = vector.broadcast %cst_150 : f32 to vector<16x1xf32>
    %342 = arith.addf %338, %341 : vector<16x1xf32>
    %343 = math.rsqrt %342 : vector<16x1xf32>
    %344 = vector.broadcast %343 : vector<16x1xf32> to vector<16x128xf32>
    %345 = arith.mulf %340, %344 : vector<16x128xf32>
    %346 = vector.broadcast %325 : vector<1x128xf32> to vector<16x128xf32>
    %347 = arith.mulf %345, %346 : vector<16x128xf32>
    %348 = vector.broadcast %327 : vector<1x128xf32> to vector<16x128xf32>
    %349 = arith.addf %347, %348 : vector<16x128xf32>
    %c1_151 = arith.constant 1 : index
    %c0_152 = arith.constant 0 : index
    %c0_153 = arith.constant 0 : index
    %350 = vector.load %arg10[%c1_151, %c0_152, %c0_153] : memref<2x128x512xbf16, #tpu.memory_space<vmem>>, vector<1x128x512xbf16>
    %351 = vector.shape_cast %350 : vector<1x128x512xbf16> to vector<128x512xbf16>
    %c1_154 = arith.constant 1 : index
    %c0_155 = arith.constant 0 : index
    %c0_156 = arith.constant 0 : index
    %352 = vector.load %arg11[%c1_154, %c0_155, %c0_156] : memref<2x1x512xf32, #tpu.memory_space<vmem>>, vector<1x1x512xf32>
    %353 = vector.shape_cast %352 : vector<1x1x512xf32> to vector<1x512xf32>
    %354 = arith.truncf %349 : vector<16x128xf32> to vector<16x128xbf16>
    %cst_157 = arith.constant dense<0.000000e+00> : vector<16x512xf32>
    %355 = tpu.matmul %354, %351, %cst_157 {dimension_numbers = #tpu.dot_dimension_numbers<[1], [0], [0], [1], [0, 0, 1, 1], [], []>} : vector<16x128xbf16>, vector<128x512xbf16>, vector<16x512xf32> -> vector<16x512xf32>
    %356 = vector.broadcast %353 : vector<1x512xf32> to vector<16x512xf32>
    %357 = arith.addf %355, %356 : vector<16x512xf32>
    %cst_158 = arith.constant 5.000000e-01 : f32
    %358 = vector.broadcast %cst_158 : f32 to vector<16x512xf32>
    %359 = arith.mulf %358, %357 : vector<16x512xf32>
    %cst_159 = arith.constant 4.471500e-02 : f32
    %360 = vector.broadcast %cst_159 : f32 to vector<16x512xf32>
    %361 = arith.mulf %360, %357 : vector<16x512xf32>
    %362 = arith.mulf %361, %357 : vector<16x512xf32>
    %363 = arith.mulf %362, %357 : vector<16x512xf32>
    %364 = arith.addf %357, %363 : vector<16x512xf32>
    %cst_160 = arith.constant 0.797884583 : f32
    %365 = vector.broadcast %cst_160 : f32 to vector<16x512xf32>
    %366 = arith.mulf %365, %364 : vector<16x512xf32>
    %367 = math.tanh %366 : vector<16x512xf32>
    %cst_161 = arith.constant 1.000000e+00 : f32
    %368 = vector.broadcast %cst_161 : f32 to vector<16x512xf32>
    %369 = arith.addf %368, %367 : vector<16x512xf32>
    %370 = arith.mulf %359, %369 : vector<16x512xf32>
    %c1_162 = arith.constant 1 : index
    %c0_163 = arith.constant 0 : index
    %c0_164 = arith.constant 0 : index
    %371 = vector.load %arg12[%c1_162, %c0_163, %c0_164] : memref<2x512x128xbf16, #tpu.memory_space<vmem>>, vector<1x512x128xbf16>
    %372 = vector.shape_cast %371 : vector<1x512x128xbf16> to vector<512x128xbf16>
    %c1_165 = arith.constant 1 : index
    %c0_166 = arith.constant 0 : index
    %c0_167 = arith.constant 0 : index
    %373 = vector.load %arg13[%c1_165, %c0_166, %c0_167] : memref<2x1x128xf32, #tpu.memory_space<vmem>>, vector<1x1x128xf32>
    %374 = vector.shape_cast %373 : vector<1x1x128xf32> to vector<1x128xf32>
    %375 = arith.truncf %370 : vector<16x512xf32> to vector<16x512xbf16>
    %cst_168 = arith.constant dense<0.000000e+00> : vector<16x128xf32>
    %376 = tpu.matmul %375, %372, %cst_168 {dimension_numbers = #tpu.dot_dimension_numbers<[1], [0], [0], [1], [0, 0, 1, 1], [], []>} : vector<16x512xbf16>, vector<512x128xbf16>, vector<16x128xf32> -> vector<16x128xf32>
    %377 = vector.broadcast %374 : vector<1x128xf32> to vector<16x128xf32>
    %378 = arith.addf %376, %377 : vector<16x128xf32>
    %379 = arith.addf %349, %378 : vector<16x128xf32>
    %c1_169 = arith.constant 1 : index
    %c0_170 = arith.constant 0 : index
    %c0_171 = arith.constant 0 : index
    %380 = vector.load %arg14[%c1_169, %c0_170, %c0_171] : memref<2x1x128xf32, #tpu.memory_space<vmem>>, vector<1x1x128xf32>
    %381 = vector.shape_cast %380 : vector<1x1x128xf32> to vector<1x128xf32>
    %c1_172 = arith.constant 1 : index
    %c0_173 = arith.constant 0 : index
    %c0_174 = arith.constant 0 : index
    %382 = vector.load %arg15[%c1_172, %c0_173, %c0_174] : memref<2x1x128xf32, #tpu.memory_space<vmem>>, vector<1x1x128xf32>
    %383 = vector.shape_cast %382 : vector<1x1x128xf32> to vector<1x128xf32>
    %cst_175 = arith.constant dense<0.000000e+00> : vector<16xf32>
    %384 = vector.multi_reduction <add>, %379, %cst_175 [1] : vector<16x128xf32> to vector<16xf32>
    %385 = vector.shape_cast %384 : vector<16xf32> to vector<16x1xf32>
    %cst_176 = arith.constant 1.280000e+02 : f32
    %386 = vector.broadcast %cst_176 : f32 to vector<16x1xf32>
    %387 = arith.divf %385, %386 : vector<16x1xf32>
    %388 = vector.broadcast %387 : vector<16x1xf32> to vector<16x128xf32>
    %389 = arith.subf %379, %388 : vector<16x128xf32>
    %390 = arith.mulf %389, %389 : vector<16x128xf32>
    %cst_177 = arith.constant dense<0.000000e+00> : vector<16xf32>
    %391 = vector.multi_reduction <add>, %390, %cst_177 [1] : vector<16x128xf32> to vector<16xf32>
    %392 = vector.shape_cast %391 : vector<16xf32> to vector<16x1xf32>
    %cst_178 = arith.constant 1.280000e+02 : f32
    %393 = vector.broadcast %cst_178 : f32 to vector<16x1xf32>
    %394 = arith.divf %392, %393 : vector<16x1xf32>
    %395 = vector.broadcast %387 : vector<16x1xf32> to vector<16x128xf32>
    %396 = arith.subf %379, %395 : vector<16x128xf32>
    %cst_179 = arith.constant 9.99999996E-13 : f32
    %397 = vector.broadcast %cst_179 : f32 to vector<16x1xf32>
    %398 = arith.addf %394, %397 : vector<16x1xf32>
    %399 = math.rsqrt %398 : vector<16x1xf32>
    %400 = vector.broadcast %399 : vector<16x1xf32> to vector<16x128xf32>
    %401 = arith.mulf %396, %400 : vector<16x128xf32>
    %402 = vector.broadcast %381 : vector<1x128xf32> to vector<16x128xf32>
    %403 = arith.mulf %401, %402 : vector<16x128xf32>
    %404 = vector.broadcast %383 : vector<1x128xf32> to vector<16x128xf32>
    %405 = arith.addf %403, %404 : vector<16x128xf32>
    %c0_180 = arith.constant 0 : index
    %c0_181 = arith.constant 0 : index
    %406 = vector.load %arg16[%c0_180, %c0_181] : memref<128x128xbf16, #tpu.memory_space<vmem>>, vector<128x128xbf16>
    %c0_182 = arith.constant 0 : index
    %c0_183 = arith.constant 0 : index
    %407 = vector.load %arg17[%c0_182, %c0_183] : memref<1x128xf32, #tpu.memory_space<vmem>>, vector<1x128xf32>
    %408 = arith.truncf %405 : vector<16x128xf32> to vector<16x128xbf16>
    %cst_184 = arith.constant dense<0.000000e+00> : vector<16x128xf32>
    %409 = tpu.matmul %408, %406, %cst_184 {dimension_numbers = #tpu.dot_dimension_numbers<[1], [0], [0], [1], [0, 0, 1, 1], [], []>} : vector<16x128xbf16>, vector<128x128xbf16>, vector<16x128xf32> -> vector<16x128xf32>
    %410 = vector.broadcast %407 : vector<1x128xf32> to vector<16x128xf32>
    %411 = arith.addf %409, %410 : vector<16x128xf32>
    %c0_185 = arith.constant 0 : index
    %c0_186 = arith.constant 0 : index
    %412 = vector.load %arg18[%c0_185, %c0_186] : memref<16x128xf32, #tpu.memory_space<vmem>>, vector<16x128xf32>
    tpu.vector_store %arg18[%c0_185, %c0_186], %411 {strides = array<i32>} : memref<16x128xf32, #tpu.memory_space<vmem>>, vector<16x128xf32>,
    return
  }
}

</mosaic_0001>

<llo_original>
// kernel: bert_encoder_forward.1
$region0: #{bert_encoder_forward.1}
  #allocation0 [shape = 'u32[]', space=smem, size = 0x4, offset = 0x4, fixed_abs, tag = 'smem constant byte address 0x4 - core index']
  #allocation1 [shape = 'u32[144,128]{1,0:T(1,128)}', space=vmem, size = 0x12000, scoped, tag = 'internal scratch']
  #allocation2 [shape = 'f32[16,128]{1,0:T(8,128)}', space=vmem, size = 0x2000, scoped, tag = 'scratch operand']
  %s0 = inlined_call_operand.vmem [shape: s32[2], index: 0, kind: input, shape index: {}]
  %s1 = inlined_call_operand.vmem [shape: f32[16,128], index: 1, kind: input, shape index: {}]
  %s2 = inlined_call_operand.vmem [shape: f32[1,128], index: 2, kind: input, shape index: {}]
  %s3 = inlined_call_operand.vmem [shape: f32[1,128], index: 3, kind: input, shape index: {}]
  %s4 = inlined_call_operand.hbm [shape: bf16[2,128,384], index: 4, kind: input, shape index: {}]
  %s5 = inlined_call_operand.vmem [shape: f32[2,1,384], index: 5, kind: input, shape index: {}]
  %s6 = inlined_call_operand.vmem [shape: bf16[2,128,128], index: 6, kind: input, shape index: {}]
  %s7 = inlined_call_operand.vmem [shape: f32[2,1,128], index: 7, kind: input, shape index: {}]
  %s8 = inlined_call_operand.vmem [shape: f32[2,1,128], index: 8, kind: input, shape index: {}]
  %s9 = inlined_call_operand.vmem [shape: f32[2,1,128], index: 9, kind: input, shape index: {}]
  %s10 = inlined_call_operand.hbm [shape: bf16[2,128,512], index: 10, kind: input, shape index: {}]
  %s11 = inlined_call_operand.vmem [shape: f32[2,1,512], index: 11, kind: input, shape index: {}]
  %s12 = inlined_call_operand.hbm [shape: bf16[2,512,128], index: 12, kind: input, shape index: {}]
  %s13 = inlined_call_operand.vmem [shape: f32[2,1,128], index: 13, kind: input, shape index: {}]
  %s14 = inlined_call_operand.vmem [shape: f32[2,1,128], index: 14, kind: input, shape index: {}]
  %s15 = inlined_call_operand.vmem [shape: f32[2,1,128], index: 15, kind: input, shape index: {}]
  %s16 = inlined_call_operand.vmem [shape: bf16[128,128], index: 16, kind: input, shape index: {}]
  %s17 = inlined_call_operand.vmem [shape: f32[1,128], index: 17, kind: input, shape index: {}]
  %s18 = inlined_call_operand.hbm [shape: f32[16,128], index: 18, kind: output, shape index: {}]
  %s19 = sld [smem:[#allocation0]]
  $region98: #{bert_encoder_forward.1} parent=0
    _
  %s21 = ssub.s32 1, %s19
  %s22 = scalar_select 0, %s21, %s19
  $region1: #{bert_encoder_forward.1} parent=0
    #allocation3 [shape = 'u8[512]{0}', space=smem, size = 0x200, scoped, tag = 'input window, operand 0, single buffered']
    #allocation4 [shape = 's32[1]{0}', space=sflag, size = 0x4, scoped, tag = 'scoped memory for bert_encoder_forward.1']
    #allocation5 [shape = 's32[1]{0}', space=sflag, size = 0x4, scoped, tag = 'scoped memory for bert_encoder_forward.1']
    #allocation6 [shape = 's32[1]{0}', space=sflag, size = 0x4, scoped, tag = 'scoped memory for bert_encoder_forward.1']
    #allocation7 [shape = 'u8[196608]{0}', space=vmem, size = 0x30000, scoped, tag = 'input window, operand 4, single buffered']
    #allocation8 [shape = 'u8[262144]{0}', space=vmem, size = 0x40000, scoped, tag = 'input window, operand 10, single buffered']
    #allocation9 [shape = 's32[1]{0}', space=sflag, size = 0x4, scoped, tag = 'scoped memory for bert_encoder_forward.1']
    #allocation10 [shape = 'u8[262144]{0}', space=vmem, size = 0x40000, scoped, tag = 'input window, operand 12, single buffered']
    #allocation11 [shape = 'u8[8192]{0}', space=vmem, size = 0x2000, scoped, tag = 'output window, operand 0, single buffered']
    %23 = vsyncpa [#allocation6], 0
    %24 = vsyncpa [#allocation4], 0
    %25 = vsyncpa [#allocation9], 0
    %26 = vsyncpa [#allocation5], 0
    // Predicated region
    $region2: #{bert_encoder_forward.1} parent=1 // pred_check
      _
    $region3: #{bert_encoder_forward.1} parent=1 // pred_check_branch
      %28 = sbr.rel (0) target = $region5
    $region4: #{bert_encoder_forward.1} parent=1 // pred_region
      %s30 = ssub.s32 16, 16
      %31 = vsyncadd [#allocation6], %s30
      %s33 = sshll.u32 %s0, 4
      %s34 = int_to_ptr.vmem [resolvable:$true] %s33
      %36 = dma.vmem_to_smem %s34, 16, [#allocation3], [#allocation6]
    $region5: #{bert_encoder_forward.1} parent=1 // pred_fallthru
      _
    // Predicated region
    $region6: #{bert_encoder_forward.1} parent=1 // pred_check
      _
    $region7: #{bert_encoder_forward.1} parent=1 // pred_check_branch
      %38 = sbr.rel (0) target = $region9
    $region8: #{bert_encoder_forward.1} parent=1 // pred_region
      _
    $region9: #{bert_encoder_forward.1} parent=1 // pred_fallthru
      _
    // Predicated region
    $region10: #{bert_encoder_forward.1} parent=1 // pred_check
      _
    $region11: #{bert_encoder_forward.1} parent=1 // pred_check_branch
      %40 = sbr.rel (0) target = $region13
    $region12: #{bert_encoder_forward.1} parent=1 // pred_region
      _
    $region13: #{bert_encoder_forward.1} parent=1 // pred_fallthru
      _
    // Predicated region
    $region14: #{bert_encoder_forward.1} parent=1 // pred_check
      _
    $region15: #{bert_encoder_forward.1} parent=1 // pred_check_branch
      %42 = sbr.rel (0) target = $region17
    $region16: #{bert_encoder_forward.1} parent=1 // pred_region
      _
    $region17: #{bert_encoder_forward.1} parent=1 // pred_fallthru
      _
    // Predicated region
    $region18: #{bert_encoder_forward.1} parent=1 // pred_check
      _
    $region19: #{bert_encoder_forward.1} parent=1 // pred_check_branch
      %44 = sbr.rel (0) target = $region21
    $region20: #{bert_encoder_forward.1} parent=1 // pred_region
      %s46 = ssub.s32 6144, 6144
      %47 = vsyncadd [#allocation4], %s46
      %s48 = sshll.u32 [#allocation7], 4
      %s49 = int_to_ptr.vmem [resolvable:$true] %s48
      %54 = dma.hbm_to_vmem [thread:$0]  %s4, 6144, %s49, [#allocation4], 192, 192, 12
    $region21: #{bert_encoder_forward.1} parent=1 // pred_fallthru
      _
    // Predicated region
    $region22: #{bert_encoder_forward.1} parent=1 // pred_check
      _
    $region23: #{bert_encoder_forward.1} parent=1 // pred_check_branch
      %56 = sbr.rel (0) target = $region25
    $region24: #{bert_encoder_forward.1} parent=1 // pred_region
      _
    $region25: #{bert_encoder_forward.1} parent=1 // pred_fallthru
      _
    // Predicated region
    $region26: #{bert_encoder_forward.1} parent=1 // pred_check
      _
    $region27: #{bert_encoder_forward.1} parent=1 // pred_check_branch
      %58 = sbr.rel (0) target = $region29
    $region28: #{bert_encoder_forward.1} parent=1 // pred_region
      _
    $region29: #{bert_encoder_forward.1} parent=1 // pred_fallthru
      _
    // Predicated region
    $region30: #{bert_encoder_forward.1} parent=1 // pred_check
      _
    $region31: #{bert_encoder_forward.1} parent=1 // pred_check_branch
      %60 = sbr.rel (0) target = $region33
    $region32: #{bert_encoder_forward.1} parent=1 // pred_region
      _
    $region33: #{bert_encoder_forward.1} parent=1 // pred_fallthru
      _
    // Predicated region
    $region34: #{bert_encoder_forward.1} parent=1 // pred_check
      _
    $region35: #{bert_encoder_forward.1} parent=1 // pred_check_branch
      %62 = sbr.rel (0) target = $region37
    $region36: #{bert_encoder_forward.1} parent=1 // pred_region
      _
    $region37: #{bert_encoder_forward.1} parent=1 // pred_fallthru
      _
    // Predicated region
    $region38: #{bert_encoder_forward.1} parent=1 // pred_check
      _
    $region39: #{bert_encoder_forward.1} parent=1 // pred_check_branch
      %64 = sbr.rel (0) target = $region41
    $region40: #{bert_encoder_forward.1} parent=1 // pred_region
      _
    $region41: #{bert_encoder_forward.1} parent=1 // pred_fallthru
      _
    // Predicated region
    $region42: #{bert_encoder_forward.1} parent=1 // pred_check
      _
    $region43: #{bert_encoder_forward.1} parent=1 // pred_check_branch
      %66 = sbr.rel (0) target = $region45
    $region44: #{bert_encoder_forward.1} parent=1 // pred_region
      %s68 = ssub.s32 8192, 8192
      %69 = vsyncadd [#allocation9], %s68
      %s70 = sshll.u32 [#allocation8], 4
      %s71 = int_to_ptr.vmem [resolvable:$true] %s70
      %76 = dma.hbm_to_vmem [thread:$0]  %s10, 8192, %s71, [#allocation9], 256, 256, 16
    $region45: #{bert_encoder_forward.1} parent=1 // pred_fallthru
      _
    // Predicated region
    $region46: #{bert_encoder_forward.1} parent=1 // pred_check
      _
    $region47: #{bert_encoder_forward.1} parent=1 // pred_check_branch
      %78 = sbr.rel (0) target = $region49
    $region48: #{bert_encoder_forward.1} parent=1 // pred_region
      _
    $region49: #{bert_encoder_forward.1} parent=1 // pred_fallthru
      _
    // Predicated region
    $region50: #{bert_encoder_forward.1} parent=1 // pred_check
      _
    $region51: #{bert_encoder_forward.1} parent=1 // pred_check_branch
      %80 = sbr.rel (0) target = $region53
    $region52: #{bert_encoder_forward.1} parent=1 // pred_region
      %s82 = ssub.s32 8192, 8192
      %83 = vsyncadd [#allocation9], %s82
      %s84 = sshll.u32 [#allocation10], 4
      %s85 = int_to_ptr.vmem [resolvable:$true] %s84
      %90 = dma.hbm_to_vmem [thread:$0]  %s12, 8192, %s85, [#allocation9], 64, 64, 4
    $region53: #{bert_encoder_forward.1} parent=1 // pred_fallthru
      _
    // Predicated region
    $region54: #{bert_encoder_forward.1} parent=1 // pred_check
      _
    $region55: #{bert_encoder_forward.1} parent=1 // pred_check_branch
      %92 = sbr.rel (0) target = $region57
    $region56: #{bert_encoder_forward.1} parent=1 // pred_region
      _
    $region57: #{bert_encoder_forward.1} parent=1 // pred_fallthru
      _
    // Predicated region
    $region58: #{bert_encoder_forward.1} parent=1 // pred_check
      _
    $region59: #{bert_encoder_forward.1} parent=1 // pred_check_branch
      %94 = sbr.rel (0) target = $region61
    $region60: #{bert_encoder_forward.1} parent=1 // pred_region
      _
    $region61: #{bert_encoder_forward.1} parent=1 // pred_fallthru
      _
    // Predicated region
    $region62: #{bert_encoder_forward.1} parent=1 // pred_check
      _
    $region63: #{bert_encoder_forward.1} parent=1 // pred_check_branch
      %96 = sbr.rel (0) target = $region65
    $region64: #{bert_encoder_forward.1} parent=1 // pred_region
      _
    $region65: #{bert_encoder_forward.1} parent=1 // pred_fallthru
      _
    // Predicated region
    $region66: #{bert_encoder_forward.1} parent=1 // pred_check
      _
    $region67: #{bert_encoder_forward.1} parent=1 // pred_check_branch
      %98 = sbr.rel (0) target = $region69
    $region68: #{bert_encoder_forward.1} parent=1 // pred_region
      _
    $region69: #{bert_encoder_forward.1} parent=1 // pred_fallthru
      _
    // Predicated region
    $region70: #{bert_encoder_forward.1} parent=1 // pred_check
      _
    $region71: #{bert_encoder_forward.1} parent=1 // pred_check_branch
      %100 = sbr.rel (0) target = $region73
    $region72: #{bert_encoder_forward.1} parent=1 // pred_region
      _
    $region73: #{bert_encoder_forward.1} parent=1 // pred_fallthru
      _
    // Predicated region
    $region74: #{bert_encoder_forward.1} parent=1 // pred_check
      _
    $region75: #{bert_encoder_forward.1} parent=1 // pred_check_branch
      %102 = sbr.rel (0) target = $region77
    $region76: #{bert_encoder_forward.1} parent=1 // pred_region
      %103 = dma.done [#allocation6], 16
    $region77: #{bert_encoder_forward.1} parent=1 // pred_fallthru
      _
    // Predicated region
    $region78: #{bert_encoder_forward.1} parent=1 // pred_check
      _
    $region79: #{bert_encoder_forward.1} parent=1 // pred_check_branch
      %105 = sbr.rel (0) target = $region81
    $region80: #{bert_encoder_forward.1} parent=1 // pred_region
      %106 = dma.done [#allocation4], 6144
    $region81: #{bert_encoder_forward.1} parent=1 // pred_fallthru
      _
    // Predicated region
    $region82: #{bert_encoder_forward.1} parent=1 // pred_check
      _
    $region83: #{bert_encoder_forward.1} parent=1 // pred_check_branch
      %108 = sbr.rel (0) target = $region85
    $region84: #{bert_encoder_forward.1} parent=1 // pred_region
      %109 = dma.done [#allocation9], 8192
    $region85: #{bert_encoder_forward.1} parent=1 // pred_fallthru
      _
    // Predicated region
    $region86: #{bert_encoder_forward.1} parent=1 // pred_check
      _
    $region87: #{bert_encoder_forward.1} parent=1 // pred_check_branch
      %111 = sbr.rel (0) target = $region89
    $region88: #{bert_encoder_forward.1} parent=1 // pred_region
      %112 = dma.done [#allocation9], 8192
    $region89: #{bert_encoder_forward.1} parent=1 // pred_fallthru
      _
    %113 = sfence
    %v115 = vlaneseq
    %v116 = vand.u32 %v115, 127
    %s117 = sld [smem:[#allocation3]]
    %v118 = vstv %s117
    %vm119 = vcmp.lt.s32.totalorder %v116, %v118
    %v120 = vsel %vm119, 0.0, -1e+09
    %s121 = sld [smem:[#allocation3 + $0x1]]
    %v122 = vstv %s121
    %vm123 = vcmp.lt.s32.totalorder %v116, %v122
    %v124 = vsel %vm123, 0.0, -1e+09
    %v125 = vld [vmem:[%s1] sm:$0xff]
    %v126 = vld [vmem:[%s1 + $0x8] sm:$0xff]
    %v127 = vld [vmem:[%s2] sm:$0x1]
    %v128 = vld [vmem:[%s3] sm:$0x1]
    %129 = vadd.xlane.f32.xlu0 %v125
    %v130 = vpop.xlane.xlu0 %129
    %131 = vadd.xlane.f32.xlu0 %v126
    %v132 = vpop.xlane.xlu0 %131
    %v133 = vrcp.pop 128.0
    %v134 = vmul.f32 %v130, %v133
    %v135 = vmul.f32 %v132, %v133
    %v136 = vsub.f32 %v125, %v134
    %v137 = vsub.f32 %v126, %v135
    %v138 = vmul.f32 %v136, %v136
    %v139 = vmul.f32 %v137, %v137
    %140 = vadd.xlane.f32.xlu0 %v138
    %v141 = vpop.xlane.xlu0 %140
    %142 = vadd.xlane.f32.xlu0 %v139
    %v143 = vpop.xlane.xlu0 %142
    %v144 = vmul.f32 %v141, %v133
    %v145 = vmul.f32 %v143, %v133
    %v146 = vadd.f32 %v144, 1e-12
    %v147 = vadd.f32 %v145, 1e-12
    %v148 = vrsqrt.pop %v146
    %v149 = vrsqrt.pop %v147
    %v150 = vmul.f32 %v136, %v148
    %v151 = vmul.f32 %v137, %v149
    %v153 = vlaneseq
    %v154 = vshrl.u32 %v153, 7
    %v155 = vsub.s32 0, %v154
    %v156 = vrot.slane %v127, %v155
    %v158 = vmul.f32 %v150, %v156
    %v159 = vmul.f32 %v151, %v156
    %v161 = vlaneseq
    %v162 = vshrl.u32 %v161, 7
    %v163 = vsub.s32 0, %v162
    %v164 = vrot.slane %v128, %v163
    %v166 = vadd.f32 %v158, %v164
    %v167 = vadd.f32 %v159, %v164
    %v168 = vld [vmem:[#allocation7] sm:$0xff]
    %v169 = vld [vmem:[#allocation7 + $0x8] sm:$0xf]
    %v170 = vld [vmem:[#allocation7 + $0xc] sm:$0xff]
    %v171 = vld [vmem:[#allocation7 + $0x14] sm:$0xf]
    %v172 = vld [vmem:[#allocation7 + $0x18] sm:$0xff]
    %v173 = vld [vmem:[#allocation7 + $0x20] sm:$0xf]
    %v174 = vld [vmem:[#allocation7 + $0x24] sm:$0xff]
    %v175 = vld [vmem:[#allocation7 + $0x2c] sm:$0xf]
    %v176 = vld [vmem:[#allocation7 + $0x30] sm:$0xff]
    %v177 = vld [vmem:[#allocation7 + $0x38] sm:$0xf]
    %v178 = vld [vmem:[#allocation7 + $0x3c] sm:$0xff]
    %v179 = vld [vmem:[#allocation7 + $0x44] sm:$0xf]
    %v180 = vld [vmem:[#allocation7 + $0x48] sm:$0xff]
    %v181 = vld [vmem:[#allocation7 + $0x50] sm:$0xf]
    %v182 = vld [vmem:[#allocation7 + $0x54] sm:$0xff]
    %v183 = vld [vmem:[#allocation7 + $0x5c] sm:$0xf]
    %v184 = vld [vmem:[#allocation7 + $0x60] sm:$0xff]
    %v185 = vld [vmem:[#allocation7 + $0x68] sm:$0xf]
    %v186 = vld [vmem:[#allocation7 + $0x6c] sm:$0xff]
    %v187 = vld [vmem:[#allocation7 + $0x74] sm:$0xf]
    %v188 = vld [vmem:[#allocation7 + $0x78] sm:$0xff]
    %v189 = vld [vmem:[#allocation7 + $0x80] sm:$0xf]
    %v190 = vld [vmem:[#allocation7 + $0x84] sm:$0xff]
    %v191 = vld [vmem:[#allocation7 + $0x8c] sm:$0xf]
    %v192 = vld [vmem:[#allocation7 + $0x90] sm:$0xff]
    %v193 = vld [vmem:[#allocation7 + $0x98] sm:$0xf]
    %v194 = vld [vmem:[#allocation7 + $0x9c] sm:$0xff]
    %v195 = vld [vmem:[#allocation7 + $0xa4] sm:$0xf]
    %v196 = vld [vmem:[#allocation7 + $0xa8] sm:$0xff]
    %v197 = vld [vmem:[#allocation7 + $0xb0] sm:$0xf]
    %v198 = vld [vmem:[#allocation7 + $0xb4] sm:$0xff]
    %v199 = vld [vmem:[#allocation7 + $0xbc] sm:$0xf]
    %v200 = vld [vmem:[%s5] sm:$0x7]
    %v201 = vpack.c.bf16 %v167, %v166
    %v203 = vlaneseq
    %v204 = vshrl.u32 %v203, 7
    %v205 = vsub.s32 0, %v204
    %v206 = vrot.slane %v200, %v205
    %v207 = vlaneseq
    %v208 = vshrl.u32 %v207, 7
    %v209 = vsub.s32 1, %v208
    %v210 = vrot.slane %v200, %v209
    %v211 = vlaneseq
    %v212 = vshrl.u32 %v211, 7
    %v213 = vsub.s32 2, %v212
    %v214 = vrot.slane %v200, %v213
    %v250 = vunpack.c.l.b16 %v168
    %v251 = vunpack.c.h.b16 %v168
    %v252 = vunpack.c.l.b16 %v169
    %v253 = vunpack.c.l.b16 %v170
    %v254 = vunpack.c.h.b16 %v170
    %v255 = vunpack.c.l.b16 %v171
    %v256 = vunpack.c.l.b16 %v172
    %v257 = vunpack.c.h.b16 %v172
    %v258 = vunpack.c.l.b16 %v173
    %v259 = vunpack.c.l.b16 %v174
    %v260 = vunpack.c.h.b16 %v174
    %v261 = vunpack.c.l.b16 %v175
    %v262 = vunpack.c.l.b16 %v176
    %v263 = vunpack.c.h.b16 %v176
    %v264 = vunpack.c.l.b16 %v177
    %v265 = vunpack.c.l.b16 %v178
    %v266 = vunpack.c.h.b16 %v178
    %v267 = vunpack.c.l.b16 %v179
    %v268 = vunpack.c.l.b16 %v180
    %v269 = vunpack.c.h.b16 %v180
    %v270 = vunpack.c.l.b16 %v181
    %v271 = vunpack.c.l.b16 %v182
    %v272 = vunpack.c.h.b16 %v182
    %v273 = vunpack.c.l.b16 %v183
    %v274 = vunpack.c.l.b16 %v184
    %v275 = vunpack.c.h.b16 %v184
    %v276 = vunpack.c.l.b16 %v185
    %v277 = vunpack.c.l.b16 %v186
    %v278 = vunpack.c.h.b16 %v186
    %v279 = vunpack.c.l.b16 %v187
    %v280 = vunpack.c.l.b16 %v188
    %v281 = vunpack.c.h.b16 %v188
    %v282 = vunpack.c.l.b16 %v189
    %v283 = vunpack.c.l.b16 %v190
    %v284 = vunpack.c.h.b16 %v190
    %v285 = vunpack.c.l.b16 %v191
    %v286 = vunpack.c.l.b16 %v192
    %v287 = vunpack.c.h.b16 %v192
    %v288 = vunpack.c.l.b16 %v193
    %v289 = vunpack.c.l.b16 %v194
    %v290 = vunpack.c.h.b16 %v194
    %v291 = vunpack.c.l.b16 %v195
    %v292 = vunpack.c.l.b16 %v196
    %v293 = vunpack.c.h.b16 %v196
    %v294 = vunpack.c.l.b16 %v197
    %v295 = vunpack.c.l.b16 %v198
    %v296 = vunpack.c.h.b16 %v198
    %v297 = vunpack.c.l.b16 %v199
    %v298 = vpack.c.b16 %v253, %v250
    %v299 = vpack.c.b16 %v254, %v251
    %v300 = vpack.c.b16 %v255, %v252
    %v301 = vpack.c.b16 %v259, %v256
    %v302 = vpack.c.b16 %v260, %v257
    %v303 = vpack.c.b16 %v261, %v258
    %v304 = vpack.c.b16 %v265, %v262
    %v305 = vpack.c.b16 %v266, %v263
    %v306 = vpack.c.b16 %v267, %v264
    %v307 = vpack.c.b16 %v271, %v268
    %v308 = vpack.c.b16 %v272, %v269
    %v309 = vpack.c.b16 %v273, %v270
    %v310 = vpack.c.b16 %v277, %v274
    %v311 = vpack.c.b16 %v278, %v275
    %v312 = vpack.c.b16 %v279, %v276
    %v313 = vpack.c.b16 %v283, %v280
    %v314 = vpack.c.b16 %v284, %v281
    %v315 = vpack.c.b16 %v285, %v282
    %v316 = vpack.c.b16 %v289, %v286
    %v317 = vpack.c.b16 %v290, %v287
    %v318 = vpack.c.b16 %v291, %v288
    %v319 = vpack.c.b16 %v295, %v292
    %v320 = vpack.c.b16 %v296, %v293
    %v321 = vpack.c.b16 %v297, %v294
    %346 = vmatprep.subr.bf16.mxu0 %v299
    %347 = vmatpush1.bf16.msra.mxu0 %v298
    %348 = vmatprep.subr.bf16.mxu0 %v302
    %349 = vmatpush1.bf16.msra.mxu0 %v301
    %350 = vmatprep.subr.bf16.mxu0 %v305
    %351 = vmatpush1.bf16.msra.mxu0 %v304
    %352 = vmatprep.subr.bf16.mxu0 %v308
    %353 = vmatpush1.bf16.msra.mxu0 %v307
    %354 = vmatprep.subr.bf16.mxu0 %v311
    %355 = vmatpush1.bf16.msra.mxu0 %v310
    %356 = vmatprep.subr.bf16.mxu0 %v314
    %357 = vmatpush1.bf16.msra.mxu0 %v313
    %358 = vmatprep.subr.bf16.mxu0 %v317
    %359 = vmatpush1.bf16.msra.mxu0 %v316
    %360 = vmatprep.subr.bf16.mxu0 %v320
    %361 = vmatpush1.bf16.msra.mxu0 %v319
    %362 = vmatprep.subr.bf16.mxu0 0
    %363 = vmatpush1.bf16.msra.mxu0 0
    %364 = vmatprep.subr.bf16.mxu0 0
    %365 = vmatpush1.bf16.msra.mxu0 0
    %366 = vmatprep.subr.bf16.mxu0 0
    %367 = vmatpush1.bf16.msra.mxu0 0
    %368 = vmatprep.subr.bf16.mxu0 0
    %369 = vmatpush1.bf16.msra.mxu0 0
    %370 = vmatprep.subr.bf16.mxu0 0
    %371 = vmatpush1.bf16.msra.mxu0 0
    %372 = vmatprep.subr.bf16.mxu0 0
    %373 = vmatpush1.bf16.msra.mxu0 0
    %374 = vmatprep.subr.bf16.mxu0 0
    %375 = vmatpush1.bf16.msra.mxu0 0
    %376 = vmatprep.subr.bf16.mxu0 0
    %377 = vmatpush1.bf16.msra.mxu0 0
    %378 = vmatprep.mubr.bf16.mxu0 0
    %379 = vmatmul.mubr.bf16.gmra.mrb[0].mxu0 %v201
    %v380 = vpop.f32.mrb[0].mxu0
    %v381 = vadd.f32 %v206, %v380
    %v382 = vpop.f32.mrb[0].mxu0
    %v383 = vadd.f32 %v210, %v382
    %v384 = vpop.f32.mrb[0].mxu0
    %v385 = vadd.f32 %v206, %v384
    %v386 = vpop.f32.mrb[0].mxu0
    %v387 = vadd.f32 %v210, %v386
    %388 = vdwg.mxu0
    %389 = vmatprep.subr.bf16.mxu0 0
    %390 = vmatpush1.bf16.msra.mxu0 %v300
    %391 = vmatprep.subr.bf16.mxu0 0
    %392 = vmatpush1.bf16.msra.mxu0 %v303
    %393 = vmatprep.subr.bf16.mxu0 0
    %394 = vmatpush1.bf16.msra.mxu0 %v306
    %395 = vmatprep.subr.bf16.mxu0 0
    %396 = vmatpush1.bf16.msra.mxu0 %v309
    %397 = vmatprep.subr.bf16.mxu0 0
    %398 = vmatpush1.bf16.msra.mxu0 %v312
    %399 = vmatprep.subr.bf16.mxu0 0
    %400 = vmatpush1.bf16.msra.mxu0 %v315
    %401 = vmatprep.subr.bf16.mxu0 0
    %402 = vmatpush1.bf16.msra.mxu0 %v318
    %403 = vmatprep.subr.bf16.mxu0 0
    %404 = vmatpush1.bf16.msra.mxu0 %v321
    %405 = vmatprep.subr.bf16.mxu0 0
    %406 = vmatpush1.bf16.msra.mxu0 0
    %407 = vmatprep.subr.bf16.mxu0 0
    %408 = vmatpush1.bf16.msra.mxu0 0
    %409 = vmatprep.subr.bf16.mxu0 0
    %410 = vmatpush1.bf16.msra.mxu0 0
    %411 = vmatprep.subr.bf16.mxu0 0
    %412 = vmatpush1.bf16.msra.mxu0 0
    %413 = vmatprep.subr.bf16.mxu0 0
    %414 = vmatpush1.bf16.msra.mxu0 0
    %415 = vmatprep.subr.bf16.mxu0 0
    %416 = vmatpush1.bf16.msra.mxu0 0
    %417 = vmatprep.subr.bf16.mxu0 0
    %418 = vmatpush1.bf16.msra.mxu0 0
    %419 = vmatprep.subr.bf16.mxu0 0
    %420 = vmatpush1.bf16.msra.mxu0 0
    %421 = vmatprep.mubr.bf16.mxu0 0
    %422 = vmatmul.mubr.bf16.gmra.mrb[0].mxu0 %v201
    %v423 = vpop.f32.mrb[0].mxu0
    %v424 = vadd.f32 %v214, %v423
    %v425 = vpop.f32.mrb[0].mxu0
    %v426 = vpop.f32.mrb[0].mxu0
    %v427 = vadd.f32 %v214, %v426
    %v428 = vpop.f32.mrb[0].mxu0
    %429 = vdwg.mxu0
    %vm430 = vcmask 523264
    %v432 = vsel %vm430, %v381, 0
    %v435 = vsel %vm430, %v383, 0
    %437 = vmatprep.subr.mxu0 0.0
    %438 = vmatpush1.xpose.msra.mxu0 %v435
    %439 = vmatprep.subr.mxu0 0.0
    %440 = vmatpush1.xpose.msra.mxu0 0.0
    %441 = vmatprep.subr.mxu0 0.0
    %442 = vmatpush1.xpose.msra.mxu0 0.0
    %443 = vmatprep.subr.mxu0 0.0
    %444 = vmatpush1.xpose.msra.mxu0 0.0
    %445 = vmatprep.subr.mxu0 0.0
    %446 = vmatpush1.xpose.msra.mxu0 0.0
    %447 = vmatprep.subr.mxu0 0.0
    %448 = vmatpush1.xpose.msra.mxu0 0.0
    %449 = vmatprep.subr.mxu0 0.0
    %450 = vmatpush1.xpose.msra.mxu0 0.0
    %451 = vmatprep.subr.mxu0 0.0
    %452 = vmatpush1.xpose.msra.mxu0 0.0
    %453 = vmatprep.subr.mxu0 0.0
    %454 = vmatpush1.xpose.msra.mxu0 0.0
    %455 = vmatprep.subr.mxu0 0.0
    %456 = vmatpush1.xpose.msra.mxu0 0.0
    %457 = vmatprep.subr.mxu0 0.0
    %458 = vmatpush1.xpose.msra.mxu0 0.0
    %459 = vmatprep.subr.mxu0 0.0
    %460 = vmatpush1.xpose.msra.mxu0 0.0
    %461 = vmatprep.subr.mxu0 0.0
    %462 = vmatpush1.xpose.msra.mxu0 0.0
    %463 = vmatprep.subr.mxu0 0.0
    %464 = vmatpush1.xpose.msra.mxu0 0.0
    %465 = vmatprep.subr.mxu0 0.0
    %466 = vmatpush1.xpose.msra.mxu0 0.0
    %467 = vmatprep.subr.mxu0 0.0
    %468 = vmatpush1.xpose.msra.mxu0 0.0
    %469 = vmatprep.subr.mxu0 0.0
    %470 = vmatpush1.xpose.msra.mxu0 0.0
    %471 = vmatprep.subr.mxu0 0.0
    %472 = vmatpush1.xpose.msra.mxu0 0.0
    %473 = vmatprep.subr.mxu0 0.0
    %474 = vmatpush1.xpose.msra.mxu0 0.0
    %475 = vmatprep.subr.mxu0 0.0
    %476 = vmatpush1.xpose.msra.mxu0 0.0
    %477 = vmatprep.subr.mxu0 0.0
    %478 = vmatpush1.xpose.msra.mxu0 0.0
    %479 = vmatprep.subr.mxu0 0.0
    %480 = vmatpush1.xpose.msra.mxu0 0.0
    %481 = vmatprep.subr.mxu0 0.0
    %482 = vmatpush1.xpose.msra.mxu0 0.0
    %483 = vmatprep.subr.mxu0 0.0
    %484 = vmatpush1.xpose.msra.mxu0 0.0
    %485 = vmatprep.subr.mxu0 0.0
    %486 = vmatpush1.xpose.msra.mxu0 0.0
    %487 = vmatprep.subr.mxu0 0.0
    %488 = vmatpush1.xpose.msra.mxu0 0.0
    %489 = vmatprep.subr.mxu0 0.0
    %490 = vmatpush1.xpose.msra.mxu0 0.0
    %491 = vmatprep.subr.mxu0 0.0
    %492 = vmatpush1.xpose.msra.mxu0 0.0
    %493 = vmatprep.subr.mxu0 0.0
    %494 = vmatpush1.xpose.msra.mxu0 0.0
    %495 = vmatprep.subr.mxu0 0.0
    %496 = vmatpush1.xpose.msra.mxu0 0.0
    %497 = vmatprep.subr.mxu0 0.0
    %498 = vmatpush1.xpose.msra.mxu0 0.0
    %499 = vmatprep.subr.mxu0 0.0
    %500 = vmatpush1.xpose.msra.mxu0 0.0
    %501 = vmatprep.mubr.f32.mxu0 0.0
    %502 = vmatmul.mubr.f32.gmra.mrb[0].mxu0 %v432
    %v503 = vpop.f32.mrb[0].mxu0
    %v504 = vadd.f32 0.0, %v503
    %v505 = vpop.f32.mrb[0].mxu0
    %506 = vdwg.mxu0
    %v507 = vmul.f32 %v504, 0.125
    %v508 = vadd.f32 %v507, %v120
    %vm509 = vcmask 64512
    %v510 = vsel %vm509, %v508, -inf
    %511 = vmax.xlane.f32.xlu0 %v510
    %v512 = vpop.xlane.xlu0 %511
    %v513 = vsub.f32 %v508, %v512
    %v514 = vmul.f32 %v513, 1.442695
    %v515 = vpow.pop %v514
    %v516 = vsel %vm509, %v515, 0.0
    %517 = vadd.xlane.f32.xlu0 %v516
    %v518 = vpop.xlane.xlu0 %517
    %v519 = vrcp.pop %v518
    %v520 = vmul.f32 %v515, %v519
    %v522 = vsel %vm509, %v520, 0
    %524 = vmatprep.subr.mxu0 0.0
    %525 = vmatpush1.msra.mxu0 %v424
    %526 = vmatprep.subr.mxu0 0.0
    %527 = vmatpush1.msra.mxu0 0.0
    %528 = vmatprep.subr.mxu0 0.0
    %529 = vmatpush1.msra.mxu0 0.0
    %530 = vmatprep.subr.mxu0 0.0
    %531 = vmatpush1.msra.mxu0 0.0
    %532 = vmatprep.subr.mxu0 0.0
    %533 = vmatpush1.msra.mxu0 0.0
    %534 = vmatprep.subr.mxu0 0.0
    %535 = vmatpush1.msra.mxu0 0.0
    %536 = vmatprep.subr.mxu0 0.0
    %537 = vmatpush1.msra.mxu0 0.0
    %538 = vmatprep.subr.mxu0 0.0
    %539 = vmatpush1.msra.mxu0 0.0
    %540 = vmatprep.subr.mxu0 0.0
    %541 = vmatpush1.msra.mxu0 0.0
    %542 = vmatprep.subr.mxu0 0.0
    %543 = vmatpush1.msra.mxu0 0.0
    %544 = vmatprep.subr.mxu0 0.0
    %545 = vmatpush1.msra.mxu0 0.0
    %546 = vmatprep.subr.mxu0 0.0
    %547 = vmatpush1.msra.mxu0 0.0
    %548 = vmatprep.subr.mxu0 0.0
    %549 = vmatpush1.msra.mxu0 0.0
    %550 = vmatprep.subr.mxu0 0.0
    %551 = vmatpush1.msra.mxu0 0.0
    %552 = vmatprep.subr.mxu0 0.0
    %553 = vmatpush1.msra.mxu0 0.0
    %554 = vmatprep.subr.mxu0 0.0
    %555 = vmatpush1.msra.mxu0 0.0
    %556 = vmatprep.subr.mxu0 0.0
    %557 = vmatpush1.msra.mxu0 0.0
    %558 = vmatprep.subr.mxu0 0.0
    %559 = vmatpush1.msra.mxu0 0.0
    %560 = vmatprep.subr.mxu0 0.0
    %561 = vmatpush1.msra.mxu0 0.0
    %562 = vmatprep.subr.mxu0 0.0
    %563 = vmatpush1.msra.mxu0 0.0
    %564 = vmatprep.subr.mxu0 0.0
    %565 = vmatpush1.msra.mxu0 0.0
    %566 = vmatprep.subr.mxu0 0.0
    %567 = vmatpush1.msra.mxu0 0.0
    %568 = vmatprep.subr.mxu0 0.0
    %569 = vmatpush1.msra.mxu0 0.0
    %570 = vmatprep.subr.mxu0 0.0
    %571 = vmatpush1.msra.mxu0 0.0
    %572 = vmatprep.subr.mxu0 0.0
    %573 = vmatpush1.msra.mxu0 0.0
    %574 = vmatprep.subr.mxu0 0.0
    %575 = vmatpush1.msra.mxu0 0.0
    %576 = vmatprep.subr.mxu0 0.0
    %577 = vmatpush1.msra.mxu0 0.0
    %578 = vmatprep.subr.mxu0 0.0
    %579 = vmatpush1.msra.mxu0 0.0
    %580 = vmatprep.subr.mxu0 0.0
    %581 = vmatpush1.msra.mxu0 0.0
    %582 = vmatprep.subr.mxu0 0.0
    %583 = vmatpush1.msra.mxu0 0.0
    %584 = vmatprep.subr.mxu0 0.0
    %585 = vmatpush1.msra.mxu0 0.0
    %586 = vmatprep.subr.mxu0 0.0
    %587 = vmatpush1.msra.mxu0 0.0
    %588 = vmatprep.mubr.f32.mxu0 0.0
    %589 = vmatmul.mubr.f32.gmra.mrb[0].mxu0 %v522
    %v590 = vpop.f32.mrb[0].mxu0
    %v591 = vadd.f32 0.0, %v590
    %v592 = vpop.f32.mrb[0].mxu0
    %593 = vdwg.mxu0
    %594 = vst.msk [vmem:[#allocation2] sm:$0xff] %vm430, %v591
    %595 = vrot.lane.b32.xlu0 %v381, 64
    %v596 = vpop.permute.xlu0 %595
    %597 = vrot.lane.b32.xlu0 %v383, 64
    %v598 = vpop.permute.xlu0 %597
    %v599 = vsel %vm430, %v596, 0
    %v601 = vsel %vm430, %v598, 0
    %603 = vmatprep.subr.mxu0 0.0
    %604 = vmatpush1.xpose.msra.mxu0 %v601
    %605 = vmatprep.subr.mxu0 0.0
    %606 = vmatpush1.xpose.msra.mxu0 0.0
    %607 = vmatprep.subr.mxu0 0.0
    %608 = vmatpush1.xpose.msra.mxu0 0.0
    %609 = vmatprep.subr.mxu0 0.0
    %610 = vmatpush1.xpose.msra.mxu0 0.0
    %611 = vmatprep.subr.mxu0 0.0
    %612 = vmatpush1.xpose.msra.mxu0 0.0
    %613 = vmatprep.subr.mxu0 0.0
    %614 = vmatpush1.xpose.msra.mxu0 0.0
    %615 = vmatprep.subr.mxu0 0.0
    %616 = vmatpush1.xpose.msra.mxu0 0.0
    %617 = vmatprep.subr.mxu0 0.0
    %618 = vmatpush1.xpose.msra.mxu0 0.0
    %619 = vmatprep.subr.mxu0 0.0
    %620 = vmatpush1.xpose.msra.mxu0 0.0
    %621 = vmatprep.subr.mxu0 0.0
    %622 = vmatpush1.xpose.msra.mxu0 0.0
    %623 = vmatprep.subr.mxu0 0.0
    %624 = vmatpush1.xpose.msra.mxu0 0.0
    %625 = vmatprep.subr.mxu0 0.0
    %626 = vmatpush1.xpose.msra.mxu0 0.0
    %627 = vmatprep.subr.mxu0 0.0
    %628 = vmatpush1.xpose.msra.mxu0 0.0
    %629 = vmatprep.subr.mxu0 0.0
    %630 = vmatpush1.xpose.msra.mxu0 0.0
    %631 = vmatprep.subr.mxu0 0.0
    %632 = vmatpush1.xpose.msra.mxu0 0.0
    %633 = vmatprep.subr.mxu0 0.0
    %634 = vmatpush1.xpose.msra.mxu0 0.0
    %635 = vmatprep.subr.mxu0 0.0
    %636 = vmatpush1.xpose.msra.mxu0 0.0
    %637 = vmatprep.subr.mxu0 0.0
    %638 = vmatpush1.xpose.msra.mxu0 0.0
    %639 = vmatprep.subr.mxu0 0.0
    %640 = vmatpush1.xpose.msra.mxu0 0.0
    %641 = vmatprep.subr.mxu0 0.0
    %642 = vmatpush1.xpose.msra.mxu0 0.0
    %643 = vmatprep.subr.mxu0 0.0
    %644 = vmatpush1.xpose.msra.mxu0 0.0
    %645 = vmatprep.subr.mxu0 0.0
    %646 = vmatpush1.xpose.msra.mxu0 0.0
    %647 = vmatprep.subr.mxu0 0.0
    %648 = vmatpush1.xpose.msra.mxu0 0.0
    %649 = vmatprep.subr.mxu0 0.0
    %650 = vmatpush1.xpose.msra.mxu0 0.0
    %651 = vmatprep.subr.mxu0 0.0
    %652 = vmatpush1.xpose.msra.mxu0 0.0
    %653 = vmatprep.subr.mxu0 0.0
    %654 = vmatpush1.xpose.msra.mxu0 0.0
    %655 = vmatprep.subr.mxu0 0.0
    %656 = vmatpush1.xpose.msra.mxu0 0.0
    %657 = vmatprep.subr.mxu0 0.0
    %658 = vmatpush1.xpose.msra.mxu0 0.0
    %659 = vmatprep.subr.mxu0 0.0
    %660 = vmatpush1.xpose.msra.mxu0 0.0
    %661 = vmatprep.subr.mxu0 0.0
    %662 = vmatpush1.xpose.msra.mxu0 0.0
    %663 = vmatprep.subr.mxu0 0.0
    %664 = vmatpush1.xpose.msra.mxu0 0.0
    %665 = vmatprep.subr.mxu0 0.0
    %666 = vmatpush1.xpose.msra.mxu0 0.0
    %667 = vmatprep.mubr.f32.mxu0 0.0
    %668 = vmatmul.mubr.f32.gmra.mrb[0].mxu0 %v599
    %v669 = vpop.f32.mrb[0].mxu0
    %v670 = vadd.f32 0.0, %v669
    %v671 = vpop.f32.mrb[0].mxu0
    %672 = vdwg.mxu0
    %v673 = vmul.f32 %v670, 0.125
    %v674 = vadd.f32 %v673, %v120
    %v675 = vsel %vm509, %v674, -inf
    %676 = vmax.xlane.f32.xlu0 %v675
    %v677 = vpop.xlane.xlu0 %676
    %v678 = vsub.f32 %v674, %v677
    %v679 = vmul.f32 %v678, 1.442695
    %v680 = vpow.pop %v679
    %v681 = vsel %vm509, %v680, 0.0
    %682 = vadd.xlane.f32.xlu0 %v681
    %v683 = vpop.xlane.xlu0 %682
    %v684 = vrcp.pop %v683
    %v685 = vmul.f32 %v680, %v684
    %687 = vrot.lane.b32.xlu0 %v424, 64
    %v688 = vpop.permute.xlu0 %687
    %v691 = vsel %vm509, %v685, 0
    %693 = vmatprep.subr.mxu0 0.0
    %694 = vmatpush1.msra.mxu0 %v688
    %695 = vmatprep.subr.mxu0 0.0
    %696 = vmatpush1.msra.mxu0 0.0
    %697 = vmatprep.subr.mxu0 0.0
    %698 = vmatpush1.msra.mxu0 0.0
    %699 = vmatprep.subr.mxu0 0.0
    %700 = vmatpush1.msra.mxu0 0.0
    %701 = vmatprep.subr.mxu0 0.0
    %702 = vmatpush1.msra.mxu0 0.0
    %703 = vmatprep.subr.mxu0 0.0
    %704 = vmatpush1.msra.mxu0 0.0
    %705 = vmatprep.subr.mxu0 0.0
    %706 = vmatpush1.msra.mxu0 0.0
    %707 = vmatprep.subr.mxu0 0.0
    %708 = vmatpush1.msra.mxu0 0.0
    %709 = vmatprep.subr.mxu0 0.0
    %710 = vmatpush1.msra.mxu0 0.0
    %711 = vmatprep.subr.mxu0 0.0
    %712 = vmatpush1.msra.mxu0 0.0
    %713 = vmatprep.subr.mxu0 0.0
    %714 = vmatpush1.msra.mxu0 0.0
    %715 = vmatprep.subr.mxu0 0.0
    %716 = vmatpush1.msra.mxu0 0.0
    %717 = vmatprep.subr.mxu0 0.0
    %718 = vmatpush1.msra.mxu0 0.0
    %719 = vmatprep.subr.mxu0 0.0
    %720 = vmatpush1.msra.mxu0 0.0
    %721 = vmatprep.subr.mxu0 0.0
    %722 = vmatpush1.msra.mxu0 0.0
    %723 = vmatprep.subr.mxu0 0.0
    %724 = vmatpush1.msra.mxu0 0.0
    %725 = vmatprep.subr.mxu0 0.0
    %726 = vmatpush1.msra.mxu0 0.0
    %727 = vmatprep.subr.mxu0 0.0
    %728 = vmatpush1.msra.mxu0 0.0
    %729 = vmatprep.subr.mxu0 0.0
    %730 = vmatpush1.msra.mxu0 0.0
    %731 = vmatprep.subr.mxu0 0.0
    %732 = vmatpush1.msra.mxu0 0.0
    %733 = vmatprep.subr.mxu0 0.0
    %734 = vmatpush1.msra.mxu0 0.0
    %735 = vmatprep.subr.mxu0 0.0
    %736 = vmatpush1.msra.mxu0 0.0
    %737 = vmatprep.subr.mxu0 0.0
    %738 = vmatpush1.msra.mxu0 0.0
    %739 = vmatprep.subr.mxu0 0.0
    %740 = vmatpush1.msra.mxu0 0.0
    %741 = vmatprep.subr.mxu0 0.0
    %742 = vmatpush1.msra.mxu0 0.0
    %743 = vmatprep.subr.mxu0 0.0
    %744 = vmatpush1.msra.mxu0 0.0
    %745 = vmatprep.subr.mxu0 0.0
    %746 = vmatpush1.msra.mxu0 0.0
    %747 = vmatprep.subr.mxu0 0.0
    %748 = vmatpush1.msra.mxu0 0.0
    %749 = vmatprep.subr.mxu0 0.0
    %750 = vmatpush1.msra.mxu0 0.0
    %751 = vmatprep.subr.mxu0 0.0
    %752 = vmatpush1.msra.mxu0 0.0
    %753 = vmatprep.subr.mxu0 0.0
    %754 = vmatpush1.msra.mxu0 0.0
    %755 = vmatprep.subr.mxu0 0.0
    %756 = vmatpush1.msra.mxu0 0.0
    %757 = vmatprep.mubr.f32.mxu0 0.0
    %758 = vmatmul.mubr.f32.gmra.mrb[0].mxu0 %v691
    %v759 = vpop.f32.mrb[0].mxu0
    %v760 = vadd.f32 0.0, %v759
    %v761 = vpop.f32.mrb[0].mxu0
    %762 = vdwg.mxu0
    %764 = vrot.lane.b32.xlu0 %v760, 64
    %v765 = vpop.permute.xlu0 %764
    %vm767 = vcmask 1048064
    %768 = vst.msk [vmem:[#allocation2] sm:$0xff] %vm767, %v765
    %v770 = vsel %vm430, %v385, 0
    %v773 = vsel %vm430, %v387, 0
    %775 = vmatprep.subr.mxu0 0.0
    %776 = vmatpush1.xpose.msra.mxu0 %v773
    %777 = vmatprep.subr.mxu0 0.0
    %778 = vmatpush1.xpose.msra.mxu0 0.0
    %779 = vmatprep.subr.mxu0 0.0
    %780 = vmatpush1.xpose.msra.mxu0 0.0
    %781 = vmatprep.subr.mxu0 0.0
    %782 = vmatpush1.xpose.msra.mxu0 0.0
    %783 = vmatprep.subr.mxu0 0.0
    %784 = vmatpush1.xpose.msra.mxu0 0.0
    %785 = vmatprep.subr.mxu0 0.0
    %786 = vmatpush1.xpose.msra.mxu0 0.0
    %787 = vmatprep.subr.mxu0 0.0
    %788 = vmatpush1.xpose.msra.mxu0 0.0
    %789 = vmatprep.subr.mxu0 0.0
    %790 = vmatpush1.xpose.msra.mxu0 0.0
    %791 = vmatprep.subr.mxu0 0.0
    %792 = vmatpush1.xpose.msra.mxu0 0.0
    %793 = vmatprep.subr.mxu0 0.0
    %794 = vmatpush1.xpose.msra.mxu0 0.0
    %795 = vmatprep.subr.mxu0 0.0
    %796 = vmatpush1.xpose.msra.mxu0 0.0
    %797 = vmatprep.subr.mxu0 0.0
    %798 = vmatpush1.xpose.msra.mxu0 0.0
    %799 = vmatprep.subr.mxu0 0.0
    %800 = vmatpush1.xpose.msra.mxu0 0.0
    %801 = vmatprep.subr.mxu0 0.0
    %802 = vmatpush1.xpose.msra.mxu0 0.0
    %803 = vmatprep.subr.mxu0 0.0
    %804 = vmatpush1.xpose.msra.mxu0 0.0
    %805 = vmatprep.subr.mxu0 0.0
    %806 = vmatpush1.xpose.msra.mxu0 0.0
    %807 = vmatprep.subr.mxu0 0.0
    %808 = vmatpush1.xpose.msra.mxu0 0.0
    %809 = vmatprep.subr.mxu0 0.0
    %810 = vmatpush1.xpose.msra.mxu0 0.0
    %811 = vmatprep.subr.mxu0 0.0
    %812 = vmatpush1.xpose.msra.mxu0 0.0
    %813 = vmatprep.subr.mxu0 0.0
    %814 = vmatpush1.xpose.msra.mxu0 0.0
    %815 = vmatprep.subr.mxu0 0.0
    %816 = vmatpush1.xpose.msra.mxu0 0.0
    %817 = vmatprep.subr.mxu0 0.0
    %818 = vmatpush1.xpose.msra.mxu0 0.0
    %819 = vmatprep.subr.mxu0 0.0
    %820 = vmatpush1.xpose.msra.mxu0 0.0
    %821 = vmatprep.subr.mxu0 0.0
    %822 = vmatpush1.xpose.msra.mxu0 0.0
    %823 = vmatprep.subr.mxu0 0.0
    %824 = vmatpush1.xpose.msra.mxu0 0.0
    %825 = vmatprep.subr.mxu0 0.0
    %826 = vmatpush1.xpose.msra.mxu0 0.0
    %827 = vmatprep.subr.mxu0 0.0
    %828 = vmatpush1.xpose.msra.mxu0 0.0
    %829 = vmatprep.subr.mxu0 0.0
    %830 = vmatpush1.xpose.msra.mxu0 0.0
    %831 = vmatprep.subr.mxu0 0.0
    %832 = vmatpush1.xpose.msra.mxu0 0.0
    %833 = vmatprep.subr.mxu0 0.0
    %834 = vmatpush1.xpose.msra.mxu0 0.0
    %835 = vmatprep.subr.mxu0 0.0
    %836 = vmatpush1.xpose.msra.mxu0 0.0
    %837 = vmatprep.subr.mxu0 0.0
    %838 = vmatpush1.xpose.msra.mxu0 0.0
    %839 = vmatprep.mubr.f32.mxu0 0.0
    %840 = vmatmul.mubr.f32.gmra.mrb[0].mxu0 %v770
    %v841 = vpop.f32.mrb[0].mxu0
    %v842 = vadd.f32 0.0, %v841
    %v843 = vpop.f32.mrb[0].mxu0
    %844 = vdwg.mxu0
    %v845 = vmul.f32 %v842, 0.125
    %v846 = vadd.f32 %v845, %v124
    %v847 = vsel %vm509, %v846, -inf
    %848 = vmax.xlane.f32.xlu0 %v847
    %v849 = vpop.xlane.xlu0 %848
    %v850 = vsub.f32 %v846, %v849
    %v851 = vmul.f32 %v850, 1.442695
    %v852 = vpow.pop %v851
    %v853 = vsel %vm509, %v852, 0.0
    %854 = vadd.xlane.f32.xlu0 %v853
    %v855 = vpop.xlane.xlu0 %854
    %v856 = vrcp.pop %v855
    %v857 = vmul.f32 %v852, %v856
    %v859 = vsel %vm509, %v857, 0
    %861 = vmatprep.subr.mxu0 0.0
    %862 = vmatpush1.msra.mxu0 %v427
    %863 = vmatprep.subr.mxu0 0.0
    %864 = vmatpush1.msra.mxu0 0.0
    %865 = vmatprep.subr.mxu0 0.0
    %866 = vmatpush1.msra.mxu0 0.0
    %867 = vmatprep.subr.mxu0 0.0
    %868 = vmatpush1.msra.mxu0 0.0
    %869 = vmatprep.subr.mxu0 0.0
    %870 = vmatpush1.msra.mxu0 0.0
    %871 = vmatprep.subr.mxu0 0.0
    %872 = vmatpush1.msra.mxu0 0.0
    %873 = vmatprep.subr.mxu0 0.0
    %874 = vmatpush1.msra.mxu0 0.0
    %875 = vmatprep.subr.mxu0 0.0
    %876 = vmatpush1.msra.mxu0 0.0
    %877 = vmatprep.subr.mxu0 0.0
    %878 = vmatpush1.msra.mxu0 0.0
    %879 = vmatprep.subr.mxu0 0.0
    %880 = vmatpush1.msra.mxu0 0.0
    %881 = vmatprep.subr.mxu0 0.0
    %882 = vmatpush1.msra.mxu0 0.0
    %883 = vmatprep.subr.mxu0 0.0
    %884 = vmatpush1.msra.mxu0 0.0
    %885 = vmatprep.subr.mxu0 0.0
    %886 = vmatpush1.msra.mxu0 0.0
    %887 = vmatprep.subr.mxu0 0.0
    %888 = vmatpush1.msra.mxu0 0.0
    %889 = vmatprep.subr.mxu0 0.0
    %890 = vmatpush1.msra.mxu0 0.0
    %891 = vmatprep.subr.mxu0 0.0
    %892 = vmatpush1.msra.mxu0 0.0
    %893 = vmatprep.subr.mxu0 0.0
    %894 = vmatpush1.msra.mxu0 0.0
    %895 = vmatprep.subr.mxu0 0.0
    %896 = vmatpush1.msra.mxu0 0.0
    %897 = vmatprep.subr.mxu0 0.0
    %898 = vmatpush1.msra.mxu0 0.0
    %899 = vmatprep.subr.mxu0 0.0
    %900 = vmatpush1.msra.mxu0 0.0
    %901 = vmatprep.subr.mxu0 0.0
    %902 = vmatpush1.msra.mxu0 0.0
    %903 = vmatprep.subr.mxu0 0.0
    %904 = vmatpush1.msra.mxu0 0.0
    %905 = vmatprep.subr.mxu0 0.0
    %906 = vmatpush1.msra.mxu0 0.0
    %907 = vmatprep.subr.mxu0 0.0
    %908 = vmatpush1.msra.mxu0 0.0
    %909 = vmatprep.subr.mxu0 0.0
    %910 = vmatpush1.msra.mxu0 0.0
    %911 = vmatprep.subr.mxu0 0.0
    %912 = vmatpush1.msra.mxu0 0.0
    %913 = vmatprep.subr.mxu0 0.0
    %914 = vmatpush1.msra.mxu0 0.0
    %915 = vmatprep.subr.mxu0 0.0
    %916 = vmatpush1.msra.mxu0 0.0
    %917 = vmatprep.subr.mxu0 0.0
    %918 = vmatpush1.msra.mxu0 0.0
    %919 = vmatprep.subr.mxu0 0.0
    %920 = vmatpush1.msra.mxu0 0.0
    %921 = vmatprep.subr.mxu0 0.0
    %922 = vmatpush1.msra.mxu0 0.0
    %923 = vmatprep.subr.mxu0 0.0
    %924 = vmatpush1.msra.mxu0 0.0
    %925 = vmatprep.mubr.f32.mxu0 0.0
    %926 = vmatmul.mubr.f32.gmra.mrb[0].mxu0 %v859
    %v927 = vpop.f32.mrb[0].mxu0
    %v928 = vadd.f32 0.0, %v927
    %v929 = vpop.f32.mrb[0].mxu0
    %930 = vdwg.mxu0
    %931 = vst.msk [vmem:[#allocation2 + $0x8] sm:$0xff] %vm430, %v928
    %932 = vrot.lane.b32.xlu0 %v385, 64
    %v933 = vpop.permute.xlu0 %932
    %934 = vrot.lane.b32.xlu0 %v387, 64
    %v935 = vpop.permute.xlu0 %934
    %v936 = vsel %vm430, %v933, 0
    %v938 = vsel %vm430, %v935, 0
    %940 = vmatprep.subr.mxu0 0.0
    %941 = vmatpush1.xpose.msra.mxu0 %v938
    %942 = vmatprep.subr.mxu0 0.0
    %943 = vmatpush1.xpose.msra.mxu0 0.0
    %944 = vmatprep.subr.mxu0 0.0
    %945 = vmatpush1.xpose.msra.mxu0 0.0
    %946 = vmatprep.subr.mxu0 0.0
    %947 = vmatpush1.xpose.msra.mxu0 0.0
    %948 = vmatprep.subr.mxu0 0.0
    %949 = vmatpush1.xpose.msra.mxu0 0.0
    %950 = vmatprep.subr.mxu0 0.0
    %951 = vmatpush1.xpose.msra.mxu0 0.0
    %952 = vmatprep.subr.mxu0 0.0
    %953 = vmatpush1.xpose.msra.mxu0 0.0
    %954 = vmatprep.subr.mxu0 0.0
    %955 = vmatpush1.xpose.msra.mxu0 0.0
    %956 = vmatprep.subr.mxu0 0.0
    %957 = vmatpush1.xpose.msra.mxu0 0.0
    %958 = vmatprep.subr.mxu0 0.0
    %959 = vmatpush1.xpose.msra.mxu0 0.0
    %960 = vmatprep.subr.mxu0 0.0
    %961 = vmatpush1.xpose.msra.mxu0 0.0
    %962 = vmatprep.subr.mxu0 0.0
    %963 = vmatpush1.xpose.msra.mxu0 0.0
    %964 = vmatprep.subr.mxu0 0.0
    %965 = vmatpush1.xpose.msra.mxu0 0.0
    %966 = vmatprep.subr.mxu0 0.0
    %967 = vmatpush1.xpose.msra.mxu0 0.0
    %968 = vmatprep.subr.mxu0 0.0
    %969 = vmatpush1.xpose.msra.mxu0 0.0
    %970 = vmatprep.subr.mxu0 0.0
    %971 = vmatpush1.xpose.msra.mxu0 0.0
    %972 = vmatprep.subr.mxu0 0.0
    %973 = vmatpush1.xpose.msra.mxu0 0.0
    %974 = vmatprep.subr.mxu0 0.0
    %975 = vmatpush1.xpose.msra.mxu0 0.0
    %976 = vmatprep.subr.mxu0 0.0
    %977 = vmatpush1.xpose.msra.mxu0 0.0
    %978 = vmatprep.subr.mxu0 0.0
    %979 = vmatpush1.xpose.msra.mxu0 0.0
    %980 = vmatprep.subr.mxu0 0.0
    %981 = vmatpush1.xpose.msra.mxu0 0.0
    %982 = vmatprep.subr.mxu0 0.0
    %983 = vmatpush1.xpose.msra.mxu0 0.0
    %984 = vmatprep.subr.mxu0 0.0
    %985 = vmatpush1.xpose.msra.mxu0 0.0
    %986 = vmatprep.subr.mxu0 0.0
    %987 = vmatpush1.xpose.msra.mxu0 0.0
    %988 = vmatprep.subr.mxu0 0.0
    %989 = vmatpush1.xpose.msra.mxu0 0.0
    %990 = vmatprep.subr.mxu0 0.0
    %991 = vmatpush1.xpose.msra.mxu0 0.0
    %992 = vmatprep.subr.mxu0 0.0
    %993 = vmatpush1.xpose.msra.mxu0 0.0
    %994 = vmatprep.subr.mxu0 0.0
    %995 = vmatpush1.xpose.msra.mxu0 0.0
    %996 = vmatprep.subr.mxu0 0.0
    %997 = vmatpush1.xpose.msra.mxu0 0.0
    %998 = vmatprep.subr.mxu0 0.0
    %999 = vmatpush1.xpose.msra.mxu0 0.0
    %1000 = vmatprep.subr.mxu0 0.0
    %1001 = vmatpush1.xpose.msra.mxu0 0.0
    %1002 = vmatprep.subr.mxu0 0.0
    %1003 = vmatpush1.xpose.msra.mxu0 0.0
    %1004 = vmatprep.mubr.f32.mxu0 0.0
    %1005 = vmatmul.mubr.f32.gmra.mrb[0].mxu0 %v936
    %v1006 = vpop.f32.mrb[0].mxu0
    %v1007 = vadd.f32 0.0, %v1006
    %v1008 = vpop.f32.mrb[0].mxu0
    %1009 = vdwg.mxu0
    %v1010 = vmul.f32 %v1007, 0.125
    %v1011 = vadd.f32 %v1010, %v124
    %v1012 = vsel %vm509, %v1011, -inf
    %1013 = vmax.xlane.f32.xlu0 %v1012
    %v1014 = vpop.xlane.xlu0 %1013
    %v1015 = vsub.f32 %v1011, %v1014
    %v1016 = vmul.f32 %v1015, 1.442695
    %v1017 = vpow.pop %v1016
    %v1018 = vsel %vm509, %v1017, 0.0
    %1019 = vadd.xlane.f32.xlu0 %v1018
    %v1020 = vpop.xlane.xlu0 %1019
    %v1021 = vrcp.pop %v1020
    %v1022 = vmul.f32 %v1017, %v1021
    %1024 = vrot.lane.b32.xlu0 %v427, 64
    %v1025 = vpop.permute.xlu0 %1024
    %v1028 = vsel %vm509, %v1022, 0
    %1030 = vmatprep.subr.mxu0 0.0
    %1031 = vmatpush1.msra.mxu0 %v1025
    %1032 = vmatprep.subr.mxu0 0.0
    %1033 = vmatpush1.msra.mxu0 0.0
    %1034 = vmatprep.subr.mxu0 0.0
    %1035 = vmatpush1.msra.mxu0 0.0
    %1036 = vmatprep.subr.mxu0 0.0
    %1037 = vmatpush1.msra.mxu0 0.0
    %1038 = vmatprep.subr.mxu0 0.0
    %1039 = vmatpush1.msra.mxu0 0.0
    %1040 = vmatprep.subr.mxu0 0.0
    %1041 = vmatpush1.msra.mxu0 0.0
    %1042 = vmatprep.subr.mxu0 0.0
    %1043 = vmatpush1.msra.mxu0 0.0
    %1044 = vmatprep.subr.mxu0 0.0
    %1045 = vmatpush1.msra.mxu0 0.0
    %1046 = vmatprep.subr.mxu0 0.0
    %1047 = vmatpush1.msra.mxu0 0.0
    %1048 = vmatprep.subr.mxu0 0.0
    %1049 = vmatpush1.msra.mxu0 0.0
    %1050 = vmatprep.subr.mxu0 0.0
    %1051 = vmatpush1.msra.mxu0 0.0
    %1052 = vmatprep.subr.mxu0 0.0
    %1053 = vmatpush1.msra.mxu0 0.0
    %1054 = vmatprep.subr.mxu0 0.0
    %1055 = vmatpush1.msra.mxu0 0.0
    %1056 = vmatprep.subr.mxu0 0.0
    %1057 = vmatpush1.msra.mxu0 0.0
    %1058 = vmatprep.subr.mxu0 0.0
    %1059 = vmatpush1.msra.mxu0 0.0
    %1060 = vmatprep.subr.mxu0 0.0
    %1061 = vmatpush1.msra.mxu0 0.0
    %1062 = vmatprep.subr.mxu0 0.0
    %1063 = vmatpush1.msra.mxu0 0.0
    %1064 = vmatprep.subr.mxu0 0.0
    %1065 = vmatpush1.msra.mxu0 0.0
    %1066 = vmatprep.subr.mxu0 0.0
    %1067 = vmatpush1.msra.mxu0 0.0
    %1068 = vmatprep.subr.mxu0 0.0
    %1069 = vmatpush1.msra.mxu0 0.0
    %1070 = vmatprep.subr.mxu0 0.0
    %1071 = vmatpush1.msra.mxu0 0.0
    %1072 = vmatprep.subr.mxu0 0.0
    %1073 = vmatpush1.msra.mxu0 0.0
    %1074 = vmatprep.subr.mxu0 0.0
    %1075 = vmatpush1.msra.mxu0 0.0
    %1076 = vmatprep.subr.mxu0 0.0
    %1077 = vmatpush1.msra.mxu0 0.0
    %1078 = vmatprep.subr.mxu0 0.0
    %1079 = vmatpush1.msra.mxu0 0.0
    %1080 = vmatprep.subr.mxu0 0.0
    %1081 = vmatpush1.msra.mxu0 0.0
    %1082 = vmatprep.subr.mxu0 0.0
    %1083 = vmatpush1.msra.mxu0 0.0
    %1084 = vmatprep.subr.mxu0 0.0
    %1085 = vmatpush1.msra.mxu0 0.0
    %1086 = vmatprep.subr.mxu0 0.0
    %1087 = vmatpush1.msra.mxu0 0.0
    %1088 = vmatprep.subr.mxu0 0.0
    %1089 = vmatpush1.msra.mxu0 0.0
    %1090 = vmatprep.subr.mxu0 0.0
    %1091 = vmatpush1.msra.mxu0 0.0
    %1092 = vmatprep.subr.mxu0 0.0
    %1093 = vmatpush1.msra.mxu0 0.0
    %1094 = vmatprep.mubr.f32.mxu0 0.0
    %1095 = vmatmul.mubr.f32.gmra.mrb[0].mxu0 %v1028
    %v1096 = vpop.f32.mrb[0].mxu0
    %v1097 = vadd.f32 0.0, %v1096
    %v1098 = vpop.f32.mrb[0].mxu0
    %1099 = vdwg.mxu0
    %1101 = vrot.lane.b32.xlu0 %v1097, 64
    %v1102 = vpop.permute.xlu0 %1101
    %1104 = vst.msk [vmem:[#allocation2 + $0x8] sm:$0xff] %vm767, %v1102
    %v1105 = vld [vmem:[#allocation2] sm:$0xff]
    %v1106 = vld [vmem:[#allocation2 + $0x8] sm:$0xff]
    %v1107 = vld [vmem:[%s6] sm:$0xf]
    %v1108 = vld [vmem:[%s6 + $0x4] sm:$0xf]
    %v1109 = vld [vmem:[%s6 + $0x8] sm:$0xf]
    %v1110 = vld [vmem:[%s6 + $0xc] sm:$0xf]
    %v1111 = vld [vmem:[%s6 + $0x10] sm:$0xf]
    %v1112 = vld [vmem:[%s6 + $0x14] sm:$0xf]
    %v1113 = vld [vmem:[%s6 + $0x18] sm:$0xf]
    %v1114 = vld [vmem:[%s6 + $0x1c] sm:$0xf]
    %v1115 = vld [vmem:[%s6 + $0x20] sm:$0xf]
    %v1116 = vld [vmem:[%s6 + $0x24] sm:$0xf]
    %v1117 = vld [vmem:[%s6 + $0x28] sm:$0xf]
    %v1118 = vld [vmem:[%s6 + $0x2c] sm:$0xf]
    %v1119 = vld [vmem:[%s6 + $0x30] sm:$0xf]
    %v1120 = vld [vmem:[%s6 + $0x34] sm:$0xf]
    %v1121 = vld [vmem:[%s6 + $0x38] sm:$0xf]
    %v1122 = vld [vmem:[%s6 + $0x3c] sm:$0xf]
    %v1123 = vld [vmem:[%s7] sm:$0x1]
    %v1124 = vpack.c.bf16 %v1106, %v1105
    %v1126 = vlaneseq
    %v1127 = vshrl.u32 %v1126, 7
    %v1128 = vsub.s32 0, %v1127
    %v1129 = vrot.slane %v1123, %v1128
    %v1147 = vunpack.c.l.b16 %v1107
    %v1148 = vunpack.c.l.b16 %v1108
    %v1149 = vunpack.c.l.b16 %v1109
    %v1150 = vunpack.c.l.b16 %v1110
    %v1151 = vunpack.c.l.b16 %v1111
    %v1152 = vunpack.c.l.b16 %v1112
    %v1153 = vunpack.c.l.b16 %v1113
    %v1154 = vunpack.c.l.b16 %v1114
    %v1155 = vunpack.c.l.b16 %v1115
    %v1156 = vunpack.c.l.b16 %v1116
    %v1157 = vunpack.c.l.b16 %v1117
    %v1158 = vunpack.c.l.b16 %v1118
    %v1159 = vunpack.c.l.b16 %v1119
    %v1160 = vunpack.c.l.b16 %v1120
    %v1161 = vunpack.c.l.b16 %v1121
    %v1162 = vunpack.c.l.b16 %v1122
    %v1163 = vpack.c.b16 %v1148, %v1147
    %v1164 = vpack.c.b16 %v1150, %v1149
    %v1165 = vpack.c.b16 %v1152, %v1151
    %v1166 = vpack.c.b16 %v1154, %v1153
    %v1167 = vpack.c.b16 %v1156, %v1155
    %v1168 = vpack.c.b16 %v1158, %v1157
    %v1169 = vpack.c.b16 %v1160, %v1159
    %v1170 = vpack.c.b16 %v1162, %v1161
    %1179 = vmatprep.subr.bf16.mxu0 0
    %1180 = vmatpush1.bf16.msra.mxu0 %v1163
    %1181 = vmatprep.subr.bf16.mxu0 0
    %1182 = vmatpush1.bf16.msra.mxu0 %v1164
    %1183 = vmatprep.subr.bf16.mxu0 0
    %1184 = vmatpush1.bf16.msra.mxu0 %v1165
    %1185 = vmatprep.subr.bf16.mxu0 0
    %1186 = vmatpush1.bf16.msra.mxu0 %v1166
    %1187 = vmatprep.subr.bf16.mxu0 0
    %1188 = vmatpush1.bf16.msra.mxu0 %v1167
    %1189 = vmatprep.subr.bf16.mxu0 0
    %1190 = vmatpush1.bf16.msra.mxu0 %v1168
    %1191 = vmatprep.subr.bf16.mxu0 0
    %1192 = vmatpush1.bf16.msra.mxu0 %v1169
    %1193 = vmatprep.subr.bf16.mxu0 0
    %1194 = vmatpush1.bf16.msra.mxu0 %v1170
    %1195 = vmatprep.subr.bf16.mxu0 0
    %1196 = vmatpush1.bf16.msra.mxu0 0
    %1197 = vmatprep.subr.bf16.mxu0 0
    %1198 = vmatpush1.bf16.msra.mxu0 0
    %1199 = vmatprep.subr.bf16.mxu0 0
    %1200 = vmatpush1.bf16.msra.mxu0 0
    %1201 = vmatprep.subr.bf16.mxu0 0
    %1202 = vmatpush1.bf16.msra.mxu0 0
    %1203 = vmatprep.subr.bf16.mxu0 0
    %1204 = vmatpush1.bf16.msra.mxu0 0
    %1205 = vmatprep.subr.bf16.mxu0 0
    %1206 = vmatpush1.bf16.msra.mxu0 0
    %1207 = vmatprep.subr.bf16.mxu0 0
    %1208 = vmatpush1.bf16.msra.mxu0 0
    %1209 = vmatprep.subr.bf16.mxu0 0
    %1210 = vmatpush1.bf16.msra.mxu0 0
    %1211 = vmatprep.mubr.bf16.mxu0 0
    %1212 = vmatmul.mubr.bf16.gmra.mrb[0].mxu0 %v1124
    %v1213 = vpop.f32.mrb[0].mxu0
    %v1214 = vadd.f32 %v1129, %v1213
    %v1215 = vpop.f32.mrb[0].mxu0
    %v1216 = vpop.f32.mrb[0].mxu0
    %v1217 = vadd.f32 %v1129, %v1216
    %v1218 = vpop.f32.mrb[0].mxu0
    %1219 = vdwg.mxu0
    %v1220 = vadd.f32 %v166, %v1214
    %v1221 = vadd.f32 %v167, %v1217
    %v1222 = vld [vmem:[%s8] sm:$0x1]
    %v1223 = vld [vmem:[%s9] sm:$0x1]
    %1224 = vadd.xlane.f32.xlu0 %v1220
    %v1225 = vpop.xlane.xlu0 %1224
    %1226 = vadd.xlane.f32.xlu0 %v1221
    %v1227 = vpop.xlane.xlu0 %1226
    %v1228 = vmul.f32 %v1225, %v133
    %v1229 = vmul.f32 %v1227, %v133
    %v1230 = vsub.f32 %v1220, %v1228
    %v1231 = vsub.f32 %v1221, %v1229
    %v1232 = vmul.f32 %v1230, %v1230
    %v1233 = vmul.f32 %v1231, %v1231
    %1234 = vadd.xlane.f32.xlu0 %v1232
    %v1235 = vpop.xlane.xlu0 %1234
    %1236 = vadd.xlane.f32.xlu0 %v1233
    %v1237 = vpop.xlane.xlu0 %1236
    %v1238 = vmul.f32 %v1235, %v133
    %v1239 = vmul.f32 %v1237, %v133
    %v1240 = vadd.f32 %v1238, 1e-12
    %v1241 = vadd.f32 %v1239, 1e-12
    %v1242 = vrsqrt.pop %v1240
    %v1243 = vrsqrt.pop %v1241
    %v1244 = vmul.f32 %v1230, %v1242
    %v1245 = vmul.f32 %v1231, %v1243
    %v1247 = vlaneseq
    %v1248 = vshrl.u32 %v1247, 7
    %v1249 = vsub.s32 0, %v1248
    %v1250 = vrot.slane %v1222, %v1249
    %v1252 = vmul.f32 %v1244, %v1250
    %v1253 = vmul.f32 %v1245, %v1250
    %v1255 = vlaneseq
    %v1256 = vshrl.u32 %v1255, 7
    %v1257 = vsub.s32 0, %v1256
    %v1258 = vrot.slane %v1223, %v1257
    %v1260 = vadd.f32 %v1252, %v1258
    %v1261 = vadd.f32 %v1253, %v1258
    %v1262 = vld [vmem:[#allocation8] sm:$0xff]
    %v1263 = vld [vmem:[#allocation8 + $0x8] sm:$0xff]
    %v1264 = vld [vmem:[#allocation8 + $0x10] sm:$0xff]
    %v1265 = vld [vmem:[#allocation8 + $0x18] sm:$0xff]
    %v1266 = vld [vmem:[#allocation8 + $0x20] sm:$0xff]
    %v1267 = vld [vmem:[#allocation8 + $0x28] sm:$0xff]
    %v1268 = vld [vmem:[#allocation8 + $0x30] sm:$0xff]
    %v1269 = vld [vmem:[#allocation8 + $0x38] sm:$0xff]
    %v1270 = vld [vmem:[#allocation8 + $0x40] sm:$0xff]
    %v1271 = vld [vmem:[#allocation8 + $0x48] sm:$0xff]
    %v1272 = vld [vmem:[#allocation8 + $0x50] sm:$0xff]
    %v1273 = vld [vmem:[#allocation8 + $0x58] sm:$0xff]
    %v1274 = vld [vmem:[#allocation8 + $0x60] sm:$0xff]
    %v1275 = vld [vmem:[#allocation8 + $0x68] sm:$0xff]
    %v1276 = vld [vmem:[#allocation8 + $0x70] sm:$0xff]
    %v1277 = vld [vmem:[#allocation8 + $0x78] sm:$0xff]
    %v1278 = vld [vmem:[#allocation8 + $0x80] sm:$0xff]
    %v1279 = vld [vmem:[#allocation8 + $0x88] sm:$0xff]
    %v1280 = vld [vmem:[#allocation8 + $0x90] sm:$0xff]
    %v1281 = vld [vmem:[#allocation8 + $0x98] sm:$0xff]
    %v1282 = vld [vmem:[#allocation8 + $0xa0] sm:$0xff]
    %v1283 = vld [vmem:[#allocation8 + $0xa8] sm:$0xff]
    %v1284 = vld [vmem:[#allocation8 + $0xb0] sm:$0xff]
    %v1285 = vld [vmem:[#allocation8 + $0xb8] sm:$0xff]
    %v1286 = vld [vmem:[#allocation8 + $0xc0] sm:$0xff]
    %v1287 = vld [vmem:[#allocation8 + $0xc8] sm:$0xff]
    %v1288 = vld [vmem:[#allocation8 + $0xd0] sm:$0xff]
    %v1289 = vld [vmem:[#allocation8 + $0xd8] sm:$0xff]
    %v1290 = vld [vmem:[#allocation8 + $0xe0] sm:$0xff]
    %v1291 = vld [vmem:[#allocation8 + $0xe8] sm:$0xff]
    %v1292 = vld [vmem:[#allocation8 + $0xf0] sm:$0xff]
    %v1293 = vld [vmem:[#allocation8 + $0xf8] sm:$0xff]
    %v1294 = vld [vmem:[%s11] sm:$0xf]
    %v1295 = vpack.c.bf16 %v1261, %v1260
    %v1297 = vlaneseq
    %v1298 = vshrl.u32 %v1297, 7
    %v1299 = vsub.s32 0, %v1298
    %v1300 = vrot.slane %v1294, %v1299
    %v1301 = vlaneseq
    %v1302 = vshrl.u32 %v1301, 7
    %v1303 = vsub.s32 1, %v1302
    %v1304 = vrot.slane %v1294, %v1303
    %v1305 = vlaneseq
    %v1306 = vshrl.u32 %v1305, 7
    %v1307 = vsub.s32 2, %v1306
    %v1308 = vrot.slane %v1294, %v1307
    %v1309 = vlaneseq
    %v1310 = vshrl.u32 %v1309, 7
    %v1311 = vsub.s32 3, %v1310
    %v1312 = vrot.slane %v1294, %v1311
    %v1349 = vunpack.c.l.b16 %v1262
    %v1350 = vunpack.c.h.b16 %v1262
    %v1351 = vunpack.c.l.b16 %v1263
    %v1352 = vunpack.c.h.b16 %v1263
    %v1353 = vunpack.c.l.b16 %v1264
    %v1354 = vunpack.c.h.b16 %v1264
    %v1355 = vunpack.c.l.b16 %v1265
    %v1356 = vunpack.c.h.b16 %v1265
    %v1357 = vunpack.c.l.b16 %v1266
    %v1358 = vunpack.c.h.b16 %v1266
    %v1359 = vunpack.c.l.b16 %v1267
    %v1360 = vunpack.c.h.b16 %v1267
    %v1361 = vunpack.c.l.b16 %v1268
    %v1362 = vunpack.c.h.b16 %v1268
    %v1363 = vunpack.c.l.b16 %v1269
    %v1364 = vunpack.c.h.b16 %v1269
    %v1365 = vunpack.c.l.b16 %v1270
    %v1366 = vunpack.c.h.b16 %v1270
    %v1367 = vunpack.c.l.b16 %v1271
    %v1368 = vunpack.c.h.b16 %v1271
    %v1369 = vunpack.c.l.b16 %v1272
    %v1370 = vunpack.c.h.b16 %v1272
    %v1371 = vunpack.c.l.b16 %v1273
    %v1372 = vunpack.c.h.b16 %v1273
    %v1373 = vunpack.c.l.b16 %v1274
    %v1374 = vunpack.c.h.b16 %v1274
    %v1375 = vunpack.c.l.b16 %v1275
    %v1376 = vunpack.c.h.b16 %v1275
    %v1377 = vunpack.c.l.b16 %v1276
    %v1378 = vunpack.c.h.b16 %v1276
    %v1379 = vunpack.c.l.b16 %v1277
    %v1380 = vunpack.c.h.b16 %v1277
    %v1381 = vunpack.c.l.b16 %v1278
    %v1382 = vunpack.c.h.b16 %v1278
    %v1383 = vunpack.c.l.b16 %v1279
    %v1384 = vunpack.c.h.b16 %v1279
    %v1385 = vunpack.c.l.b16 %v1280
    %v1386 = vunpack.c.h.b16 %v1280
    %v1387 = vunpack.c.l.b16 %v1281
    %v1388 = vunpack.c.h.b16 %v1281
    %v1389 = vunpack.c.l.b16 %v1282
    %v1390 = vunpack.c.h.b16 %v1282
    %v1391 = vunpack.c.l.b16 %v1283
    %v1392 = vunpack.c.h.b16 %v1283
    %v1393 = vunpack.c.l.b16 %v1284
    %v1394 = vunpack.c.h.b16 %v1284
    %v1395 = vunpack.c.l.b16 %v1285
    %v1396 = vunpack.c.h.b16 %v1285
    %v1397 = vunpack.c.l.b16 %v1286
    %v1398 = vunpack.c.h.b16 %v1286
    %v1399 = vunpack.c.l.b16 %v1287
    %v1400 = vunpack.c.h.b16 %v1287
    %v1401 = vunpack.c.l.b16 %v1288
    %v1402 = vunpack.c.h.b16 %v1288
    %v1403 = vunpack.c.l.b16 %v1289
    %v1404 = vunpack.c.h.b16 %v1289
    %v1405 = vunpack.c.l.b16 %v1290
    %v1406 = vunpack.c.h.b16 %v1290
    %v1407 = vunpack.c.l.b16 %v1291
    %v1408 = vunpack.c.h.b16 %v1291
    %v1409 = vunpack.c.l.b16 %v1292
    %v1410 = vunpack.c.h.b16 %v1292
    %v1411 = vunpack.c.l.b16 %v1293
    %v1412 = vunpack.c.h.b16 %v1293
    %v1413 = vpack.c.b16 %v1353, %v1349
    %v1414 = vpack.c.b16 %v1354, %v1350
    %v1415 = vpack.c.b16 %v1355, %v1351
    %v1416 = vpack.c.b16 %v1356, %v1352
    %v1417 = vpack.c.b16 %v1361, %v1357
    %v1418 = vpack.c.b16 %v1362, %v1358
    %v1419 = vpack.c.b16 %v1363, %v1359
    %v1420 = vpack.c.b16 %v1364, %v1360
    %v1421 = vpack.c.b16 %v1369, %v1365
    %v1422 = vpack.c.b16 %v1370, %v1366
    %v1423 = vpack.c.b16 %v1371, %v1367
    %v1424 = vpack.c.b16 %v1372, %v1368
    %v1425 = vpack.c.b16 %v1377, %v1373
    %v1426 = vpack.c.b16 %v1378, %v1374
    %v1427 = vpack.c.b16 %v1379, %v1375
    %v1428 = vpack.c.b16 %v1380, %v1376
    %v1429 = vpack.c.b16 %v1385, %v1381
    %v1430 = vpack.c.b16 %v1386, %v1382
    %v1431 = vpack.c.b16 %v1387, %v1383
    %v1432 = vpack.c.b16 %v1388, %v1384
    %v1433 = vpack.c.b16 %v1393, %v1389
    %v1434 = vpack.c.b16 %v1394, %v1390
    %v1435 = vpack.c.b16 %v1395, %v1391
    %v1436 = vpack.c.b16 %v1396, %v1392
    %v1437 = vpack.c.b16 %v1401, %v1397
    %v1438 = vpack.c.b16 %v1402, %v1398
    %v1439 = vpack.c.b16 %v1403, %v1399
    %v1440 = vpack.c.b16 %v1404, %v1400
    %v1441 = vpack.c.b16 %v1409, %v1405
    %v1442 = vpack.c.b16 %v1410, %v1406
    %v1443 = vpack.c.b16 %v1411, %v1407
    %v1444 = vpack.c.b16 %v1412, %v1408
    %1477 = vmatprep.subr.bf16.mxu0 %v1414
    %1478 = vmatpush1.bf16.msra.mxu0 %v1413
    %1479 = vmatprep.subr.bf16.mxu0 %v1418
    %1480 = vmatpush1.bf16.msra.mxu0 %v1417
    %1481 = vmatprep.subr.bf16.mxu0 %v1422
    %1482 = vmatpush1.bf16.msra.mxu0 %v1421
    %1483 = vmatprep.subr.bf16.mxu0 %v1426
    %1484 = vmatpush1.bf16.msra.mxu0 %v1425
    %1485 = vmatprep.subr.bf16.mxu0 %v1430
    %1486 = vmatpush1.bf16.msra.mxu0 %v1429
    %1487 = vmatprep.subr.bf16.mxu0 %v1434
    %1488 = vmatpush1.bf16.msra.mxu0 %v1433
    %1489 = vmatprep.subr.bf16.mxu0 %v1438
    %1490 = vmatpush1.bf16.msra.mxu0 %v1437
    %1491 = vmatprep.subr.bf16.mxu0 %v1442
    %1492 = vmatpush1.bf16.msra.mxu0 %v1441
    %1493 = vmatprep.subr.bf16.mxu0 0
    %1494 = vmatpush1.bf16.msra.mxu0 0
    %1495 = vmatprep.subr.bf16.mxu0 0
    %1496 = vmatpush1.bf16.msra.mxu0 0
    %1497 = vmatprep.subr.bf16.mxu0 0
    %1498 = vmatpush1.bf16.msra.mxu0 0
    %1499 = vmatprep.subr.bf16.mxu0 0
    %1500 = vmatpush1.bf16.msra.mxu0 0
    %1501 = vmatprep.subr.bf16.mxu0 0
    %1502 = vmatpush1.bf16.msra.mxu0 0
    %1503 = vmatprep.subr.bf16.mxu0 0
    %1504 = vmatpush1.bf16.msra.mxu0 0
    %1505 = vmatprep.subr.bf16.mxu0 0
    %1506 = vmatpush1.bf16.msra.mxu0 0
    %1507 = vmatprep.subr.bf16.mxu0 0
    %1508 = vmatpush1.bf16.msra.mxu0 0
    %1509 = vmatprep.mubr.bf16.mxu0 0
    %1510 = vmatmul.mubr.bf16.gmra.mrb[0].mxu0 %v1295
    %v1511 = vpop.f32.mrb[0].mxu0
    %v1512 = vadd.f32 %v1300, %v1511
    %v1513 = vpop.f32.mrb[0].mxu0
    %v1514 = vadd.f32 %v1304, %v1513
    %v1515 = vpop.f32.mrb[0].mxu0
    %v1516 = vadd.f32 %v1300, %v1515
    %v1517 = vpop.f32.mrb[0].mxu0
    %v1518 = vadd.f32 %v1304, %v1517
    %1519 = vdwg.mxu0
    %1520 = vmatprep.subr.bf16.mxu0 %v1416
    %1521 = vmatpush1.bf16.msra.mxu0 %v1415
    %1522 = vmatprep.subr.bf16.mxu0 %v1420
    %1523 = vmatpush1.bf16.msra.mxu0 %v1419
    %1524 = vmatprep.subr.bf16.mxu0 %v1424
    %1525 = vmatpush1.bf16.msra.mxu0 %v1423
    %1526 = vmatprep.subr.bf16.mxu0 %v1428
    %1527 = vmatpush1.bf16.msra.mxu0 %v1427
    %1528 = vmatprep.subr.bf16.mxu0 %v1432
    %1529 = vmatpush1.bf16.msra.mxu0 %v1431
    %1530 = vmatprep.subr.bf16.mxu0 %v1436
    %1531 = vmatpush1.bf16.msra.mxu0 %v1435
    %1532 = vmatprep.subr.bf16.mxu0 %v1440
    %1533 = vmatpush1.bf16.msra.mxu0 %v1439
    %1534 = vmatprep.subr.bf16.mxu0 %v1444
    %1535 = vmatpush1.bf16.msra.mxu0 %v1443
    %1536 = vmatprep.subr.bf16.mxu0 0
    %1537 = vmatpush1.bf16.msra.mxu0 0
    %1538 = vmatprep.subr.bf16.mxu0 0
    %1539 = vmatpush1.bf16.msra.mxu0 0
    %1540 = vmatprep.subr.bf16.mxu0 0
    %1541 = vmatpush1.bf16.msra.mxu0 0
    %1542 = vmatprep.subr.bf16.mxu0 0
    %1543 = vmatpush1.bf16.msra.mxu0 0
    %1544 = vmatprep.subr.bf16.mxu0 0
    %1545 = vmatpush1.bf16.msra.mxu0 0
    %1546 = vmatprep.subr.bf16.mxu0 0
    %1547 = vmatpush1.bf16.msra.mxu0 0
    %1548 = vmatprep.subr.bf16.mxu0 0
    %1549 = vmatpush1.bf16.msra.mxu0 0
    %1550 = vmatprep.subr.bf16.mxu0 0
    %1551 = vmatpush1.bf16.msra.mxu0 0
    %1552 = vmatprep.mubr.bf16.mxu0 0
    %1553 = vmatmul.mubr.bf16.gmra.mrb[0].mxu0 %v1295
    %v1554 = vpop.f32.mrb[0].mxu0
    %v1555 = vadd.f32 %v1308, %v1554
    %v1556 = vpop.f32.mrb[0].mxu0
    %v1557 = vadd.f32 %v1312, %v1556
    %v1558 = vpop.f32.mrb[0].mxu0
    %v1559 = vadd.f32 %v1308, %v1558
    %v1560 = vpop.f32.mrb[0].mxu0
    %v1561 = vadd.f32 %v1312, %v1560
    %1562 = vdwg.mxu0
    %v1563 = vmul.f32 %v1512, 0.5
    %v1564 = vmul.f32 %v1514, 0.5
    %v1565 = vmul.f32 %v1555, 0.5
    %v1566 = vmul.f32 %v1557, 0.5
    %v1567 = vmul.f32 %v1516, 0.5
    %v1568 = vmul.f32 %v1518, 0.5
    %v1569 = vmul.f32 %v1559, 0.5
    %v1570 = vmul.f32 %v1561, 0.5
    %v1571 = vmul.f32 %v1512, 0.044715
    %v1572 = vmul.f32 %v1514, 0.044715
    %v1573 = vmul.f32 %v1555, 0.044715
    %v1574 = vmul.f32 %v1557, 0.044715
    %v1575 = vmul.f32 %v1516, 0.044715
    %v1576 = vmul.f32 %v1518, 0.044715
    %v1577 = vmul.f32 %v1559, 0.044715
    %v1578 = vmul.f32 %v1561, 0.044715
    %v1579 = vmul.f32 %v1571, %v1512
    %v1580 = vmul.f32 %v1572, %v1514
    %v1581 = vmul.f32 %v1573, %v1555
    %v1582 = vmul.f32 %v1574, %v1557
    %v1583 = vmul.f32 %v1575, %v1516
    %v1584 = vmul.f32 %v1576, %v1518
    %v1585 = vmul.f32 %v1577, %v1559
    %v1586 = vmul.f32 %v1578, %v1561
    %v1587 = vmul.f32 %v1579, %v1512
    %v1588 = vmul.f32 %v1580, %v1514
    %v1589 = vmul.f32 %v1581, %v1555
    %v1590 = vmul.f32 %v1582, %v1557
    %v1591 = vmul.f32 %v1583, %v1516
    %v1592 = vmul.f32 %v1584, %v1518
    %v1593 = vmul.f32 %v1585, %v1559
    %v1594 = vmul.f32 %v1586, %v1561
    %v1595 = vadd.f32 %v1512, %v1587
    %v1596 = vadd.f32 %v1514, %v1588
    %v1597 = vadd.f32 %v1555, %v1589
    %v1598 = vadd.f32 %v1557, %v1590
    %v1599 = vadd.f32 %v1516, %v1591
    %v1600 = vadd.f32 %v1518, %v1592
    %v1601 = vadd.f32 %v1559, %v1593
    %v1602 = vadd.f32 %v1561, %v1594
    %v1603 = vmul.f32 %v1595, 0.7978846
    %v1604 = vmul.f32 %v1596, 0.7978846
    %v1605 = vmul.f32 %v1597, 0.7978846
    %v1606 = vmul.f32 %v1598, 0.7978846
    %v1607 = vmul.f32 %v1599, 0.7978846
    %v1608 = vmul.f32 %v1600, 0.7978846
    %v1609 = vmul.f32 %v1601, 0.7978846
    %v1610 = vmul.f32 %v1602, 0.7978846
    %v1611 = vtanh.pop %v1603
    %v1612 = vtanh.pop %v1604
    %v1613 = vtanh.pop %v1605
    %v1614 = vtanh.pop %v1606
    %v1615 = vtanh.pop %v1607
    %v1616 = vtanh.pop %v1608
    %v1617 = vtanh.pop %v1609
    %v1618 = vtanh.pop %v1610
    %v1619 = vadd.f32 %v1611, 1.0
    %v1620 = vadd.f32 %v1612, 1.0
    %v1621 = vadd.f32 %v1613, 1.0
    %v1622 = vadd.f32 %v1614, 1.0
    %v1623 = vadd.f32 %v1615, 1.0
    %v1624 = vadd.f32 %v1616, 1.0
    %v1625 = vadd.f32 %v1617, 1.0
    %v1626 = vadd.f32 %v1618, 1.0
    %v1627 = vmul.f32 %v1563, %v1619
    %v1628 = vmul.f32 %v1564, %v1620
    %v1629 = vmul.f32 %v1565, %v1621
    %v1630 = vmul.f32 %v1566, %v1622
    %v1631 = vmul.f32 %v1567, %v1623
    %v1632 = vmul.f32 %v1568, %v1624
    %v1633 = vmul.f32 %v1569, %v1625
    %v1634 = vmul.f32 %v1570, %v1626
    %v1635 = vld [vmem:[#allocation10] sm:$0xf]
    %v1636 = vld [vmem:[#allocation10 + $0x4] sm:$0xf]
    %v1637 = vld [vmem:[#allocation10 + $0x8] sm:$0xf]
    %v1638 = vld [vmem:[#allocation10 + $0xc] sm:$0xf]
    %v1639 = vld [vmem:[#allocation10 + $0x10] sm:$0xf]
    %v1640 = vld [vmem:[#allocation10 + $0x14] sm:$0xf]
    %v1641 = vld [vmem:[#allocation10 + $0x18] sm:$0xf]
    %v1642 = vld [vmem:[#allocation10 + $0x1c] sm:$0xf]
    %v1643 = vld [vmem:[#allocation10 + $0x20] sm:$0xf]
    %v1644 = vld [vmem:[#allocation10 + $0x24] sm:$0xf]
    %v1645 = vld [vmem:[#allocation10 + $0x28] sm:$0xf]
    %v1646 = vld [vmem:[#allocation10 + $0x2c] sm:$0xf]
    %v1647 = vld [vmem:[#allocation10 + $0x30] sm:$0xf]
    %v1648 = vld [vmem:[#allocation10 + $0x34] sm:$0xf]
    %v1649 = vld [vmem:[#allocation10 + $0x38] sm:$0xf]
    %v1650 = vld [vmem:[#allocation10 + $0x3c] sm:$0xf]
    %v1651 = vld [vmem:[#allocation10 + $0x40] sm:$0xf]
    %v1652 = vld [vmem:[#allocation10 + $0x44] sm:$0xf]
    %v1653 = vld [vmem:[#allocation10 + $0x48] sm:$0xf]
    %v1654 = vld [vmem:[#allocation10 + $0x4c] sm:$0xf]
    %v1655 = vld [vmem:[#allocation10 + $0x50] sm:$0xf]
    %v1656 = vld [vmem:[#allocation10 + $0x54] sm:$0xf]
    %v1657 = vld [vmem:[#allocation10 + $0x58] sm:$0xf]
    %v1658 = vld [vmem:[#allocation10 + $0x5c] sm:$0xf]
    %v1659 = vld [vmem:[#allocation10 + $0x60] sm:$0xf]
    %v1660 = vld [vmem:[#allocation10 + $0x64] sm:$0xf]
    %v1661 = vld [vmem:[#allocation10 + $0x68] sm:$0xf]
    %v1662 = vld [vmem:[#allocation10 + $0x6c] sm:$0xf]
    %v1663 = vld [vmem:[#allocation10 + $0x70] sm:$0xf]
    %v1664 = vld [vmem:[#allocation10 + $0x74] sm:$0xf]
    %v1665 = vld [vmem:[#allocation10 + $0x78] sm:$0xf]
    %v1666 = vld [vmem:[#allocation10 + $0x7c] sm:$0xf]
    %v1667 = vld [vmem:[#allocation10 + $0x80] sm:$0xf]
    %v1668 = vld [vmem:[#allocation10 + $0x84] sm:$0xf]
    %v1669 = vld [vmem:[#allocation10 + $0x88] sm:$0xf]
    %v1670 = vld [vmem:[#allocation10 + $0x8c] sm:$0xf]
    %v1671 = vld [vmem:[#allocation10 + $0x90] sm:$0xf]
    %v1672 = vld [vmem:[#allocation10 + $0x94] sm:$0xf]
    %v1673 = vld [vmem:[#allocation10 + $0x98] sm:$0xf]
    %v1674 = vld [vmem:[#allocation10 + $0x9c] sm:$0xf]
    %v1675 = vld [vmem:[#allocation10 + $0xa0] sm:$0xf]
    %v1676 = vld [vmem:[#allocation10 + $0xa4] sm:$0xf]
    %v1677 = vld [vmem:[#allocation10 + $0xa8] sm:$0xf]
    %v1678 = vld [vmem:[#allocation10 + $0xac] sm:$0xf]
    %v1679 = vld [vmem:[#allocation10 + $0xb0] sm:$0xf]
    %v1680 = vld [vmem:[#allocation10 + $0xb4] sm:$0xf]
    %v1681 = vld [vmem:[#allocation10 + $0xb8] sm:$0xf]
    %v1682 = vld [vmem:[#allocation10 + $0xbc] sm:$0xf]
    %v1683 = vld [vmem:[#allocation10 + $0xc0] sm:$0xf]
    %v1684 = vld [vmem:[#allocation10 + $0xc4] sm:$0xf]
    %v1685 = vld [vmem:[#allocation10 + $0xc8] sm:$0xf]
    %v1686 = vld [vmem:[#allocation10 + $0xcc] sm:$0xf]
    %v1687 = vld [vmem:[#allocation10 + $0xd0] sm:$0xf]
    %v1688 = vld [vmem:[#allocation10 + $0xd4] sm:$0xf]
    %v1689 = vld [vmem:[#allocation10 + $0xd8] sm:$0xf]
    %v1690 = vld [vmem:[#allocation10 + $0xdc] sm:$0xf]
    %v1691 = vld [vmem:[#allocation10 + $0xe0] sm:$0xf]
    %v1692 = vld [vmem:[#allocation10 + $0xe4] sm:$0xf]
    %v1693 = vld [vmem:[#allocation10 + $0xe8] sm:$0xf]
    %v1694 = vld [vmem:[#allocation10 + $0xec] sm:$0xf]
    %v1695 = vld [vmem:[#allocation10 + $0xf0] sm:$0xf]
    %v1696 = vld [vmem:[#allocation10 + $0xf4] sm:$0xf]
    %v1697 = vld [vmem:[#allocation10 + $0xf8] sm:$0xf]
    %v1698 = vld [vmem:[#allocation10 + $0xfc] sm:$0xf]
    %v1699 = vld [vmem:[%s13] sm:$0x1]
    %v1700 = vpack.c.bf16 %v1631, %v1627
    %v1701 = vpack.c.bf16 %v1632, %v1628
    %v1702 = vpack.c.bf16 %v1633, %v1629
    %v1703 = vpack.c.bf16 %v1634, %v1630
    %v1705 = vlaneseq
    %v1706 = vshrl.u32 %v1705, 7
    %v1707 = vsub.s32 0, %v1706
    %v1708 = vrot.slane %v1699, %v1707
    %v1774 = vunpack.c.l.b16 %v1635
    %v1775 = vunpack.c.l.b16 %v1636
    %v1776 = vunpack.c.l.b16 %v1637
    %v1777 = vunpack.c.l.b16 %v1638
    %v1778 = vunpack.c.l.b16 %v1639
    %v1779 = vunpack.c.l.b16 %v1640
    %v1780 = vunpack.c.l.b16 %v1641
    %v1781 = vunpack.c.l.b16 %v1642
    %v1782 = vunpack.c.l.b16 %v1643
    %v1783 = vunpack.c.l.b16 %v1644
    %v1784 = vunpack.c.l.b16 %v1645
    %v1785 = vunpack.c.l.b16 %v1646
    %v1786 = vunpack.c.l.b16 %v1647
    %v1787 = vunpack.c.l.b16 %v1648
    %v1788 = vunpack.c.l.b16 %v1649
    %v1789 = vunpack.c.l.b16 %v1650
    %v1790 = vunpack.c.l.b16 %v1651
    %v1791 = vunpack.c.l.b16 %v1652
    %v1792 = vunpack.c.l.b16 %v1653
    %v1793 = vunpack.c.l.b16 %v1654
    %v1794 = vunpack.c.l.b16 %v1655
    %v1795 = vunpack.c.l.b16 %v1656
    %v1796 = vunpack.c.l.b16 %v1657
    %v1797 = vunpack.c.l.b16 %v1658
    %v1798 = vunpack.c.l.b16 %v1659
    %v1799 = vunpack.c.l.b16 %v1660
    %v1800 = vunpack.c.l.b16 %v1661
    %v1801 = vunpack.c.l.b16 %v1662
    %v1802 = vunpack.c.l.b16 %v1663
    %v1803 = vunpack.c.l.b16 %v1664
    %v1804 = vunpack.c.l.b16 %v1665
    %v1805 = vunpack.c.l.b16 %v1666
    %v1806 = vunpack.c.l.b16 %v1667
    %v1807 = vunpack.c.l.b16 %v1668
    %v1808 = vunpack.c.l.b16 %v1669
    %v1809 = vunpack.c.l.b16 %v1670
    %v1810 = vunpack.c.l.b16 %v1671
    %v1811 = vunpack.c.l.b16 %v1672
    %v1812 = vunpack.c.l.b16 %v1673
    %v1813 = vunpack.c.l.b16 %v1674
    %v1814 = vunpack.c.l.b16 %v1675
    %v1815 = vunpack.c.l.b16 %v1676
    %v1816 = vunpack.c.l.b16 %v1677
    %v1817 = vunpack.c.l.b16 %v1678
    %v1818 = vunpack.c.l.b16 %v1679
    %v1819 = vunpack.c.l.b16 %v1680
    %v1820 = vunpack.c.l.b16 %v1681
    %v1821 = vunpack.c.l.b16 %v1682
    %v1822 = vunpack.c.l.b16 %v1683
    %v1823 = vunpack.c.l.b16 %v1684
    %v1824 = vunpack.c.l.b16 %v1685
    %v1825 = vunpack.c.l.b16 %v1686
    %v1826 = vunpack.c.l.b16 %v1687
    %v1827 = vunpack.c.l.b16 %v1688
    %v1828 = vunpack.c.l.b16 %v1689
    %v1829 = vunpack.c.l.b16 %v1690
    %v1830 = vunpack.c.l.b16 %v1691
    %v1831 = vunpack.c.l.b16 %v1692
    %v1832 = vunpack.c.l.b16 %v1693
    %v1833 = vunpack.c.l.b16 %v1694
    %v1834 = vunpack.c.l.b16 %v1695
    %v1835 = vunpack.c.l.b16 %v1696
    %v1836 = vunpack.c.l.b16 %v1697
    %v1837 = vunpack.c.l.b16 %v1698
    %v1838 = vpack.c.b16 %v1775, %v1774
    %v1839 = vpack.c.b16 %v1777, %v1776
    %v1840 = vpack.c.b16 %v1779, %v1778
    %v1841 = vpack.c.b16 %v1781, %v1780
    %v1842 = vpack.c.b16 %v1783, %v1782
    %v1843 = vpack.c.b16 %v1785, %v1784
    %v1844 = vpack.c.b16 %v1787, %v1786
    %v1845 = vpack.c.b16 %v1789, %v1788
    %v1846 = vpack.c.b16 %v1791, %v1790
    %v1847 = vpack.c.b16 %v1793, %v1792
    %v1848 = vpack.c.b16 %v1795, %v1794
    %v1849 = vpack.c.b16 %v1797, %v1796
    %v1850 = vpack.c.b16 %v1799, %v1798
    %v1851 = vpack.c.b16 %v1801, %v1800
    %v1852 = vpack.c.b16 %v1803, %v1802
    %v1853 = vpack.c.b16 %v1805, %v1804
    %v1854 = vpack.c.b16 %v1807, %v1806
    %v1855 = vpack.c.b16 %v1809, %v1808
    %v1856 = vpack.c.b16 %v1811, %v1810
    %v1857 = vpack.c.b16 %v1813, %v1812
    %v1858 = vpack.c.b16 %v1815, %v1814
    %v1859 = vpack.c.b16 %v1817, %v1816
    %v1860 = vpack.c.b16 %v1819, %v1818
    %v1861 = vpack.c.b16 %v1821, %v1820
    %v1862 = vpack.c.b16 %v1823, %v1822
    %v1863 = vpack.c.b16 %v1825, %v1824
    %v1864 = vpack.c.b16 %v1827, %v1826
    %v1865 = vpack.c.b16 %v1829, %v1828
    %v1866 = vpack.c.b16 %v1831, %v1830
    %v1867 = vpack.c.b16 %v1833, %v1832
    %v1868 = vpack.c.b16 %v1835, %v1834
    %v1869 = vpack.c.b16 %v1837, %v1836
    %1902 = vmatprep.subr.bf16.mxu0 0
    %1903 = vmatpush1.bf16.msra.mxu0 %v1838
    %1904 = vmatprep.subr.bf16.mxu0 0
    %1905 = vmatpush1.bf16.msra.mxu0 %v1839
    %1906 = vmatprep.subr.bf16.mxu0 0
    %1907 = vmatpush1.bf16.msra.mxu0 %v1840
    %1908 = vmatprep.subr.bf16.mxu0 0
    %1909 = vmatpush1.bf16.msra.mxu0 %v1841
    %1910 = vmatprep.subr.bf16.mxu0 0
    %1911 = vmatpush1.bf16.msra.mxu0 %v1842
    %1912 = vmatprep.subr.bf16.mxu0 0
    %1913 = vmatpush1.bf16.msra.mxu0 %v1843
    %1914 = vmatprep.subr.bf16.mxu0 0
    %1915 = vmatpush1.bf16.msra.mxu0 %v1844
    %1916 = vmatprep.subr.bf16.mxu0 0
    %1917 = vmatpush1.bf16.msra.mxu0 %v1845
    %1918 = vmatprep.subr.bf16.mxu0 0
    %1919 = vmatpush1.bf16.msra.mxu0 %v1846
    %1920 = vmatprep.subr.bf16.mxu0 0
    %1921 = vmatpush1.bf16.msra.mxu0 %v1847
    %1922 = vmatprep.subr.bf16.mxu0 0
    %1923 = vmatpush1.bf16.msra.mxu0 %v1848
    %1924 = vmatprep.subr.bf16.mxu0 0
    %1925 = vmatpush1.bf16.msra.mxu0 %v1849
    %1926 = vmatprep.subr.bf16.mxu0 0
    %1927 = vmatpush1.bf16.msra.mxu0 %v1850
    %1928 = vmatprep.subr.bf16.mxu0 0
    %1929 = vmatpush1.bf16.msra.mxu0 %v1851
    %1930 = vmatprep.subr.bf16.mxu0 0
    %1931 = vmatpush1.bf16.msra.mxu0 %v1852
    %1932 = vmatprep.subr.bf16.mxu0 0
    %1933 = vmatpush1.bf16.msra.mxu0 %v1853
    %1934 = vmatprep.mubr.bf16.mxu0 %v1701
    %1935 = vmatmul.mubr.bf16.gmra.mrb[0].mxu0 %v1700
    %v1936 = vpop.f32.mrb[0].mxu0
    %v1937 = vadd.f32 %v1708, %v1936
    %v1938 = vpop.f32.mrb[0].mxu0
    %v1939 = vpop.f32.mrb[0].mxu0
    %v1940 = vadd.f32 %v1708, %v1939
    %v1941 = vpop.f32.mrb[0].mxu0
    %1942 = vdwg.mxu0
    %1943 = vmatprep.subr.bf16.mxu0 0
    %1944 = vmatpush1.bf16.msra.mxu0 %v1854
    %1945 = vmatprep.subr.bf16.mxu0 0
    %1946 = vmatpush1.bf16.msra.mxu0 %v1855
    %1947 = vmatprep.subr.bf16.mxu0 0
    %1948 = vmatpush1.bf16.msra.mxu0 %v1856
    %1949 = vmatprep.subr.bf16.mxu0 0
    %1950 = vmatpush1.bf16.msra.mxu0 %v1857
    %1951 = vmatprep.subr.bf16.mxu0 0
    %1952 = vmatpush1.bf16.msra.mxu0 %v1858
    %1953 = vmatprep.subr.bf16.mxu0 0
    %1954 = vmatpush1.bf16.msra.mxu0 %v1859
    %1955 = vmatprep.subr.bf16.mxu0 0
    %1956 = vmatpush1.bf16.msra.mxu0 %v1860
    %1957 = vmatprep.subr.bf16.mxu0 0
    %1958 = vmatpush1.bf16.msra.mxu0 %v1861
    %1959 = vmatprep.subr.bf16.mxu0 0
    %1960 = vmatpush1.bf16.msra.mxu0 %v1862
    %1961 = vmatprep.subr.bf16.mxu0 0
    %1962 = vmatpush1.bf16.msra.mxu0 %v1863
    %1963 = vmatprep.subr.bf16.mxu0 0
    %1964 = vmatpush1.bf16.msra.mxu0 %v1864
    %1965 = vmatprep.subr.bf16.mxu0 0
    %1966 = vmatpush1.bf16.msra.mxu0 %v1865
    %1967 = vmatprep.subr.bf16.mxu0 0
    %1968 = vmatpush1.bf16.msra.mxu0 %v1866
    %1969 = vmatprep.subr.bf16.mxu0 0
    %1970 = vmatpush1.bf16.msra.mxu0 %v1867
    %1971 = vmatprep.subr.bf16.mxu0 0
    %1972 = vmatpush1.bf16.msra.mxu0 %v1868
    %1973 = vmatprep.subr.bf16.mxu0 0
    %1974 = vmatpush1.bf16.msra.mxu0 %v1869
    %1975 = vmatprep.mubr.bf16.mxu0 %v1703
    %1976 = vmatmul.mubr.bf16.gmra.mrb[0].mxu0 %v1702
    %v1977 = vpop.f32.mrb[0].mxu0
    %v1978 = vadd.f32 %v1937, %v1977
    %v1979 = vpop.f32.mrb[0].mxu0
    %v1980 = vpop.f32.mrb[0].mxu0
    %v1981 = vadd.f32 %v1940, %v1980
    %v1982 = vpop.f32.mrb[0].mxu0
    %1983 = vdwg.mxu0
    %v1984 = vadd.f32 %v1260, %v1978
    %v1985 = vadd.f32 %v1261, %v1981
    %v1986 = vld [vmem:[%s14] sm:$0x1]
    %v1987 = vld [vmem:[%s15] sm:$0x1]
    %1988 = vadd.xlane.f32.xlu0 %v1984
    %v1989 = vpop.xlane.xlu0 %1988
    %1990 = vadd.xlane.f32.xlu0 %v1985
    %v1991 = vpop.xlane.xlu0 %1990
    %v1992 = vmul.f32 %v1989, %v133
    %v1993 = vmul.f32 %v1991, %v133
    %v1994 = vsub.f32 %v1984, %v1992
    %v1995 = vsub.f32 %v1985, %v1993
    %v1996 = vmul.f32 %v1994, %v1994
    %v1997 = vmul.f32 %v1995, %v1995
    %1998 = vadd.xlane.f32.xlu0 %v1996
    %v1999 = vpop.xlane.xlu0 %1998
    %2000 = vadd.xlane.f32.xlu0 %v1997
    %v2001 = vpop.xlane.xlu0 %2000
    %v2002 = vmul.f32 %v1999, %v133
    %v2003 = vmul.f32 %v2001, %v133
    %v2004 = vadd.f32 %v2002, 1e-12
    %v2005 = vadd.f32 %v2003, 1e-12
    %v2006 = vrsqrt.pop %v2004
    %v2007 = vrsqrt.pop %v2005
    %v2008 = vmul.f32 %v1994, %v2006
    %v2009 = vmul.f32 %v1995, %v2007
    %v2011 = vlaneseq
    %v2012 = vshrl.u32 %v2011, 7
    %v2013 = vsub.s32 0, %v2012
    %v2014 = vrot.slane %v1986, %v2013
    %v2016 = vmul.f32 %v2008, %v2014
    %v2017 = vmul.f32 %v2009, %v2014
    %v2019 = vlaneseq
    %v2020 = vshrl.u32 %v2019, 7
    %v2021 = vsub.s32 0, %v2020
    %v2022 = vrot.slane %v1987, %v2021
    %v2024 = vadd.f32 %v2016, %v2022
    %v2025 = vadd.f32 %v2017, %v2022
    %s2026 = scalar_lea.vmem [#allocation7], 192
    %v2027 = vld [vmem:[%s2026] sm:$0xff]
    %v2028 = vld [vmem:[%s2026 + $0x8] sm:$0xf]
    %v2029 = vld [vmem:[%s2026 + $0xc] sm:$0xff]
    %v2030 = vld [vmem:[%s2026 + $0x14] sm:$0xf]
    %v2031 = vld [vmem:[%s2026 + $0x18] sm:$0xff]
    %v2032 = vld [vmem:[%s2026 + $0x20] sm:$0xf]
    %v2033 = vld [vmem:[%s2026 + $0x24] sm:$0xff]
    %v2034 = vld [vmem:[%s2026 + $0x2c] sm:$0xf]
    %v2035 = vld [vmem:[%s2026 + $0x30] sm:$0xff]
    %v2036 = vld [vmem:[%s2026 + $0x38] sm:$0xf]
    %v2037 = vld [vmem:[%s2026 + $0x3c] sm:$0xff]
    %v2038 = vld [vmem:[%s2026 + $0x44] sm:$0xf]
    %v2039 = vld [vmem:[%s2026 + $0x48] sm:$0xff]
    %v2040 = vld [vmem:[%s2026 + $0x50] sm:$0xf]
    %v2041 = vld [vmem:[%s2026 + $0x54] sm:$0xff]
    %v2042 = vld [vmem:[%s2026 + $0x5c] sm:$0xf]
    %v2043 = vld [vmem:[%s2026 + $0x60] sm:$0xff]
    %v2044 = vld [vmem:[%s2026 + $0x68] sm:$0xf]
    %v2045 = vld [vmem:[%s2026 + $0x6c] sm:$0xff]
    %v2046 = vld [vmem:[%s2026 + $0x74] sm:$0xf]
    %v2047 = vld [vmem:[%s2026 + $0x78] sm:$0xff]
    %v2048 = vld [vmem:[%s2026 + $0x80] sm:$0xf]
    %v2049 = vld [vmem:[%s2026 + $0x84] sm:$0xff]
    %v2050 = vld [vmem:[%s2026 + $0x8c] sm:$0xf]
    %v2051 = vld [vmem:[%s2026 + $0x90] sm:$0xff]
    %v2052 = vld [vmem:[%s2026 + $0x98] sm:$0xf]
    %v2053 = vld [vmem:[%s2026 + $0x9c] sm:$0xff]
    %v2054 = vld [vmem:[%s2026 + $0xa4] sm:$0xf]
    %v2055 = vld [vmem:[%s2026 + $0xa8] sm:$0xff]
    %v2056 = vld [vmem:[%s2026 + $0xb0] sm:$0xf]
    %v2057 = vld [vmem:[%s2026 + $0xb4] sm:$0xff]
    %v2058 = vld [vmem:[%s2026 + $0xbc] sm:$0xf]
    %s2059 = scalar_lea.vmem %s5, 3
    %v2060 = vld [vmem:[%s2059] sm:$0x7]
    %v2061 = vpack.c.bf16 %v2025, %v2024
    %v2063 = vlaneseq
    %v2064 = vshrl.u32 %v2063, 7
    %v2065 = vsub.s32 0, %v2064
    %v2066 = vrot.slane %v2060, %v2065
    %v2067 = vlaneseq
    %v2068 = vshrl.u32 %v2067, 7
    %v2069 = vsub.s32 1, %v2068
    %v2070 = vrot.slane %v2060, %v2069
    %v2071 = vlaneseq
    %v2072 = vshrl.u32 %v2071, 7
    %v2073 = vsub.s32 2, %v2072
    %v2074 = vrot.slane %v2060, %v2073
    %v2110 = vunpack.c.l.b16 %v2027
    %v2111 = vunpack.c.h.b16 %v2027
    %v2112 = vunpack.c.l.b16 %v2028
    %v2113 = vunpack.c.l.b16 %v2029
    %v2114 = vunpack.c.h.b16 %v2029
    %v2115 = vunpack.c.l.b16 %v2030
    %v2116 = vunpack.c.l.b16 %v2031
    %v2117 = vunpack.c.h.b16 %v2031
    %v2118 = vunpack.c.l.b16 %v2032
    %v2119 = vunpack.c.l.b16 %v2033
    %v2120 = vunpack.c.h.b16 %v2033
    %v2121 = vunpack.c.l.b16 %v2034
    %v2122 = vunpack.c.l.b16 %v2035
    %v2123 = vunpack.c.h.b16 %v2035
    %v2124 = vunpack.c.l.b16 %v2036
    %v2125 = vunpack.c.l.b16 %v2037
    %v2126 = vunpack.c.h.b16 %v2037
    %v2127 = vunpack.c.l.b16 %v2038
    %v2128 = vunpack.c.l.b16 %v2039
    %v2129 = vunpack.c.h.b16 %v2039
    %v2130 = vunpack.c.l.b16 %v2040
    %v2131 = vunpack.c.l.b16 %v2041
    %v2132 = vunpack.c.h.b16 %v2041
    %v2133 = vunpack.c.l.b16 %v2042
    %v2134 = vunpack.c.l.b16 %v2043
    %v2135 = vunpack.c.h.b16 %v2043
    %v2136 = vunpack.c.l.b16 %v2044
    %v2137 = vunpack.c.l.b16 %v2045
    %v2138 = vunpack.c.h.b16 %v2045
    %v2139 = vunpack.c.l.b16 %v2046
    %v2140 = vunpack.c.l.b16 %v2047
    %v2141 = vunpack.c.h.b16 %v2047
    %v2142 = vunpack.c.l.b16 %v2048
    %v2143 = vunpack.c.l.b16 %v2049
    %v2144 = vunpack.c.h.b16 %v2049
    %v2145 = vunpack.c.l.b16 %v2050
    %v2146 = vunpack.c.l.b16 %v2051
    %v2147 = vunpack.c.h.b16 %v2051
    %v2148 = vunpack.c.l.b16 %v2052
    %v2149 = vunpack.c.l.b16 %v2053
    %v2150 = vunpack.c.h.b16 %v2053
    %v2151 = vunpack.c.l.b16 %v2054
    %v2152 = vunpack.c.l.b16 %v2055
    %v2153 = vunpack.c.h.b16 %v2055
    %v2154 = vunpack.c.l.b16 %v2056
    %v2155 = vunpack.c.l.b16 %v2057
    %v2156 = vunpack.c.h.b16 %v2057
    %v2157 = vunpack.c.l.b16 %v2058
    %v2158 = vpack.c.b16 %v2113, %v2110
    %v2159 = vpack.c.b16 %v2114, %v2111
    %v2160 = vpack.c.b16 %v2115, %v2112
    %v2161 = vpack.c.b16 %v2119, %v2116
    %v2162 = vpack.c.b16 %v2120, %v2117
    %v2163 = vpack.c.b16 %v2121, %v2118
    %v2164 = vpack.c.b16 %v2125, %v2122
    %v2165 = vpack.c.b16 %v2126, %v2123
    %v2166 = vpack.c.b16 %v2127, %v2124
    %v2167 = vpack.c.b16 %v2131, %v2128
    %v2168 = vpack.c.b16 %v2132, %v2129
    %v2169 = vpack.c.b16 %v2133, %v2130
    %v2170 = vpack.c.b16 %v2137, %v2134
    %v2171 = vpack.c.b16 %v2138, %v2135
    %v2172 = vpack.c.b16 %v2139, %v2136
    %v2173 = vpack.c.b16 %v2143, %v2140
    %v2174 = vpack.c.b16 %v2144, %v2141
    %v2175 = vpack.c.b16 %v2145, %v2142
    %v2176 = vpack.c.b16 %v2149, %v2146
    %v2177 = vpack.c.b16 %v2150, %v2147
    %v2178 = vpack.c.b16 %v2151, %v2148
    %v2179 = vpack.c.b16 %v2155, %v2152
    %v2180 = vpack.c.b16 %v2156, %v2153
    %v2181 = vpack.c.b16 %v2157, %v2154
    %2206 = vmatprep.subr.bf16.mxu0 %v2159
    %2207 = vmatpush1.bf16.msra.mxu0 %v2158
    %2208 = vmatprep.subr.bf16.mxu0 %v2162
    %2209 = vmatpush1.bf16.msra.mxu0 %v2161
    %2210 = vmatprep.subr.bf16.mxu0 %v2165
    %2211 = vmatpush1.bf16.msra.mxu0 %v2164
    %2212 = vmatprep.subr.bf16.mxu0 %v2168
    %2213 = vmatpush1.bf16.msra.mxu0 %v2167
    %2214 = vmatprep.subr.bf16.mxu0 %v2171
    %2215 = vmatpush1.bf16.msra.mxu0 %v2170
    %2216 = vmatprep.subr.bf16.mxu0 %v2174
    %2217 = vmatpush1.bf16.msra.mxu0 %v2173
    %2218 = vmatprep.subr.bf16.mxu0 %v2177
    %2219 = vmatpush1.bf16.msra.mxu0 %v2176
    %2220 = vmatprep.subr.bf16.mxu0 %v2180
    %2221 = vmatpush1.bf16.msra.mxu0 %v2179
    %2222 = vmatprep.subr.bf16.mxu0 0
    %2223 = vmatpush1.bf16.msra.mxu0 0
    %2224 = vmatprep.subr.bf16.mxu0 0
    %2225 = vmatpush1.bf16.msra.mxu0 0
    %2226 = vmatprep.subr.bf16.mxu0 0
    %2227 = vmatpush1.bf16.msra.mxu0 0
    %2228 = vmatprep.subr.bf16.mxu0 0
    %2229 = vmatpush1.bf16.msra.mxu0 0
    %2230 = vmatprep.subr.bf16.mxu0 0
    %2231 = vmatpush1.bf16.msra.mxu0 0
    %2232 = vmatprep.subr.bf16.mxu0 0
    %2233 = vmatpush1.bf16.msra.mxu0 0
    %2234 = vmatprep.subr.bf16.mxu0 0
    %2235 = vmatpush1.bf16.msra.mxu0 0
    %2236 = vmatprep.subr.bf16.mxu0 0
    %2237 = vmatpush1.bf16.msra.mxu0 0
    %2238 = vmatprep.mubr.bf16.mxu0 0
    %2239 = vmatmul.mubr.bf16.gmra.mrb[0].mxu0 %v2061
    %v2240 = vpop.f32.mrb[0].mxu0
    %v2241 = vadd.f32 %v2066, %v2240
    %v2242 = vpop.f32.mrb[0].mxu0
    %v2243 = vadd.f32 %v2070, %v2242
    %v2244 = vpop.f32.mrb[0].mxu0
    %v2245 = vadd.f32 %v2066, %v2244
    %v2246 = vpop.f32.mrb[0].mxu0
    %v2247 = vadd.f32 %v2070, %v2246
    %2248 = vdwg.mxu0
    %2249 = vmatprep.subr.bf16.mxu0 0
    %2250 = vmatpush1.bf16.msra.mxu0 %v2160
    %2251 = vmatprep.subr.bf16.mxu0 0
    %2252 = vmatpush1.bf16.msra.mxu0 %v2163
    %2253 = vmatprep.subr.bf16.mxu0 0
    %2254 = vmatpush1.bf16.msra.mxu0 %v2166
    %2255 = vmatprep.subr.bf16.mxu0 0
    %2256 = vmatpush1.bf16.msra.mxu0 %v2169
    %2257 = vmatprep.subr.bf16.mxu0 0
    %2258 = vmatpush1.bf16.msra.mxu0 %v2172
    %2259 = vmatprep.subr.bf16.mxu0 0
    %2260 = vmatpush1.bf16.msra.mxu0 %v2175
    %2261 = vmatprep.subr.bf16.mxu0 0
    %2262 = vmatpush1.bf16.msra.mxu0 %v2178
    %2263 = vmatprep.subr.bf16.mxu0 0
    %2264 = vmatpush1.bf16.msra.mxu0 %v2181
    %2265 = vmatprep.subr.bf16.mxu0 0
    %2266 = vmatpush1.bf16.msra.mxu0 0
    %2267 = vmatprep.subr.bf16.mxu0 0
    %2268 = vmatpush1.bf16.msra.mxu0 0
    %2269 = vmatprep.subr.bf16.mxu0 0
    %2270 = vmatpush1.bf16.msra.mxu0 0
    %2271 = vmatprep.subr.bf16.mxu0 0
    %2272 = vmatpush1.bf16.msra.mxu0 0
    %2273 = vmatprep.subr.bf16.mxu0 0
    %2274 = vmatpush1.bf16.msra.mxu0 0
    %2275 = vmatprep.subr.bf16.mxu0 0
    %2276 = vmatpush1.bf16.msra.mxu0 0
    %2277 = vmatprep.subr.bf16.mxu0 0
    %2278 = vmatpush1.bf16.msra.mxu0 0
    %2279 = vmatprep.subr.bf16.mxu0 0
    %2280 = vmatpush1.bf16.msra.mxu0 0
    %2281 = vmatprep.mubr.bf16.mxu0 0
    %2282 = vmatmul.mubr.bf16.gmra.mrb[0].mxu0 %v2061
    %v2283 = vpop.f32.mrb[0].mxu0
    %v2284 = vadd.f32 %v2074, %v2283
    %v2285 = vpop.f32.mrb[0].mxu0
    %v2286 = vpop.f32.mrb[0].mxu0
    %v2287 = vadd.f32 %v2074, %v2286
    %v2288 = vpop.f32.mrb[0].mxu0
    %2289 = vdwg.mxu0
    %v2291 = vsel %vm430, %v2241, 0
    %v2294 = vsel %vm430, %v2243, 0
    %2296 = vmatprep.subr.mxu0 0.0
    %2297 = vmatpush1.xpose.msra.mxu0 %v2294
    %2298 = vmatprep.subr.mxu0 0.0
    %2299 = vmatpush1.xpose.msra.mxu0 0.0
    %2300 = vmatprep.subr.mxu0 0.0
    %2301 = vmatpush1.xpose.msra.mxu0 0.0
    %2302 = vmatprep.subr.mxu0 0.0
    %2303 = vmatpush1.xpose.msra.mxu0 0.0
    %2304 = vmatprep.subr.mxu0 0.0
    %2305 = vmatpush1.xpose.msra.mxu0 0.0
    %2306 = vmatprep.subr.mxu0 0.0
    %2307 = vmatpush1.xpose.msra.mxu0 0.0
    %2308 = vmatprep.subr.mxu0 0.0
    %2309 = vmatpush1.xpose.msra.mxu0 0.0
    %2310 = vmatprep.subr.mxu0 0.0
    %2311 = vmatpush1.xpose.msra.mxu0 0.0
    %2312 = vmatprep.subr.mxu0 0.0
    %2313 = vmatpush1.xpose.msra.mxu0 0.0
    %2314 = vmatprep.subr.mxu0 0.0
    %2315 = vmatpush1.xpose.msra.mxu0 0.0
    %2316 = vmatprep.subr.mxu0 0.0
    %2317 = vmatpush1.xpose.msra.mxu0 0.0
    %2318 = vmatprep.subr.mxu0 0.0
    %2319 = vmatpush1.xpose.msra.mxu0 0.0
    %2320 = vmatprep.subr.mxu0 0.0
    %2321 = vmatpush1.xpose.msra.mxu0 0.0
    %2322 = vmatprep.subr.mxu0 0.0
    %2323 = vmatpush1.xpose.msra.mxu0 0.0
    %2324 = vmatprep.subr.mxu0 0.0
    %2325 = vmatpush1.xpose.msra.mxu0 0.0
    %2326 = vmatprep.subr.mxu0 0.0
    %2327 = vmatpush1.xpose.msra.mxu0 0.0
    %2328 = vmatprep.subr.mxu0 0.0
    %2329 = vmatpush1.xpose.msra.mxu0 0.0
    %2330 = vmatprep.subr.mxu0 0.0
    %2331 = vmatpush1.xpose.msra.mxu0 0.0
    %2332 = vmatprep.subr.mxu0 0.0
    %2333 = vmatpush1.xpose.msra.mxu0 0.0
    %2334 = vmatprep.subr.mxu0 0.0
    %2335 = vmatpush1.xpose.msra.mxu0 0.0
    %2336 = vmatprep.subr.mxu0 0.0
    %2337 = vmatpush1.xpose.msra.mxu0 0.0
    %2338 = vmatprep.subr.mxu0 0.0
    %2339 = vmatpush1.xpose.msra.mxu0 0.0
    %2340 = vmatprep.subr.mxu0 0.0
    %2341 = vmatpush1.xpose.msra.mxu0 0.0
    %2342 = vmatprep.subr.mxu0 0.0
    %2343 = vmatpush1.xpose.msra.mxu0 0.0
    %2344 = vmatprep.subr.mxu0 0.0
    %2345 = vmatpush1.xpose.msra.mxu0 0.0
    %2346 = vmatprep.subr.mxu0 0.0
    %2347 = vmatpush1.xpose.msra.mxu0 0.0
    %2348 = vmatprep.subr.mxu0 0.0
    %2349 = vmatpush1.xpose.msra.mxu0 0.0
    %2350 = vmatprep.subr.mxu0 0.0
    %2351 = vmatpush1.xpose.msra.mxu0 0.0
    %2352 = vmatprep.subr.mxu0 0.0
    %2353 = vmatpush1.xpose.msra.mxu0 0.0
    %2354 = vmatprep.subr.mxu0 0.0
    %2355 = vmatpush1.xpose.msra.mxu0 0.0
    %2356 = vmatprep.subr.mxu0 0.0
    %2357 = vmatpush1.xpose.msra.mxu0 0.0
    %2358 = vmatprep.subr.mxu0 0.0
    %2359 = vmatpush1.xpose.msra.mxu0 0.0
    %2360 = vmatprep.mubr.f32.mxu0 0.0
    %2361 = vmatmul.mubr.f32.gmra.mrb[0].mxu0 %v2291
    %v2362 = vpop.f32.mrb[0].mxu0
    %v2363 = vadd.f32 0.0, %v2362
    %v2364 = vpop.f32.mrb[0].mxu0
    %2365 = vdwg.mxu0
    %v2366 = vmul.f32 %v2363, 0.125
    %v2367 = vadd.f32 %v2366, %v120
    %v2368 = vsel %vm509, %v2367, -inf
    %2369 = vmax.xlane.f32.xlu0 %v2368
    %v2370 = vpop.xlane.xlu0 %2369
    %v2371 = vsub.f32 %v2367, %v2370
    %v2372 = vmul.f32 %v2371, 1.442695
    %v2373 = vpow.pop %v2372
    %v2374 = vsel %vm509, %v2373, 0.0
    %2375 = vadd.xlane.f32.xlu0 %v2374
    %v2376 = vpop.xlane.xlu0 %2375
    %v2377 = vrcp.pop %v2376
    %v2378 = vmul.f32 %v2373, %v2377
    %v2380 = vsel %vm509, %v2378, 0
    %2382 = vmatprep.subr.mxu0 0.0
    %2383 = vmatpush1.msra.mxu0 %v2284
    %2384 = vmatprep.subr.mxu0 0.0
    %2385 = vmatpush1.msra.mxu0 0.0
    %2386 = vmatprep.subr.mxu0 0.0
    %2387 = vmatpush1.msra.mxu0 0.0
    %2388 = vmatprep.subr.mxu0 0.0
    %2389 = vmatpush1.msra.mxu0 0.0
    %2390 = vmatprep.subr.mxu0 0.0
    %2391 = vmatpush1.msra.mxu0 0.0
    %2392 = vmatprep.subr.mxu0 0.0
    %2393 = vmatpush1.msra.mxu0 0.0
    %2394 = vmatprep.subr.mxu0 0.0
    %2395 = vmatpush1.msra.mxu0 0.0
    %2396 = vmatprep.subr.mxu0 0.0
    %2397 = vmatpush1.msra.mxu0 0.0
    %2398 = vmatprep.subr.mxu0 0.0
    %2399 = vmatpush1.msra.mxu0 0.0
    %2400 = vmatprep.subr.mxu0 0.0
    %2401 = vmatpush1.msra.mxu0 0.0
    %2402 = vmatprep.subr.mxu0 0.0
    %2403 = vmatpush1.msra.mxu0 0.0
    %2404 = vmatprep.subr.mxu0 0.0
    %2405 = vmatpush1.msra.mxu0 0.0
    %2406 = vmatprep.subr.mxu0 0.0
    %2407 = vmatpush1.msra.mxu0 0.0
    %2408 = vmatprep.subr.mxu0 0.0
    %2409 = vmatpush1.msra.mxu0 0.0
    %2410 = vmatprep.subr.mxu0 0.0
    %2411 = vmatpush1.msra.mxu0 0.0
    %2412 = vmatprep.subr.mxu0 0.0
    %2413 = vmatpush1.msra.mxu0 0.0
    %2414 = vmatprep.subr.mxu0 0.0
    %2415 = vmatpush1.msra.mxu0 0.0
    %2416 = vmatprep.subr.mxu0 0.0
    %2417 = vmatpush1.msra.mxu0 0.0
    %2418 = vmatprep.subr.mxu0 0.0
    %2419 = vmatpush1.msra.mxu0 0.0
    %2420 = vmatprep.subr.mxu0 0.0
    %2421 = vmatpush1.msra.mxu0 0.0
    %2422 = vmatprep.subr.mxu0 0.0
    %2423 = vmatpush1.msra.mxu0 0.0
    %2424 = vmatprep.subr.mxu0 0.0
    %2425 = vmatpush1.msra.mxu0 0.0
    %2426 = vmatprep.subr.mxu0 0.0
    %2427 = vmatpush1.msra.mxu0 0.0
    %2428 = vmatprep.subr.mxu0 0.0
    %2429 = vmatpush1.msra.mxu0 0.0
    %2430 = vmatprep.subr.mxu0 0.0
    %2431 = vmatpush1.msra.mxu0 0.0
    %2432 = vmatprep.subr.mxu0 0.0
    %2433 = vmatpush1.msra.mxu0 0.0
    %2434 = vmatprep.subr.mxu0 0.0
    %2435 = vmatpush1.msra.mxu0 0.0
    %2436 = vmatprep.subr.mxu0 0.0
    %2437 = vmatpush1.msra.mxu0 0.0
    %2438 = vmatprep.subr.mxu0 0.0
    %2439 = vmatpush1.msra.mxu0 0.0
    %2440 = vmatprep.subr.mxu0 0.0
    %2441 = vmatpush1.msra.mxu0 0.0
    %2442 = vmatprep.subr.mxu0 0.0
    %2443 = vmatpush1.msra.mxu0 0.0
    %2444 = vmatprep.subr.mxu0 0.0
    %2445 = vmatpush1.msra.mxu0 0.0
    %2446 = vmatprep.mubr.f32.mxu0 0.0
    %2447 = vmatmul.mubr.f32.gmra.mrb[0].mxu0 %v2380
    %v2448 = vpop.f32.mrb[0].mxu0
    %v2449 = vadd.f32 0.0, %v2448
    %v2450 = vpop.f32.mrb[0].mxu0
    %2451 = vdwg.mxu0
    %2452 = vst.msk [vmem:[#allocation2] sm:$0xff] %vm430, %v2449
    %2453 = vrot.lane.b32.xlu0 %v2241, 64
    %v2454 = vpop.permute.xlu0 %2453
    %2455 = vrot.lane.b32.xlu0 %v2243, 64
    %v2456 = vpop.permute.xlu0 %2455
    %v2457 = vsel %vm430, %v2454, 0
    %v2459 = vsel %vm430, %v2456, 0
    %2461 = vmatprep.subr.mxu0 0.0
    %2462 = vmatpush1.xpose.msra.mxu0 %v2459
    %2463 = vmatprep.subr.mxu0 0.0
    %2464 = vmatpush1.xpose.msra.mxu0 0.0
    %2465 = vmatprep.subr.mxu0 0.0
    %2466 = vmatpush1.xpose.msra.mxu0 0.0
    %2467 = vmatprep.subr.mxu0 0.0
    %2468 = vmatpush1.xpose.msra.mxu0 0.0
    %2469 = vmatprep.subr.mxu0 0.0
    %2470 = vmatpush1.xpose.msra.mxu0 0.0
    %2471 = vmatprep.subr.mxu0 0.0
    %2472 = vmatpush1.xpose.msra.mxu0 0.0
    %2473 = vmatprep.subr.mxu0 0.0
    %2474 = vmatpush1.xpose.msra.mxu0 0.0
    %2475 = vmatprep.subr.mxu0 0.0
    %2476 = vmatpush1.xpose.msra.mxu0 0.0
    %2477 = vmatprep.subr.mxu0 0.0
    %2478 = vmatpush1.xpose.msra.mxu0 0.0
    %2479 = vmatprep.subr.mxu0 0.0
    %2480 = vmatpush1.xpose.msra.mxu0 0.0
    %2481 = vmatprep.subr.mxu0 0.0
    %2482 = vmatpush1.xpose.msra.mxu0 0.0
    %2483 = vmatprep.subr.mxu0 0.0
    %2484 = vmatpush1.xpose.msra.mxu0 0.0
    %2485 = vmatprep.subr.mxu0 0.0
    %2486 = vmatpush1.xpose.msra.mxu0 0.0
    %2487 = vmatprep.subr.mxu0 0.0
    %2488 = vmatpush1.xpose.msra.mxu0 0.0
    %2489 = vmatprep.subr.mxu0 0.0
    %2490 = vmatpush1.xpose.msra.mxu0 0.0
    %2491 = vmatprep.subr.mxu0 0.0
    %2492 = vmatpush1.xpose.msra.mxu0 0.0
    %2493 = vmatprep.subr.mxu0 0.0
    %2494 = vmatpush1.xpose.msra.mxu0 0.0
    %2495 = vmatprep.subr.mxu0 0.0
    %2496 = vmatpush1.xpose.msra.mxu0 0.0
    %2497 = vmatprep.subr.mxu0 0.0
    %2498 = vmatpush1.xpose.msra.mxu0 0.0
    %2499 = vmatprep.subr.mxu0 0.0
    %2500 = vmatpush1.xpose.msra.mxu0 0.0
    %2501 = vmatprep.subr.mxu0 0.0
    %2502 = vmatpush1.xpose.msra.mxu0 0.0
    %2503 = vmatprep.subr.mxu0 0.0
    %2504 = vmatpush1.xpose.msra.mxu0 0.0
    %2505 = vmatprep.subr.mxu0 0.0
    %2506 = vmatpush1.xpose.msra.mxu0 0.0
    %2507 = vmatprep.subr.mxu0 0.0
    %2508 = vmatpush1.xpose.msra.mxu0 0.0
    %2509 = vmatprep.subr.mxu0 0.0
    %2510 = vmatpush1.xpose.msra.mxu0 0.0
    %2511 = vmatprep.subr.mxu0 0.0
    %2512 = vmatpush1.xpose.msra.mxu0 0.0
    %2513 = vmatprep.subr.mxu0 0.0
    %2514 = vmatpush1.xpose.msra.mxu0 0.0
    %2515 = vmatprep.subr.mxu0 0.0
    %2516 = vmatpush1.xpose.msra.mxu0 0.0
    %2517 = vmatprep.subr.mxu0 0.0
    %2518 = vmatpush1.xpose.msra.mxu0 0.0
    %2519 = vmatprep.subr.mxu0 0.0
    %2520 = vmatpush1.xpose.msra.mxu0 0.0
    %2521 = vmatprep.subr.mxu0 0.0
    %2522 = vmatpush1.xpose.msra.mxu0 0.0
    %2523 = vmatprep.subr.mxu0 0.0
    %2524 = vmatpush1.xpose.msra.mxu0 0.0
    %2525 = vmatprep.mubr.f32.mxu0 0.0
    %2526 = vmatmul.mubr.f32.gmra.mrb[0].mxu0 %v2457
    %v2527 = vpop.f32.mrb[0].mxu0
    %v2528 = vadd.f32 0.0, %v2527
    %v2529 = vpop.f32.mrb[0].mxu0
    %2530 = vdwg.mxu0
    %v2531 = vmul.f32 %v2528, 0.125
    %v2532 = vadd.f32 %v2531, %v120
    %v2533 = vsel %vm509, %v2532, -inf
    %2534 = vmax.xlane.f32.xlu0 %v2533
    %v2535 = vpop.xlane.xlu0 %2534
    %v2536 = vsub.f32 %v2532, %v2535
    %v2537 = vmul.f32 %v2536, 1.442695
    %v2538 = vpow.pop %v2537
    %v2539 = vsel %vm509, %v2538, 0.0
    %2540 = vadd.xlane.f32.xlu0 %v2539
    %v2541 = vpop.xlane.xlu0 %2540
    %v2542 = vrcp.pop %v2541
    %v2543 = vmul.f32 %v2538, %v2542
    %2545 = vrot.lane.b32.xlu0 %v2284, 64
    %v2546 = vpop.permute.xlu0 %2545
    %v2549 = vsel %vm509, %v2543, 0
    %2551 = vmatprep.subr.mxu0 0.0
    %2552 = vmatpush1.msra.mxu0 %v2546
    %2553 = vmatprep.subr.mxu0 0.0
    %2554 = vmatpush1.msra.mxu0 0.0
    %2555 = vmatprep.subr.mxu0 0.0
    %2556 = vmatpush1.msra.mxu0 0.0
    %2557 = vmatprep.subr.mxu0 0.0
    %2558 = vmatpush1.msra.mxu0 0.0
    %2559 = vmatprep.subr.mxu0 0.0
    %2560 = vmatpush1.msra.mxu0 0.0
    %2561 = vmatprep.subr.mxu0 0.0
    %2562 = vmatpush1.msra.mxu0 0.0
    %2563 = vmatprep.subr.mxu0 0.0
    %2564 = vmatpush1.msra.mxu0 0.0
    %2565 = vmatprep.subr.mxu0 0.0
    %2566 = vmatpush1.msra.mxu0 0.0
    %2567 = vmatprep.subr.mxu0 0.0
    %2568 = vmatpush1.msra.mxu0 0.0
    %2569 = vmatprep.subr.mxu0 0.0
    %2570 = vmatpush1.msra.mxu0 0.0
    %2571 = vmatprep.subr.mxu0 0.0
    %2572 = vmatpush1.msra.mxu0 0.0
    %2573 = vmatprep.subr.mxu0 0.0
    %2574 = vmatpush1.msra.mxu0 0.0
    %2575 = vmatprep.subr.mxu0 0.0
    %2576 = vmatpush1.msra.mxu0 0.0
    %2577 = vmatprep.subr.mxu0 0.0
    %2578 = vmatpush1.msra.mxu0 0.0
    %2579 = vmatprep.subr.mxu0 0.0
    %2580 = vmatpush1.msra.mxu0 0.0
    %2581 = vmatprep.subr.mxu0 0.0
    %2582 = vmatpush1.msra.mxu0 0.0
    %2583 = vmatprep.subr.mxu0 0.0
    %2584 = vmatpush1.msra.mxu0 0.0
    %2585 = vmatprep.subr.mxu0 0.0
    %2586 = vmatpush1.msra.mxu0 0.0
    %2587 = vmatprep.subr.mxu0 0.0
    %2588 = vmatpush1.msra.mxu0 0.0
    %2589 = vmatprep.subr.mxu0 0.0
    %2590 = vmatpush1.msra.mxu0 0.0
    %2591 = vmatprep.subr.mxu0 0.0
    %2592 = vmatpush1.msra.mxu0 0.0
    %2593 = vmatprep.subr.mxu0 0.0
    %2594 = vmatpush1.msra.mxu0 0.0
    %2595 = vmatprep.subr.mxu0 0.0
    %2596 = vmatpush1.msra.mxu0 0.0
    %2597 = vmatprep.subr.mxu0 0.0
    %2598 = vmatpush1.msra.mxu0 0.0
    %2599 = vmatprep.subr.mxu0 0.0
    %2600 = vmatpush1.msra.mxu0 0.0
    %2601 = vmatprep.subr.mxu0 0.0
    %2602 = vmatpush1.msra.mxu0 0.0
    %2603 = vmatprep.subr.mxu0 0.0
    %2604 = vmatpush1.msra.mxu0 0.0
    %2605 = vmatprep.subr.mxu0 0.0
    %2606 = vmatpush1.msra.mxu0 0.0
    %2607 = vmatprep.subr.mxu0 0.0
    %2608 = vmatpush1.msra.mxu0 0.0
    %2609 = vmatprep.subr.mxu0 0.0
    %2610 = vmatpush1.msra.mxu0 0.0
    %2611 = vmatprep.subr.mxu0 0.0
    %2612 = vmatpush1.msra.mxu0 0.0
    %2613 = vmatprep.subr.mxu0 0.0
    %2614 = vmatpush1.msra.mxu0 0.0
    %2615 = vmatprep.mubr.f32.mxu0 0.0
    %2616 = vmatmul.mubr.f32.gmra.mrb[0].mxu0 %v2549
    %v2617 = vpop.f32.mrb[0].mxu0
    %v2618 = vadd.f32 0.0, %v2617
    %v2619 = vpop.f32.mrb[0].mxu0
    %2620 = vdwg.mxu0
    %2622 = vrot.lane.b32.xlu0 %v2618, 64
    %v2623 = vpop.permute.xlu0 %2622
    %2625 = vst.msk [vmem:[#allocation2] sm:$0xff] %vm767, %v2623
    %v2627 = vsel %vm430, %v2245, 0
    %v2630 = vsel %vm430, %v2247, 0
    %2632 = vmatprep.subr.mxu0 0.0
    %2633 = vmatpush1.xpose.msra.mxu0 %v2630
    %2634 = vmatprep.subr.mxu0 0.0
    %2635 = vmatpush1.xpose.msra.mxu0 0.0
    %2636 = vmatprep.subr.mxu0 0.0
    %2637 = vmatpush1.xpose.msra.mxu0 0.0
    %2638 = vmatprep.subr.mxu0 0.0
    %2639 = vmatpush1.xpose.msra.mxu0 0.0
    %2640 = vmatprep.subr.mxu0 0.0
    %2641 = vmatpush1.xpose.msra.mxu0 0.0
    %2642 = vmatprep.subr.mxu0 0.0
    %2643 = vmatpush1.xpose.msra.mxu0 0.0
    %2644 = vmatprep.subr.mxu0 0.0
    %2645 = vmatpush1.xpose.msra.mxu0 0.0
    %2646 = vmatprep.subr.mxu0 0.0
    %2647 = vmatpush1.xpose.msra.mxu0 0.0
    %2648 = vmatprep.subr.mxu0 0.0
    %2649 = vmatpush1.xpose.msra.mxu0 0.0
    %2650 = vmatprep.subr.mxu0 0.0
    %2651 = vmatpush1.xpose.msra.mxu0 0.0
    %2652 = vmatprep.subr.mxu0 0.0
    %2653 = vmatpush1.xpose.msra.mxu0 0.0
    %2654 = vmatprep.subr.mxu0 0.0
    %2655 = vmatpush1.xpose.msra.mxu0 0.0
    %2656 = vmatprep.subr.mxu0 0.0
    %2657 = vmatpush1.xpose.msra.mxu0 0.0
    %2658 = vmatprep.subr.mxu0 0.0
    %2659 = vmatpush1.xpose.msra.mxu0 0.0
    %2660 = vmatprep.subr.mxu0 0.0
    %2661 = vmatpush1.xpose.msra.mxu0 0.0
    %2662 = vmatprep.subr.mxu0 0.0
    %2663 = vmatpush1.xpose.msra.mxu0 0.0
    %2664 = vmatprep.subr.mxu0 0.0
    %2665 = vmatpush1.xpose.msra.mxu0 0.0
    %2666 = vmatprep.subr.mxu0 0.0
    %2667 = vmatpush1.xpose.msra.mxu0 0.0
    %2668 = vmatprep.subr.mxu0 0.0
    %2669 = vmatpush1.xpose.msra.mxu0 0.0
    %2670 = vmatprep.subr.mxu0 0.0
    %2671 = vmatpush1.xpose.msra.mxu0 0.0
    %2672 = vmatprep.subr.mxu0 0.0
    %2673 = vmatpush1.xpose.msra.mxu0 0.0
    %2674 = vmatprep.subr.mxu0 0.0
    %2675 = vmatpush1.xpose.msra.mxu0 0.0
    %2676 = vmatprep.subr.mxu0 0.0
    %2677 = vmatpush1.xpose.msra.mxu0 0.0
    %2678 = vmatprep.subr.mxu0 0.0
    %2679 = vmatpush1.xpose.msra.mxu0 0.0
    %2680 = vmatprep.subr.mxu0 0.0
    %2681 = vmatpush1.xpose.msra.mxu0 0.0
    %2682 = vmatprep.subr.mxu0 0.0
    %2683 = vmatpush1.xpose.msra.mxu0 0.0
    %2684 = vmatprep.subr.mxu0 0.0
    %2685 = vmatpush1.xpose.msra.mxu0 0.0
    %2686 = vmatprep.subr.mxu0 0.0
    %2687 = vmatpush1.xpose.msra.mxu0 0.0
    %2688 = vmatprep.subr.mxu0 0.0
    %2689 = vmatpush1.xpose.msra.mxu0 0.0
    %2690 = vmatprep.subr.mxu0 0.0
    %2691 = vmatpush1.xpose.msra.mxu0 0.0
    %2692 = vmatprep.subr.mxu0 0.0
    %2693 = vmatpush1.xpose.msra.mxu0 0.0
    %2694 = vmatprep.subr.mxu0 0.0
    %2695 = vmatpush1.xpose.msra.mxu0 0.0
    %2696 = vmatprep.mubr.f32.mxu0 0.0
    %2697 = vmatmul.mubr.f32.gmra.mrb[0].mxu0 %v2627
    %v2698 = vpop.f32.mrb[0].mxu0
    %v2699 = vadd.f32 0.0, %v2698
    %v2700 = vpop.f32.mrb[0].mxu0
    %2701 = vdwg.mxu0
    %v2702 = vmul.f32 %v2699, 0.125
    %v2703 = vadd.f32 %v2702, %v124
    %v2704 = vsel %vm509, %v2703, -inf
    %2705 = vmax.xlane.f32.xlu0 %v2704
    %v2706 = vpop.xlane.xlu0 %2705
    %v2707 = vsub.f32 %v2703, %v2706
    %v2708 = vmul.f32 %v2707, 1.442695
    %v2709 = vpow.pop %v2708
    %v2710 = vsel %vm509, %v2709, 0.0
    %2711 = vadd.xlane.f32.xlu0 %v2710
    %v2712 = vpop.xlane.xlu0 %2711
    %v2713 = vrcp.pop %v2712
    %v2714 = vmul.f32 %v2709, %v2713
    %v2716 = vsel %vm509, %v2714, 0
    %2718 = vmatprep.subr.mxu0 0.0
    %2719 = vmatpush1.msra.mxu0 %v2287
    %2720 = vmatprep.subr.mxu0 0.0
    %2721 = vmatpush1.msra.mxu0 0.0
    %2722 = vmatprep.subr.mxu0 0.0
    %2723 = vmatpush1.msra.mxu0 0.0
    %2724 = vmatprep.subr.mxu0 0.0
    %2725 = vmatpush1.msra.mxu0 0.0
    %2726 = vmatprep.subr.mxu0 0.0
    %2727 = vmatpush1.msra.mxu0 0.0
    %2728 = vmatprep.subr.mxu0 0.0
    %2729 = vmatpush1.msra.mxu0 0.0
    %2730 = vmatprep.subr.mxu0 0.0
    %2731 = vmatpush1.msra.mxu0 0.0
    %2732 = vmatprep.subr.mxu0 0.0
    %2733 = vmatpush1.msra.mxu0 0.0
    %2734 = vmatprep.subr.mxu0 0.0
    %2735 = vmatpush1.msra.mxu0 0.0
    %2736 = vmatprep.subr.mxu0 0.0
    %2737 = vmatpush1.msra.mxu0 0.0
    %2738 = vmatprep.subr.mxu0 0.0
    %2739 = vmatpush1.msra.mxu0 0.0
    %2740 = vmatprep.subr.mxu0 0.0
    %2741 = vmatpush1.msra.mxu0 0.0
    %2742 = vmatprep.subr.mxu0 0.0
    %2743 = vmatpush1.msra.mxu0 0.0
    %2744 = vmatprep.subr.mxu0 0.0
    %2745 = vmatpush1.msra.mxu0 0.0
    %2746 = vmatprep.subr.mxu0 0.0
    %2747 = vmatpush1.msra.mxu0 0.0
    %2748 = vmatprep.subr.mxu0 0.0
    %2749 = vmatpush1.msra.mxu0 0.0
    %2750 = vmatprep.subr.mxu0 0.0
    %2751 = vmatpush1.msra.mxu0 0.0
    %2752 = vmatprep.subr.mxu0 0.0
    %2753 = vmatpush1.msra.mxu0 0.0
    %2754 = vmatprep.subr.mxu0 0.0
    %2755 = vmatpush1.msra.mxu0 0.0
    %2756 = vmatprep.subr.mxu0 0.0
    %2757 = vmatpush1.msra.mxu0 0.0
    %2758 = vmatprep.subr.mxu0 0.0
    %2759 = vmatpush1.msra.mxu0 0.0
    %2760 = vmatprep.subr.mxu0 0.0
    %2761 = vmatpush1.msra.mxu0 0.0
    %2762 = vmatprep.subr.mxu0 0.0
    %2763 = vmatpush1.msra.mxu0 0.0
    %2764 = vmatprep.subr.mxu0 0.0
    %2765 = vmatpush1.msra.mxu0 0.0
    %2766 = vmatprep.subr.mxu0 0.0
    %2767 = vmatpush1.msra.mxu0 0.0
    %2768 = vmatprep.subr.mxu0 0.0
    %2769 = vmatpush1.msra.mxu0 0.0
    %2770 = vmatprep.subr.mxu0 0.0
    %2771 = vmatpush1.msra.mxu0 0.0
    %2772 = vmatprep.subr.mxu0 0.0
    %2773 = vmatpush1.msra.mxu0 0.0
    %2774 = vmatprep.subr.mxu0 0.0
    %2775 = vmatpush1.msra.mxu0 0.0
    %2776 = vmatprep.subr.mxu0 0.0
    %2777 = vmatpush1.msra.mxu0 0.0
    %2778 = vmatprep.subr.mxu0 0.0
    %2779 = vmatpush1.msra.mxu0 0.0
    %2780 = vmatprep.subr.mxu0 0.0
    %2781 = vmatpush1.msra.mxu0 0.0
    %2782 = vmatprep.mubr.f32.mxu0 0.0
    %2783 = vmatmul.mubr.f32.gmra.mrb[0].mxu0 %v2716
    %v2784 = vpop.f32.mrb[0].mxu0
    %v2785 = vadd.f32 0.0, %v2784
    %v2786 = vpop.f32.mrb[0].mxu0
    %2787 = vdwg.mxu0
    %2788 = vst.msk [vmem:[#allocation2 + $0x8] sm:$0xff] %vm430, %v2785
    %2789 = vrot.lane.b32.xlu0 %v2245, 64
    %v2790 = vpop.permute.xlu0 %2789
    %2791 = vrot.lane.b32.xlu0 %v2247, 64
    %v2792 = vpop.permute.xlu0 %2791
    %v2793 = vsel %vm430, %v2790, 0
    %v2795 = vsel %vm430, %v2792, 0
    %2797 = vmatprep.subr.mxu0 0.0
    %2798 = vmatpush1.xpose.msra.mxu0 %v2795
    %2799 = vmatprep.subr.mxu0 0.0
    %2800 = vmatpush1.xpose.msra.mxu0 0.0
    %2801 = vmatprep.subr.mxu0 0.0
    %2802 = vmatpush1.xpose.msra.mxu0 0.0
    %2803 = vmatprep.subr.mxu0 0.0
    %2804 = vmatpush1.xpose.msra.mxu0 0.0
    %2805 = vmatprep.subr.mxu0 0.0
    %2806 = vmatpush1.xpose.msra.mxu0 0.0
    %2807 = vmatprep.subr.mxu0 0.0
    %2808 = vmatpush1.xpose.msra.mxu0 0.0
    %2809 = vmatprep.subr.mxu0 0.0
    %2810 = vmatpush1.xpose.msra.mxu0 0.0
    %2811 = vmatprep.subr.mxu0 0.0
    %2812 = vmatpush1.xpose.msra.mxu0 0.0
    %2813 = vmatprep.subr.mxu0 0.0
    %2814 = vmatpush1.xpose.msra.mxu0 0.0
    %2815 = vmatprep.subr.mxu0 0.0
    %2816 = vmatpush1.xpose.msra.mxu0 0.0
    %2817 = vmatprep.subr.mxu0 0.0
    %2818 = vmatpush1.xpose.msra.mxu0 0.0
    %2819 = vmatprep.subr.mxu0 0.0
    %2820 = vmatpush1.xpose.msra.mxu0 0.0
    %2821 = vmatprep.subr.mxu0 0.0
    %2822 = vmatpush1.xpose.msra.mxu0 0.0
    %2823 = vmatprep.subr.mxu0 0.0
    %2824 = vmatpush1.xpose.msra.mxu0 0.0
    %2825 = vmatprep.subr.mxu0 0.0
    %2826 = vmatpush1.xpose.msra.mxu0 0.0
    %2827 = vmatprep.subr.mxu0 0.0
    %2828 = vmatpush1.xpose.msra.mxu0 0.0
    %2829 = vmatprep.subr.mxu0 0.0
    %2830 = vmatpush1.xpose.msra.mxu0 0.0
    %2831 = vmatprep.subr.mxu0 0.0
    %2832 = vmatpush1.xpose.msra.mxu0 0.0
    %2833 = vmatprep.subr.mxu0 0.0
    %2834 = vmatpush1.xpose.msra.mxu0 0.0
    %2835 = vmatprep.subr.mxu0 0.0
    %2836 = vmatpush1.xpose.msra.mxu0 0.0
    %2837 = vmatprep.subr.mxu0 0.0
    %2838 = vmatpush1.xpose.msra.mxu0 0.0
    %2839 = vmatprep.subr.mxu0 0.0
    %2840 = vmatpush1.xpose.msra.mxu0 0.0
    %2841 = vmatprep.subr.mxu0 0.0
    %2842 = vmatpush1.xpose.msra.mxu0 0.0
    %2843 = vmatprep.subr.mxu0 0.0
    %2844 = vmatpush1.xpose.msra.mxu0 0.0
    %2845 = vmatprep.subr.mxu0 0.0
    %2846 = vmatpush1.xpose.msra.mxu0 0.0
    %2847 = vmatprep.subr.mxu0 0.0
    %2848 = vmatpush1.xpose.msra.mxu0 0.0
    %2849 = vmatprep.subr.mxu0 0.0
    %2850 = vmatpush1.xpose.msra.mxu0 0.0
    %2851 = vmatprep.subr.mxu0 0.0
    %2852 = vmatpush1.xpose.msra.mxu0 0.0
    %2853 = vmatprep.subr.mxu0 0.0
    %2854 = vmatpush1.xpose.msra.mxu0 0.0
    %2855 = vmatprep.subr.mxu0 0.0
    %2856 = vmatpush1.xpose.msra.mxu0 0.0
    %2857 = vmatprep.subr.mxu0 0.0
    %2858 = vmatpush1.xpose.msra.mxu0 0.0
    %2859 = vmatprep.subr.mxu0 0.0
    %2860 = vmatpush1.xpose.msra.mxu0 0.0
    %2861 = vmatprep.mubr.f32.mxu0 0.0
    %2862 = vmatmul.mubr.f32.gmra.mrb[0].mxu0 %v2793
    %v2863 = vpop.f32.mrb[0].mxu0
    %v2864 = vadd.f32 0.0, %v2863
    %v2865 = vpop.f32.mrb[0].mxu0
    %2866 = vdwg.mxu0
    %v2867 = vmul.f32 %v2864, 0.125
    %v2868 = vadd.f32 %v2867, %v124
    %v2869 = vsel %vm509, %v2868, -inf
    %2870 = vmax.xlane.f32.xlu0 %v2869
    %v2871 = vpop.xlane.xlu0 %2870
    %v2872 = vsub.f32 %v2868, %v2871
    %v2873 = vmul.f32 %v2872, 1.442695
    %v2874 = vpow.pop %v2873
    %v2875 = vsel %vm509, %v2874, 0.0
    %2876 = vadd.xlane.f32.xlu0 %v2875
    %v2877 = vpop.xlane.xlu0 %2876
    %v2878 = vrcp.pop %v2877
    %v2879 = vmul.f32 %v2874, %v2878
    %2881 = vrot.lane.b32.xlu0 %v2287, 64
    %v2882 = vpop.permute.xlu0 %2881
    %v2885 = vsel %vm509, %v2879, 0
    %2887 = vmatprep.subr.mxu0 0.0
    %2888 = vmatpush1.msra.mxu0 %v2882
    %2889 = vmatprep.subr.mxu0 0.0
    %2890 = vmatpush1.msra.mxu0 0.0
    %2891 = vmatprep.subr.mxu0 0.0
    %2892 = vmatpush1.msra.mxu0 0.0
    %2893 = vmatprep.subr.mxu0 0.0
    %2894 = vmatpush1.msra.mxu0 0.0
    %2895 = vmatprep.subr.mxu0 0.0
    %2896 = vmatpush1.msra.mxu0 0.0
    %2897 = vmatprep.subr.mxu0 0.0
    %2898 = vmatpush1.msra.mxu0 0.0
    %2899 = vmatprep.subr.mxu0 0.0
    %2900 = vmatpush1.msra.mxu0 0.0
    %2901 = vmatprep.subr.mxu0 0.0
    %2902 = vmatpush1.msra.mxu0 0.0
    %2903 = vmatprep.subr.mxu0 0.0
    %2904 = vmatpush1.msra.mxu0 0.0
    %2905 = vmatprep.subr.mxu0 0.0
    %2906 = vmatpush1.msra.mxu0 0.0
    %2907 = vmatprep.subr.mxu0 0.0
    %2908 = vmatpush1.msra.mxu0 0.0
    %2909 = vmatprep.subr.mxu0 0.0
    %2910 = vmatpush1.msra.mxu0 0.0
    %2911 = vmatprep.subr.mxu0 0.0
    %2912 = vmatpush1.msra.mxu0 0.0
    %2913 = vmatprep.subr.mxu0 0.0
    %2914 = vmatpush1.msra.mxu0 0.0
    %2915 = vmatprep.subr.mxu0 0.0
    %2916 = vmatpush1.msra.mxu0 0.0
    %2917 = vmatprep.subr.mxu0 0.0
    %2918 = vmatpush1.msra.mxu0 0.0
    %2919 = vmatprep.subr.mxu0 0.0
    %2920 = vmatpush1.msra.mxu0 0.0
    %2921 = vmatprep.subr.mxu0 0.0
    %2922 = vmatpush1.msra.mxu0 0.0
    %2923 = vmatprep.subr.mxu0 0.0
    %2924 = vmatpush1.msra.mxu0 0.0
    %2925 = vmatprep.subr.mxu0 0.0
    %2926 = vmatpush1.msra.mxu0 0.0
    %2927 = vmatprep.subr.mxu0 0.0
    %2928 = vmatpush1.msra.mxu0 0.0
    %2929 = vmatprep.subr.mxu0 0.0
    %2930 = vmatpush1.msra.mxu0 0.0
    %2931 = vmatprep.subr.mxu0 0.0
    %2932 = vmatpush1.msra.mxu0 0.0
    %2933 = vmatprep.subr.mxu0 0.0
    %2934 = vmatpush1.msra.mxu0 0.0
    %2935 = vmatprep.subr.mxu0 0.0
    %2936 = vmatpush1.msra.mxu0 0.0
    %2937 = vmatprep.subr.mxu0 0.0
    %2938 = vmatpush1.msra.mxu0 0.0
    %2939 = vmatprep.subr.mxu0 0.0
    %2940 = vmatpush1.msra.mxu0 0.0
    %2941 = vmatprep.subr.mxu0 0.0
    %2942 = vmatpush1.msra.mxu0 0.0
    %2943 = vmatprep.subr.mxu0 0.0
    %2944 = vmatpush1.msra.mxu0 0.0
    %2945 = vmatprep.subr.mxu0 0.0
    %2946 = vmatpush1.msra.mxu0 0.0
    %2947 = vmatprep.subr.mxu0 0.0
    %2948 = vmatpush1.msra.mxu0 0.0
    %2949 = vmatprep.subr.mxu0 0.0
    %2950 = vmatpush1.msra.mxu0 0.0
    %2951 = vmatprep.mubr.f32.mxu0 0.0
    %2952 = vmatmul.mubr.f32.gmra.mrb[0].mxu0 %v2885
    %v2953 = vpop.f32.mrb[0].mxu0
    %v2954 = vadd.f32 0.0, %v2953
    %v2955 = vpop.f32.mrb[0].mxu0
    %2956 = vdwg.mxu0
    %2958 = vrot.lane.b32.xlu0 %v2954, 64
    %v2959 = vpop.permute.xlu0 %2958
    %2961 = vst.msk [vmem:[#allocation2 + $0x8] sm:$0xff] %vm767, %v2959
    %v2962 = vld [vmem:[#allocation2] sm:$0xff]
    %v2963 = vld [vmem:[#allocation2 + $0x8] sm:$0xff]
    %s2964 = scalar_lea.vmem %s6, 64
    %v2965 = vld [vmem:[%s2964] sm:$0xf]
    %v2966 = vld [vmem:[%s2964 + $0x4] sm:$0xf]
    %v2967 = vld [vmem:[%s2964 + $0x8] sm:$0xf]
    %v2968 = vld [vmem:[%s2964 + $0xc] sm:$0xf]
    %v2969 = vld [vmem:[%s2964 + $0x10] sm:$0xf]
    %v2970 = vld [vmem:[%s2964 + $0x14] sm:$0xf]
    %v2971 = vld [vmem:[%s2964 + $0x18] sm:$0xf]
    %v2972 = vld [vmem:[%s2964 + $0x1c] sm:$0xf]
    %v2973 = vld [vmem:[%s2964 + $0x20] sm:$0xf]
    %v2974 = vld [vmem:[%s2964 + $0x24] sm:$0xf]
    %v2975 = vld [vmem:[%s2964 + $0x28] sm:$0xf]
    %v2976 = vld [vmem:[%s2964 + $0x2c] sm:$0xf]
    %v2977 = vld [vmem:[%s2964 + $0x30] sm:$0xf]
    %v2978 = vld [vmem:[%s2964 + $0x34] sm:$0xf]
    %v2979 = vld [vmem:[%s2964 + $0x38] sm:$0xf]
    %v2980 = vld [vmem:[%s2964 + $0x3c] sm:$0xf]
    %s2981 = scalar_lea.vmem %s7, 1
    %v2982 = vld [vmem:[%s2981] sm:$0x1]
    %v2983 = vpack.c.bf16 %v2963, %v2962
    %v2985 = vlaneseq
    %v2986 = vshrl.u32 %v2985, 7
    %v2987 = vsub.s32 0, %v2986
    %v2988 = vrot.slane %v2982, %v2987
    %v3006 = vunpack.c.l.b16 %v2965
    %v3007 = vunpack.c.l.b16 %v2966
    %v3008 = vunpack.c.l.b16 %v2967
    %v3009 = vunpack.c.l.b16 %v2968
    %v3010 = vunpack.c.l.b16 %v2969
    %v3011 = vunpack.c.l.b16 %v2970
    %v3012 = vunpack.c.l.b16 %v2971
    %v3013 = vunpack.c.l.b16 %v2972
    %v3014 = vunpack.c.l.b16 %v2973
    %v3015 = vunpack.c.l.b16 %v2974
    %v3016 = vunpack.c.l.b16 %v2975
    %v3017 = vunpack.c.l.b16 %v2976
    %v3018 = vunpack.c.l.b16 %v2977
    %v3019 = vunpack.c.l.b16 %v2978
    %v3020 = vunpack.c.l.b16 %v2979
    %v3021 = vunpack.c.l.b16 %v2980
    %v3022 = vpack.c.b16 %v3007, %v3006
    %v3023 = vpack.c.b16 %v3009, %v3008
    %v3024 = vpack.c.b16 %v3011, %v3010
    %v3025 = vpack.c.b16 %v3013, %v3012
    %v3026 = vpack.c.b16 %v3015, %v3014
    %v3027 = vpack.c.b16 %v3017, %v3016
    %v3028 = vpack.c.b16 %v3019, %v3018
    %v3029 = vpack.c.b16 %v3021, %v3020
    %3038 = vmatprep.subr.bf16.mxu0 0
    %3039 = vmatpush1.bf16.msra.mxu0 %v3022
    %3040 = vmatprep.subr.bf16.mxu0 0
    %3041 = vmatpush1.bf16.msra.mxu0 %v3023
    %3042 = vmatprep.subr.bf16.mxu0 0
    %3043 = vmatpush1.bf16.msra.mxu0 %v3024
    %3044 = vmatprep.subr.bf16.mxu0 0
    %3045 = vmatpush1.bf16.msra.mxu0 %v3025
    %3046 = vmatprep.subr.bf16.mxu0 0
    %3047 = vmatpush1.bf16.msra.mxu0 %v3026
    %3048 = vmatprep.subr.bf16.mxu0 0
    %3049 = vmatpush1.bf16.msra.mxu0 %v3027
    %3050 = vmatprep.subr.bf16.mxu0 0
    %3051 = vmatpush1.bf16.msra.mxu0 %v3028
    %3052 = vmatprep.subr.bf16.mxu0 0
    %3053 = vmatpush1.bf16.msra.mxu0 %v3029
    %3054 = vmatprep.subr.bf16.mxu0 0
    %3055 = vmatpush1.bf16.msra.mxu0 0
    %3056 = vmatprep.subr.bf16.mxu0 0
    %3057 = vmatpush1.bf16.msra.mxu0 0
    %3058 = vmatprep.subr.bf16.mxu0 0
    %3059 = vmatpush1.bf16.msra.mxu0 0
    %3060 = vmatprep.subr.bf16.mxu0 0
    %3061 = vmatpush1.bf16.msra.mxu0 0
    %3062 = vmatprep.subr.bf16.mxu0 0
    %3063 = vmatpush1.bf16.msra.mxu0 0
    %3064 = vmatprep.subr.bf16.mxu0 0
    %3065 = vmatpush1.bf16.msra.mxu0 0
    %3066 = vmatprep.subr.bf16.mxu0 0
    %3067 = vmatpush1.bf16.msra.mxu0 0
    %3068 = vmatprep.subr.bf16.mxu0 0
    %3069 = vmatpush1.bf16.msra.mxu0 0
    %3070 = vmatprep.mubr.bf16.mxu0 0
    %3071 = vmatmul.mubr.bf16.gmra.mrb[0].mxu0 %v2983
    %v3072 = vpop.f32.mrb[0].mxu0
    %v3073 = vadd.f32 %v2988, %v3072
    %v3074 = vpop.f32.mrb[0].mxu0
    %v3075 = vpop.f32.mrb[0].mxu0
    %v3076 = vadd.f32 %v2988, %v3075
    %v3077 = vpop.f32.mrb[0].mxu0
    %3078 = vdwg.mxu0
    %v3079 = vadd.f32 %v2024, %v3073
    %v3080 = vadd.f32 %v2025, %v3076
    %s3081 = scalar_lea.vmem %s8, 1
    %v3082 = vld [vmem:[%s3081] sm:$0x1]
    %s3083 = scalar_lea.vmem %s9, 1
    %v3084 = vld [vmem:[%s3083] sm:$0x1]
    %3085 = vadd.xlane.f32.xlu0 %v3079
    %v3086 = vpop.xlane.xlu0 %3085
    %3087 = vadd.xlane.f32.xlu0 %v3080
    %v3088 = vpop.xlane.xlu0 %3087
    %v3089 = vmul.f32 %v3086, %v133
    %v3090 = vmul.f32 %v3088, %v133
    %v3091 = vsub.f32 %v3079, %v3089
    %v3092 = vsub.f32 %v3080, %v3090
    %v3093 = vmul.f32 %v3091, %v3091
    %v3094 = vmul.f32 %v3092, %v3092
    %3095 = vadd.xlane.f32.xlu0 %v3093
    %v3096 = vpop.xlane.xlu0 %3095
    %3097 = vadd.xlane.f32.xlu0 %v3094
    %v3098 = vpop.xlane.xlu0 %3097
    %v3099 = vmul.f32 %v3096, %v133
    %v3100 = vmul.f32 %v3098, %v133
    %v3101 = vadd.f32 %v3099, 1e-12
    %v3102 = vadd.f32 %v3100, 1e-12
    %v3103 = vrsqrt.pop %v3101
    %v3104 = vrsqrt.pop %v3102
    %v3105 = vmul.f32 %v3091, %v3103
    %v3106 = vmul.f32 %v3092, %v3104
    %v3108 = vlaneseq
    %v3109 = vshrl.u32 %v3108, 7
    %v3110 = vsub.s32 0, %v3109
    %v3111 = vrot.slane %v3082, %v3110
    %v3113 = vmul.f32 %v3105, %v3111
    %v3114 = vmul.f32 %v3106, %v3111
    %v3116 = vlaneseq
    %v3117 = vshrl.u32 %v3116, 7
    %v3118 = vsub.s32 0, %v3117
    %v3119 = vrot.slane %v3084, %v3118
    %v3121 = vadd.f32 %v3113, %v3119
    %v3122 = vadd.f32 %v3114, %v3119
    %s3123 = scalar_lea.vmem [#allocation8], 256
    %v3124 = vld [vmem:[%s3123] sm:$0xff]
    %v3125 = vld [vmem:[%s3123 + $0x8] sm:$0xff]
    %v3126 = vld [vmem:[%s3123 + $0x10] sm:$0xff]
    %v3127 = vld [vmem:[%s3123 + $0x18] sm:$0xff]
    %v3128 = vld [vmem:[%s3123 + $0x20] sm:$0xff]
    %v3129 = vld [vmem:[%s3123 + $0x28] sm:$0xff]
    %v3130 = vld [vmem:[%s3123 + $0x30] sm:$0xff]
    %v3131 = vld [vmem:[%s3123 + $0x38] sm:$0xff]
    %v3132 = vld [vmem:[%s3123 + $0x40] sm:$0xff]
    %v3133 = vld [vmem:[%s3123 + $0x48] sm:$0xff]
    %v3134 = vld [vmem:[%s3123 + $0x50] sm:$0xff]
    %v3135 = vld [vmem:[%s3123 + $0x58] sm:$0xff]
    %v3136 = vld [vmem:[%s3123 + $0x60] sm:$0xff]
    %v3137 = vld [vmem:[%s3123 + $0x68] sm:$0xff]
    %v3138 = vld [vmem:[%s3123 + $0x70] sm:$0xff]
    %v3139 = vld [vmem:[%s3123 + $0x78] sm:$0xff]
    %v3140 = vld [vmem:[%s3123 + $0x80] sm:$0xff]
    %v3141 = vld [vmem:[%s3123 + $0x88] sm:$0xff]
    %v3142 = vld [vmem:[%s3123 + $0x90] sm:$0xff]
    %v3143 = vld [vmem:[%s3123 + $0x98] sm:$0xff]
    %v3144 = vld [vmem:[%s3123 + $0xa0] sm:$0xff]
    %v3145 = vld [vmem:[%s3123 + $0xa8] sm:$0xff]
    %v3146 = vld [vmem:[%s3123 + $0xb0] sm:$0xff]
    %v3147 = vld [vmem:[%s3123 + $0xb8] sm:$0xff]
    %v3148 = vld [vmem:[%s3123 + $0xc0] sm:$0xff]
    %v3149 = vld [vmem:[%s3123 + $0xc8] sm:$0xff]
    %v3150 = vld [vmem:[%s3123 + $0xd0] sm:$0xff]
    %v3151 = vld [vmem:[%s3123 + $0xd8] sm:$0xff]
    %v3152 = vld [vmem:[%s3123 + $0xe0] sm:$0xff]
    %v3153 = vld [vmem:[%s3123 + $0xe8] sm:$0xff]
    %v3154 = vld [vmem:[%s3123 + $0xf0] sm:$0xff]
    %v3155 = vld [vmem:[%s3123 + $0xf8] sm:$0xff]
    %s3156 = scalar_lea.vmem %s11, 4
    %v3157 = vld [vmem:[%s3156] sm:$0xf]
    %v3158 = vpack.c.bf16 %v3122, %v3121
    %v3160 = vlaneseq
    %v3161 = vshrl.u32 %v3160, 7
    %v3162 = vsub.s32 0, %v3161
    %v3163 = vrot.slane %v3157, %v3162
    %v3164 = vlaneseq
    %v3165 = vshrl.u32 %v3164, 7
    %v3166 = vsub.s32 1, %v3165
    %v3167 = vrot.slane %v3157, %v3166
    %v3168 = vlaneseq
    %v3169 = vshrl.u32 %v3168, 7
    %v3170 = vsub.s32 2, %v3169
    %v3171 = vrot.slane %v3157, %v3170
    %v3172 = vlaneseq
    %v3173 = vshrl.u32 %v3172, 7
    %v3174 = vsub.s32 3, %v3173
    %v3175 = vrot.slane %v3157, %v3174
    %v3212 = vunpack.c.l.b16 %v3124
    %v3213 = vunpack.c.h.b16 %v3124
    %v3214 = vunpack.c.l.b16 %v3125
    %v3215 = vunpack.c.h.b16 %v3125
    %v3216 = vunpack.c.l.b16 %v3126
    %v3217 = vunpack.c.h.b16 %v3126
    %v3218 = vunpack.c.l.b16 %v3127
    %v3219 = vunpack.c.h.b16 %v3127
    %v3220 = vunpack.c.l.b16 %v3128
    %v3221 = vunpack.c.h.b16 %v3128
    %v3222 = vunpack.c.l.b16 %v3129
    %v3223 = vunpack.c.h.b16 %v3129
    %v3224 = vunpack.c.l.b16 %v3130
    %v3225 = vunpack.c.h.b16 %v3130
    %v3226 = vunpack.c.l.b16 %v3131
    %v3227 = vunpack.c.h.b16 %v3131
    %v3228 = vunpack.c.l.b16 %v3132
    %v3229 = vunpack.c.h.b16 %v3132
    %v3230 = vunpack.c.l.b16 %v3133
    %v3231 = vunpack.c.h.b16 %v3133
    %v3232 = vunpack.c.l.b16 %v3134
    %v3233 = vunpack.c.h.b16 %v3134
    %v3234 = vunpack.c.l.b16 %v3135
    %v3235 = vunpack.c.h.b16 %v3135
    %v3236 = vunpack.c.l.b16 %v3136
    %v3237 = vunpack.c.h.b16 %v3136
    %v3238 = vunpack.c.l.b16 %v3137
    %v3239 = vunpack.c.h.b16 %v3137
    %v3240 = vunpack.c.l.b16 %v3138
    %v3241 = vunpack.c.h.b16 %v3138
    %v3242 = vunpack.c.l.b16 %v3139
    %v3243 = vunpack.c.h.b16 %v3139
    %v3244 = vunpack.c.l.b16 %v3140
    %v3245 = vunpack.c.h.b16 %v3140
    %v3246 = vunpack.c.l.b16 %v3141
    %v3247 = vunpack.c.h.b16 %v3141
    %v3248 = vunpack.c.l.b16 %v3142
    %v3249 = vunpack.c.h.b16 %v3142
    %v3250 = vunpack.c.l.b16 %v3143
    %v3251 = vunpack.c.h.b16 %v3143
    %v3252 = vunpack.c.l.b16 %v3144
    %v3253 = vunpack.c.h.b16 %v3144
    %v3254 = vunpack.c.l.b16 %v3145
    %v3255 = vunpack.c.h.b16 %v3145
    %v3256 = vunpack.c.l.b16 %v3146
    %v3257 = vunpack.c.h.b16 %v3146
    %v3258 = vunpack.c.l.b16 %v3147
    %v3259 = vunpack.c.h.b16 %v3147
    %v3260 = vunpack.c.l.b16 %v3148
    %v3261 = vunpack.c.h.b16 %v3148
    %v3262 = vunpack.c.l.b16 %v3149
    %v3263 = vunpack.c.h.b16 %v3149
    %v3264 = vunpack.c.l.b16 %v3150
    %v3265 = vunpack.c.h.b16 %v3150
    %v3266 = vunpack.c.l.b16 %v3151
    %v3267 = vunpack.c.h.b16 %v3151
    %v3268 = vunpack.c.l.b16 %v3152
    %v3269 = vunpack.c.h.b16 %v3152
    %v3270 = vunpack.c.l.b16 %v3153
    %v3271 = vunpack.c.h.b16 %v3153
    %v3272 = vunpack.c.l.b16 %v3154
    %v3273 = vunpack.c.h.b16 %v3154
    %v3274 = vunpack.c.l.b16 %v3155
    %v3275 = vunpack.c.h.b16 %v3155
    %v3276 = vpack.c.b16 %v3216, %v3212
    %v3277 = vpack.c.b16 %v3217, %v3213
    %v3278 = vpack.c.b16 %v3218, %v3214
    %v3279 = vpack.c.b16 %v3219, %v3215
    %v3280 = vpack.c.b16 %v3224, %v3220
    %v3281 = vpack.c.b16 %v3225, %v3221
    %v3282 = vpack.c.b16 %v3226, %v3222
    %v3283 = vpack.c.b16 %v3227, %v3223
    %v3284 = vpack.c.b16 %v3232, %v3228
    %v3285 = vpack.c.b16 %v3233, %v3229
    %v3286 = vpack.c.b16 %v3234, %v3230
    %v3287 = vpack.c.b16 %v3235, %v3231
    %v3288 = vpack.c.b16 %v3240, %v3236
    %v3289 = vpack.c.b16 %v3241, %v3237
    %v3290 = vpack.c.b16 %v3242, %v3238
    %v3291 = vpack.c.b16 %v3243, %v3239
    %v3292 = vpack.c.b16 %v3248, %v3244
    %v3293 = vpack.c.b16 %v3249, %v3245
    %v3294 = vpack.c.b16 %v3250, %v3246
    %v3295 = vpack.c.b16 %v3251, %v3247
    %v3296 = vpack.c.b16 %v3256, %v3252
    %v3297 = vpack.c.b16 %v3257, %v3253
    %v3298 = vpack.c.b16 %v3258, %v3254
    %v3299 = vpack.c.b16 %v3259, %v3255
    %v3300 = vpack.c.b16 %v3264, %v3260
    %v3301 = vpack.c.b16 %v3265, %v3261
    %v3302 = vpack.c.b16 %v3266, %v3262
    %v3303 = vpack.c.b16 %v3267, %v3263
    %v3304 = vpack.c.b16 %v3272, %v3268
    %v3305 = vpack.c.b16 %v3273, %v3269
    %v3306 = vpack.c.b16 %v3274, %v3270
    %v3307 = vpack.c.b16 %v3275, %v3271
    %3340 = vmatprep.subr.bf16.mxu0 %v3277
    %3341 = vmatpush1.bf16.msra.mxu0 %v3276
    %3342 = vmatprep.subr.bf16.mxu0 %v3281
    %3343 = vmatpush1.bf16.msra.mxu0 %v3280
    %3344 = vmatprep.subr.bf16.mxu0 %v3285
    %3345 = vmatpush1.bf16.msra.mxu0 %v3284
    %3346 = vmatprep.subr.bf16.mxu0 %v3289
    %3347 = vmatpush1.bf16.msra.mxu0 %v3288
    %3348 = vmatprep.subr.bf16.mxu0 %v3293
    %3349 = vmatpush1.bf16.msra.mxu0 %v3292
    %3350 = vmatprep.subr.bf16.mxu0 %v3297
    %3351 = vmatpush1.bf16.msra.mxu0 %v3296
    %3352 = vmatprep.subr.bf16.mxu0 %v3301
    %3353 = vmatpush1.bf16.msra.mxu0 %v3300
    %3354 = vmatprep.subr.bf16.mxu0 %v3305
    %3355 = vmatpush1.bf16.msra.mxu0 %v3304
    %3356 = vmatprep.subr.bf16.mxu0 0
    %3357 = vmatpush1.bf16.msra.mxu0 0
    %3358 = vmatprep.subr.bf16.mxu0 0
    %3359 = vmatpush1.bf16.msra.mxu0 0
    %3360 = vmatprep.subr.bf16.mxu0 0
    %3361 = vmatpush1.bf16.msra.mxu0 0
    %3362 = vmatprep.subr.bf16.mxu0 0
    %3363 = vmatpush1.bf16.msra.mxu0 0
    %3364 = vmatprep.subr.bf16.mxu0 0
    %3365 = vmatpush1.bf16.msra.mxu0 0
    %3366 = vmatprep.subr.bf16.mxu0 0
    %3367 = vmatpush1.bf16.msra.mxu0 0
    %3368 = vmatprep.subr.bf16.mxu0 0
    %3369 = vmatpush1.bf16.msra.mxu0 0
    %3370 = vmatprep.subr.bf16.mxu0 0
    %3371 = vmatpush1.bf16.msra.mxu0 0
    %3372 = vmatprep.mubr.bf16.mxu0 0
    %3373 = vmatmul.mubr.bf16.gmra.mrb[0].mxu0 %v3158
    %v3374 = vpop.f32.mrb[0].mxu0
    %v3375 = vadd.f32 %v3163, %v3374
    %v3376 = vpop.f32.mrb[0].mxu0
    %v3377 = vadd.f32 %v3167, %v3376
    %v3378 = vpop.f32.mrb[0].mxu0
    %v3379 = vadd.f32 %v3163, %v3378
    %v3380 = vpop.f32.mrb[0].mxu0
    %v3381 = vadd.f32 %v3167, %v3380
    %3382 = vdwg.mxu0
    %3383 = vmatprep.subr.bf16.mxu0 %v3279
    %3384 = vmatpush1.bf16.msra.mxu0 %v3278
    %3385 = vmatprep.subr.bf16.mxu0 %v3283
    %3386 = vmatpush1.bf16.msra.mxu0 %v3282
    %3387 = vmatprep.subr.bf16.mxu0 %v3287
    %3388 = vmatpush1.bf16.msra.mxu0 %v3286
    %3389 = vmatprep.subr.bf16.mxu0 %v3291
    %3390 = vmatpush1.bf16.msra.mxu0 %v3290
    %3391 = vmatprep.subr.bf16.mxu0 %v3295
    %3392 = vmatpush1.bf16.msra.mxu0 %v3294
    %3393 = vmatprep.subr.bf16.mxu0 %v3299
    %3394 = vmatpush1.bf16.msra.mxu0 %v3298
    %3395 = vmatprep.subr.bf16.mxu0 %v3303
    %3396 = vmatpush1.bf16.msra.mxu0 %v3302
    %3397 = vmatprep.subr.bf16.mxu0 %v3307
    %3398 = vmatpush1.bf16.msra.mxu0 %v3306
    %3399 = vmatprep.subr.bf16.mxu0 0
    %3400 = vmatpush1.bf16.msra.mxu0 0
    %3401 = vmatprep.subr.bf16.mxu0 0
    %3402 = vmatpush1.bf16.msra.mxu0 0
    %3403 = vmatprep.subr.bf16.mxu0 0
    %3404 = vmatpush1.bf16.msra.mxu0 0
    %3405 = vmatprep.subr.bf16.mxu0 0
    %3406 = vmatpush1.bf16.msra.mxu0 0
    %3407 = vmatprep.subr.bf16.mxu0 0
    %3408 = vmatpush1.bf16.msra.mxu0 0
    %3409 = vmatprep.subr.bf16.mxu0 0
    %3410 = vmatpush1.bf16.msra.mxu0 0
    %3411 = vmatprep.subr.bf16.mxu0 0
    %3412 = vmatpush1.bf16.msra.mxu0 0
    %3413 = vmatprep.subr.bf16.mxu0 0
    %3414 = vmatpush1.bf16.msra.mxu0 0
    %3415 = vmatprep.mubr.bf16.mxu0 0
    %3416 = vmatmul.mubr.bf16.gmra.mrb[0].mxu0 %v3158
    %v3417 = vpop.f32.mrb[0].mxu0
    %v3418 = vadd.f32 %v3171, %v3417
    %v3419 = vpop.f32.mrb[0].mxu0
    %v3420 = vadd.f32 %v3175, %v3419
    %v3421 = vpop.f32.mrb[0].mxu0
    %v3422 = vadd.f32 %v3171, %v3421
    %v3423 = vpop.f32.mrb[0].mxu0
    %v3424 = vadd.f32 %v3175, %v3423
    %3425 = vdwg.mxu0
    %v3426 = vmul.f32 %v3375, 0.5
    %v3427 = vmul.f32 %v3377, 0.5
    %v3428 = vmul.f32 %v3418, 0.5
    %v3429 = vmul.f32 %v3420, 0.5
    %v3430 = vmul.f32 %v3379, 0.5
    %v3431 = vmul.f32 %v3381, 0.5
    %v3432 = vmul.f32 %v3422, 0.5
    %v3433 = vmul.f32 %v3424, 0.5
    %v3434 = vmul.f32 %v3375, 0.044715
    %v3435 = vmul.f32 %v3377, 0.044715
    %v3436 = vmul.f32 %v3418, 0.044715
    %v3437 = vmul.f32 %v3420, 0.044715
    %v3438 = vmul.f32 %v3379, 0.044715
    %v3439 = vmul.f32 %v3381, 0.044715
    %v3440 = vmul.f32 %v3422, 0.044715
    %v3441 = vmul.f32 %v3424, 0.044715
    %v3442 = vmul.f32 %v3434, %v3375
    %v3443 = vmul.f32 %v3435, %v3377
    %v3444 = vmul.f32 %v3436, %v3418
    %v3445 = vmul.f32 %v3437, %v3420
    %v3446 = vmul.f32 %v3438, %v3379
    %v3447 = vmul.f32 %v3439, %v3381
    %v3448 = vmul.f32 %v3440, %v3422
    %v3449 = vmul.f32 %v3441, %v3424
    %v3450 = vmul.f32 %v3442, %v3375
    %v3451 = vmul.f32 %v3443, %v3377
    %v3452 = vmul.f32 %v3444, %v3418
    %v3453 = vmul.f32 %v3445, %v3420
    %v3454 = vmul.f32 %v3446, %v3379
    %v3455 = vmul.f32 %v3447, %v3381
    %v3456 = vmul.f32 %v3448, %v3422
    %v3457 = vmul.f32 %v3449, %v3424
    %v3458 = vadd.f32 %v3375, %v3450
    %v3459 = vadd.f32 %v3377, %v3451
    %v3460 = vadd.f32 %v3418, %v3452
    %v3461 = vadd.f32 %v3420, %v3453
    %v3462 = vadd.f32 %v3379, %v3454
    %v3463 = vadd.f32 %v3381, %v3455
    %v3464 = vadd.f32 %v3422, %v3456
    %v3465 = vadd.f32 %v3424, %v3457
    %v3466 = vmul.f32 %v3458, 0.7978846
    %v3467 = vmul.f32 %v3459, 0.7978846
    %v3468 = vmul.f32 %v3460, 0.7978846
    %v3469 = vmul.f32 %v3461, 0.7978846
    %v3470 = vmul.f32 %v3462, 0.7978846
    %v3471 = vmul.f32 %v3463, 0.7978846
    %v3472 = vmul.f32 %v3464, 0.7978846
    %v3473 = vmul.f32 %v3465, 0.7978846
    %v3474 = vtanh.pop %v3466
    %v3475 = vtanh.pop %v3467
    %v3476 = vtanh.pop %v3468
    %v3477 = vtanh.pop %v3469
    %v3478 = vtanh.pop %v3470
    %v3479 = vtanh.pop %v3471
    %v3480 = vtanh.pop %v3472
    %v3481 = vtanh.pop %v3473
    %v3482 = vadd.f32 %v3474, 1.0
    %v3483 = vadd.f32 %v3475, 1.0
    %v3484 = vadd.f32 %v3476, 1.0
    %v3485 = vadd.f32 %v3477, 1.0
    %v3486 = vadd.f32 %v3478, 1.0
    %v3487 = vadd.f32 %v3479, 1.0
    %v3488 = vadd.f32 %v3480, 1.0
    %v3489 = vadd.f32 %v3481, 1.0
    %v3490 = vmul.f32 %v3426, %v3482
    %v3491 = vmul.f32 %v3427, %v3483
    %v3492 = vmul.f32 %v3428, %v3484
    %v3493 = vmul.f32 %v3429, %v3485
    %v3494 = vmul.f32 %v3430, %v3486
    %v3495 = vmul.f32 %v3431, %v3487
    %v3496 = vmul.f32 %v3432, %v3488
    %v3497 = vmul.f32 %v3433, %v3489
    %s3498 = scalar_lea.vmem [#allocation10], 256
    %v3499 = vld [vmem:[%s3498] sm:$0xf]
    %v3500 = vld [vmem:[%s3498 + $0x4] sm:$0xf]
    %v3501 = vld [vmem:[%s3498 + $0x8] sm:$0xf]
    %v3502 = vld [vmem:[%s3498 + $0xc] sm:$0xf]
    %v3503 = vld [vmem:[%s3498 + $0x10] sm:$0xf]
    %v3504 = vld [vmem:[%s3498 + $0x14] sm:$0xf]
    %v3505 = vld [vmem:[%s3498 + $0x18] sm:$0xf]
    %v3506 = vld [vmem:[%s3498 + $0x1c] sm:$0xf]
    %v3507 = vld [vmem:[%s3498 + $0x20] sm:$0xf]
    %v3508 = vld [vmem:[%s3498 + $0x24] sm:$0xf]
    %v3509 = vld [vmem:[%s3498 + $0x28] sm:$0xf]
    %v3510 = vld [vmem:[%s3498 + $0x2c] sm:$0xf]
    %v3511 = vld [vmem:[%s3498 + $0x30] sm:$0xf]
    %v3512 = vld [vmem:[%s3498 + $0x34] sm:$0xf]
    %v3513 = vld [vmem:[%s3498 + $0x38] sm:$0xf]
    %v3514 = vld [vmem:[%s3498 + $0x3c] sm:$0xf]
    %v3515 = vld [vmem:[%s3498 + $0x40] sm:$0xf]
    %v3516 = vld [vmem:[%s3498 + $0x44] sm:$0xf]
    %v3517 = vld [vmem:[%s3498 + $0x48] sm:$0xf]
    %v3518 = vld [vmem:[%s3498 + $0x4c] sm:$0xf]
    %v3519 = vld [vmem:[%s3498 + $0x50] sm:$0xf]
    %v3520 = vld [vmem:[%s3498 + $0x54] sm:$0xf]
    %v3521 = vld [vmem:[%s3498 + $0x58] sm:$0xf]
    %v3522 = vld [vmem:[%s3498 + $0x5c] sm:$0xf]
    %v3523 = vld [vmem:[%s3498 + $0x60] sm:$0xf]
    %v3524 = vld [vmem:[%s3498 + $0x64] sm:$0xf]
    %v3525 = vld [vmem:[%s3498 + $0x68] sm:$0xf]
    %v3526 = vld [vmem:[%s3498 + $0x6c] sm:$0xf]
    %v3527 = vld [vmem:[%s3498 + $0x70] sm:$0xf]
    %v3528 = vld [vmem:[%s3498 + $0x74] sm:$0xf]
    %v3529 = vld [vmem:[%s3498 + $0x78] sm:$0xf]
    %v3530 = vld [vmem:[%s3498 + $0x7c] sm:$0xf]
    %v3531 = vld [vmem:[%s3498 + $0x80] sm:$0xf]
    %v3532 = vld [vmem:[%s3498 + $0x84] sm:$0xf]
    %v3533 = vld [vmem:[%s3498 + $0x88] sm:$0xf]
    %v3534 = vld [vmem:[%s3498 + $0x8c] sm:$0xf]
    %v3535 = vld [vmem:[%s3498 + $0x90] sm:$0xf]
    %v3536 = vld [vmem:[%s3498 + $0x94] sm:$0xf]
    %v3537 = vld [vmem:[%s3498 + $0x98] sm:$0xf]
    %v3538 = vld [vmem:[%s3498 + $0x9c] sm:$0xf]
    %v3539 = vld [vmem:[%s3498 + $0xa0] sm:$0xf]
    %v3540 = vld [vmem:[%s3498 + $0xa4] sm:$0xf]
    %v3541 = vld [vmem:[%s3498 + $0xa8] sm:$0xf]
    %v3542 = vld [vmem:[%s3498 + $0xac] sm:$0xf]
    %v3543 = vld [vmem:[%s3498 + $0xb0] sm:$0xf]
    %v3544 = vld [vmem:[%s3498 + $0xb4] sm:$0xf]
    %v3545 = vld [vmem:[%s3498 + $0xb8] sm:$0xf]
    %v3546 = vld [vmem:[%s3498 + $0xbc] sm:$0xf]
    %v3547 = vld [vmem:[%s3498 + $0xc0] sm:$0xf]
    %v3548 = vld [vmem:[%s3498 + $0xc4] sm:$0xf]
    %v3549 = vld [vmem:[%s3498 + $0xc8] sm:$0xf]
    %v3550 = vld [vmem:[%s3498 + $0xcc] sm:$0xf]
    %v3551 = vld [vmem:[%s3498 + $0xd0] sm:$0xf]
    %v3552 = vld [vmem:[%s3498 + $0xd4] sm:$0xf]
    %v3553 = vld [vmem:[%s3498 + $0xd8] sm:$0xf]
    %v3554 = vld [vmem:[%s3498 + $0xdc] sm:$0xf]
    %v3555 = vld [vmem:[%s3498 + $0xe0] sm:$0xf]
    %v3556 = vld [vmem:[%s3498 + $0xe4] sm:$0xf]
    %v3557 = vld [vmem:[%s3498 + $0xe8] sm:$0xf]
    %v3558 = vld [vmem:[%s3498 + $0xec] sm:$0xf]
    %v3559 = vld [vmem:[%s3498 + $0xf0] sm:$0xf]
    %v3560 = vld [vmem:[%s3498 + $0xf4] sm:$0xf]
    %v3561 = vld [vmem:[%s3498 + $0xf8] sm:$0xf]
    %v3562 = vld [vmem:[%s3498 + $0xfc] sm:$0xf]
    %s3563 = scalar_lea.vmem %s13, 1
    %v3564 = vld [vmem:[%s3563] sm:$0x1]
    %v3565 = vpack.c.bf16 %v3494, %v3490
    %v3566 = vpack.c.bf16 %v3495, %v3491
    %v3567 = vpack.c.bf16 %v3496, %v3492
    %v3568 = vpack.c.bf16 %v3497, %v3493
    %v3570 = vlaneseq
    %v3571 = vshrl.u32 %v3570, 7
    %v3572 = vsub.s32 0, %v3571
    %v3573 = vrot.slane %v3564, %v3572
    %v3639 = vunpack.c.l.b16 %v3499
    %v3640 = vunpack.c.l.b16 %v3500
    %v3641 = vunpack.c.l.b16 %v3501
    %v3642 = vunpack.c.l.b16 %v3502
    %v3643 = vunpack.c.l.b16 %v3503
    %v3644 = vunpack.c.l.b16 %v3504
    %v3645 = vunpack.c.l.b16 %v3505
    %v3646 = vunpack.c.l.b16 %v3506
    %v3647 = vunpack.c.l.b16 %v3507
    %v3648 = vunpack.c.l.b16 %v3508
    %v3649 = vunpack.c.l.b16 %v3509
    %v3650 = vunpack.c.l.b16 %v3510
    %v3651 = vunpack.c.l.b16 %v3511
    %v3652 = vunpack.c.l.b16 %v3512
    %v3653 = vunpack.c.l.b16 %v3513
    %v3654 = vunpack.c.l.b16 %v3514
    %v3655 = vunpack.c.l.b16 %v3515
    %v3656 = vunpack.c.l.b16 %v3516
    %v3657 = vunpack.c.l.b16 %v3517
    %v3658 = vunpack.c.l.b16 %v3518
    %v3659 = vunpack.c.l.b16 %v3519
    %v3660 = vunpack.c.l.b16 %v3520
    %v3661 = vunpack.c.l.b16 %v3521
    %v3662 = vunpack.c.l.b16 %v3522
    %v3663 = vunpack.c.l.b16 %v3523
    %v3664 = vunpack.c.l.b16 %v3524
    %v3665 = vunpack.c.l.b16 %v3525
    %v3666 = vunpack.c.l.b16 %v3526
    %v3667 = vunpack.c.l.b16 %v3527
    %v3668 = vunpack.c.l.b16 %v3528
    %v3669 = vunpack.c.l.b16 %v3529
    %v3670 = vunpack.c.l.b16 %v3530
    %v3671 = vunpack.c.l.b16 %v3531
    %v3672 = vunpack.c.l.b16 %v3532
    %v3673 = vunpack.c.l.b16 %v3533
    %v3674 = vunpack.c.l.b16 %v3534
    %v3675 = vunpack.c.l.b16 %v3535
    %v3676 = vunpack.c.l.b16 %v3536
    %v3677 = vunpack.c.l.b16 %v3537
    %v3678 = vunpack.c.l.b16 %v3538
    %v3679 = vunpack.c.l.b16 %v3539
    %v3680 = vunpack.c.l.b16 %v3540
    %v3681 = vunpack.c.l.b16 %v3541
    %v3682 = vunpack.c.l.b16 %v3542
    %v3683 = vunpack.c.l.b16 %v3543
    %v3684 = vunpack.c.l.b16 %v3544
    %v3685 = vunpack.c.l.b16 %v3545
    %v3686 = vunpack.c.l.b16 %v3546
    %v3687 = vunpack.c.l.b16 %v3547
    %v3688 = vunpack.c.l.b16 %v3548
    %v3689 = vunpack.c.l.b16 %v3549
    %v3690 = vunpack.c.l.b16 %v3550
    %v3691 = vunpack.c.l.b16 %v3551
    %v3692 = vunpack.c.l.b16 %v3552
    %v3693 = vunpack.c.l.b16 %v3553
    %v3694 = vunpack.c.l.b16 %v3554
    %v3695 = vunpack.c.l.b16 %v3555
    %v3696 = vunpack.c.l.b16 %v3556
    %v3697 = vunpack.c.l.b16 %v3557
    %v3698 = vunpack.c.l.b16 %v3558
    %v3699 = vunpack.c.l.b16 %v3559
    %v3700 = vunpack.c.l.b16 %v3560
    %v3701 = vunpack.c.l.b16 %v3561
    %v3702 = vunpack.c.l.b16 %v3562
    %v3703 = vpack.c.b16 %v3640, %v3639
    %v3704 = vpack.c.b16 %v3642, %v3641
    %v3705 = vpack.c.b16 %v3644, %v3643
    %v3706 = vpack.c.b16 %v3646, %v3645
    %v3707 = vpack.c.b16 %v3648, %v3647
    %v3708 = vpack.c.b16 %v3650, %v3649
    %v3709 = vpack.c.b16 %v3652, %v3651
    %v3710 = vpack.c.b16 %v3654, %v3653
    %v3711 = vpack.c.b16 %v3656, %v3655
    %v3712 = vpack.c.b16 %v3658, %v3657
    %v3713 = vpack.c.b16 %v3660, %v3659
    %v3714 = vpack.c.b16 %v3662, %v3661
    %v3715 = vpack.c.b16 %v3664, %v3663
    %v3716 = vpack.c.b16 %v3666, %v3665
    %v3717 = vpack.c.b16 %v3668, %v3667
    %v3718 = vpack.c.b16 %v3670, %v3669
    %v3719 = vpack.c.b16 %v3672, %v3671
    %v3720 = vpack.c.b16 %v3674, %v3673
    %v3721 = vpack.c.b16 %v3676, %v3675
    %v3722 = vpack.c.b16 %v3678, %v3677
    %v3723 = vpack.c.b16 %v3680, %v3679
    %v3724 = vpack.c.b16 %v3682, %v3681
    %v3725 = vpack.c.b16 %v3684, %v3683
    %v3726 = vpack.c.b16 %v3686, %v3685
    %v3727 = vpack.c.b16 %v3688, %v3687
    %v3728 = vpack.c.b16 %v3690, %v3689
    %v3729 = vpack.c.b16 %v3692, %v3691
    %v3730 = vpack.c.b16 %v3694, %v3693
    %v3731 = vpack.c.b16 %v3696, %v3695
    %v3732 = vpack.c.b16 %v3698, %v3697
    %v3733 = vpack.c.b16 %v3700, %v3699
    %v3734 = vpack.c.b16 %v3702, %v3701
    %3767 = vmatprep.subr.bf16.mxu0 0
    %3768 = vmatpush1.bf16.msra.mxu0 %v3703
    %3769 = vmatprep.subr.bf16.mxu0 0
    %3770 = vmatpush1.bf16.msra.mxu0 %v3704
    %3771 = vmatprep.subr.bf16.mxu0 0
    %3772 = vmatpush1.bf16.msra.mxu0 %v3705
    %3773 = vmatprep.subr.bf16.mxu0 0
    %3774 = vmatpush1.bf16.msra.mxu0 %v3706
    %3775 = vmatprep.subr.bf16.mxu0 0
    %3776 = vmatpush1.bf16.msra.mxu0 %v3707
    %3777 = vmatprep.subr.bf16.mxu0 0
    %3778 = vmatpush1.bf16.msra.mxu0 %v3708
    %3779 = vmatprep.subr.bf16.mxu0 0
    %3780 = vmatpush1.bf16.msra.mxu0 %v3709
    %3781 = vmatprep.subr.bf16.mxu0 0
    %3782 = vmatpush1.bf16.msra.mxu0 %v3710
    %3783 = vmatprep.subr.bf16.mxu0 0
    %3784 = vmatpush1.bf16.msra.mxu0 %v3711
    %3785 = vmatprep.subr.bf16.mxu0 0
    %3786 = vmatpush1.bf16.msra.mxu0 %v3712
    %3787 = vmatprep.subr.bf16.mxu0 0
    %3788 = vmatpush1.bf16.msra.mxu0 %v3713
    %3789 = vmatprep.subr.bf16.mxu0 0
    %3790 = vmatpush1.bf16.msra.mxu0 %v3714
    %3791 = vmatprep.subr.bf16.mxu0 0
    %3792 = vmatpush1.bf16.msra.mxu0 %v3715
    %3793 = vmatprep.subr.bf16.mxu0 0
    %3794 = vmatpush1.bf16.msra.mxu0 %v3716
    %3795 = vmatprep.subr.bf16.mxu0 0
    %3796 = vmatpush1.bf16.msra.mxu0 %v3717
    %3797 = vmatprep.subr.bf16.mxu0 0
    %3798 = vmatpush1.bf16.msra.mxu0 %v3718
    %3799 = vmatprep.mubr.bf16.mxu0 %v3566
    %3800 = vmatmul.mubr.bf16.gmra.mrb[0].mxu0 %v3565
    %v3801 = vpop.f32.mrb[0].mxu0
    %v3802 = vadd.f32 %v3573, %v3801
    %v3803 = vpop.f32.mrb[0].mxu0
    %v3804 = vpop.f32.mrb[0].mxu0
    %v3805 = vadd.f32 %v3573, %v3804
    %v3806 = vpop.f32.mrb[0].mxu0
    %3807 = vdwg.mxu0
    %3808 = vmatprep.subr.bf16.mxu0 0
    %3809 = vmatpush1.bf16.msra.mxu0 %v3719
    %3810 = vmatprep.subr.bf16.mxu0 0
    %3811 = vmatpush1.bf16.msra.mxu0 %v3720
    %3812 = vmatprep.subr.bf16.mxu0 0
    %3813 = vmatpush1.bf16.msra.mxu0 %v3721
    %3814 = vmatprep.subr.bf16.mxu0 0
    %3815 = vmatpush1.bf16.msra.mxu0 %v3722
    %3816 = vmatprep.subr.bf16.mxu0 0
    %3817 = vmatpush1.bf16.msra.mxu0 %v3723
    %3818 = vmatprep.subr.bf16.mxu0 0
    %3819 = vmatpush1.bf16.msra.mxu0 %v3724
    %3820 = vmatprep.subr.bf16.mxu0 0
    %3821 = vmatpush1.bf16.msra.mxu0 %v3725
    %3822 = vmatprep.subr.bf16.mxu0 0
    %3823 = vmatpush1.bf16.msra.mxu0 %v3726
    %3824 = vmatprep.subr.bf16.mxu0 0
    %3825 = vmatpush1.bf16.msra.mxu0 %v3727
    %3826 = vmatprep.subr.bf16.mxu0 0
    %3827 = vmatpush1.bf16.msra.mxu0 %v3728
    %3828 = vmatprep.subr.bf16.mxu0 0
    %3829 = vmatpush1.bf16.msra.mxu0 %v3729
    %3830 = vmatprep.subr.bf16.mxu0 0
    %3831 = vmatpush1.bf16.msra.mxu0 %v3730
    %3832 = vmatprep.subr.bf16.mxu0 0
    %3833 = vmatpush1.bf16.msra.mxu0 %v3731
    %3834 = vmatprep.subr.bf16.mxu0 0
    %3835 = vmatpush1.bf16.msra.mxu0 %v3732
    %3836 = vmatprep.subr.bf16.mxu0 0
    %3837 = vmatpush1.bf16.msra.mxu0 %v3733
    %3838 = vmatprep.subr.bf16.mxu0 0
    %3839 = vmatpush1.bf16.msra.mxu0 %v3734
    %3840 = vmatprep.mubr.bf16.mxu0 %v3568
    %3841 = vmatmul.mubr.bf16.gmra.mrb[0].mxu0 %v3567
    %v3842 = vpop.f32.mrb[0].mxu0
    %v3843 = vadd.f32 %v3802, %v3842
    %v3844 = vpop.f32.mrb[0].mxu0
    %v3845 = vpop.f32.mrb[0].mxu0
    %v3846 = vadd.f32 %v3805, %v3845
    %v3847 = vpop.f32.mrb[0].mxu0
    %3848 = vdwg.mxu0
    %v3849 = vadd.f32 %v3121, %v3843
    %v3850 = vadd.f32 %v3122, %v3846
    %s3851 = scalar_lea.vmem %s14, 1
    %v3852 = vld [vmem:[%s3851] sm:$0x1]
    %s3853 = scalar_lea.vmem %s15, 1
    %v3854 = vld [vmem:[%s3853] sm:$0x1]
    %3855 = vadd.xlane.f32.xlu0 %v3849
    %v3856 = vpop.xlane.xlu0 %3855
    %3857 = vadd.xlane.f32.xlu0 %v3850
    %v3858 = vpop.xlane.xlu0 %3857
    %v3859 = vmul.f32 %v3856, %v133
    %v3860 = vmul.f32 %v3858, %v133
    %v3861 = vsub.f32 %v3849, %v3859
    %v3862 = vsub.f32 %v3850, %v3860
    %v3863 = vmul.f32 %v3861, %v3861
    %v3864 = vmul.f32 %v3862, %v3862
    %3865 = vadd.xlane.f32.xlu0 %v3863
    %v3866 = vpop.xlane.xlu0 %3865
    %3867 = vadd.xlane.f32.xlu0 %v3864
    %v3868 = vpop.xlane.xlu0 %3867
    %v3869 = vmul.f32 %v3866, %v133
    %v3870 = vmul.f32 %v3868, %v133
    %v3871 = vadd.f32 %v3869, 1e-12
    %v3872 = vadd.f32 %v3870, 1e-12
    %v3873 = vrsqrt.pop %v3871
    %v3874 = vrsqrt.pop %v3872
    %v3875 = vmul.f32 %v3861, %v3873
    %v3876 = vmul.f32 %v3862, %v3874
    %v3878 = vlaneseq
    %v3879 = vshrl.u32 %v3878, 7
    %v3880 = vsub.s32 0, %v3879
    %v3881 = vrot.slane %v3852, %v3880
    %v3883 = vmul.f32 %v3875, %v3881
    %v3884 = vmul.f32 %v3876, %v3881
    %v3886 = vlaneseq
    %v3887 = vshrl.u32 %v3886, 7
    %v3888 = vsub.s32 0, %v3887
    %v3889 = vrot.slane %v3854, %v3888
    %v3891 = vadd.f32 %v3883, %v3889
    %v3892 = vadd.f32 %v3884, %v3889
    %v3893 = vld [vmem:[%s16] sm:$0xf]
    %v3894 = vld [vmem:[%s16 + $0x4] sm:$0xf]
    %v3895 = vld [vmem:[%s16 + $0x8] sm:$0xf]
    %v3896 = vld [vmem:[%s16 + $0xc] sm:$0xf]
    %v3897 = vld [vmem:[%s16 + $0x10] sm:$0xf]
    %v3898 = vld [vmem:[%s16 + $0x14] sm:$0xf]
    %v3899 = vld [vmem:[%s16 + $0x18] sm:$0xf]
    %v3900 = vld [vmem:[%s16 + $0x1c] sm:$0xf]
    %v3901 = vld [vmem:[%s16 + $0x20] sm:$0xf]
    %v3902 = vld [vmem:[%s16 + $0x24] sm:$0xf]
    %v3903 = vld [vmem:[%s16 + $0x28] sm:$0xf]
    %v3904 = vld [vmem:[%s16 + $0x2c] sm:$0xf]
    %v3905 = vld [vmem:[%s16 + $0x30] sm:$0xf]
    %v3906 = vld [vmem:[%s16 + $0x34] sm:$0xf]
    %v3907 = vld [vmem:[%s16 + $0x38] sm:$0xf]
    %v3908 = vld [vmem:[%s16 + $0x3c] sm:$0xf]
    %v3909 = vld [vmem:[%s17] sm:$0x1]
    %v3910 = vpack.c.bf16 %v3892, %v3891
    %v3912 = vlaneseq
    %v3913 = vshrl.u32 %v3912, 7
    %v3914 = vsub.s32 0, %v3913
    %v3915 = vrot.slane %v3909, %v3914
    %v3933 = vunpack.c.l.b16 %v3893
    %v3934 = vunpack.c.l.b16 %v3894
    %v3935 = vunpack.c.l.b16 %v3895
    %v3936 = vunpack.c.l.b16 %v3896
    %v3937 = vunpack.c.l.b16 %v3897
    %v3938 = vunpack.c.l.b16 %v3898
    %v3939 = vunpack.c.l.b16 %v3899
    %v3940 = vunpack.c.l.b16 %v3900
    %v3941 = vunpack.c.l.b16 %v3901
    %v3942 = vunpack.c.l.b16 %v3902
    %v3943 = vunpack.c.l.b16 %v3903
    %v3944 = vunpack.c.l.b16 %v3904
    %v3945 = vunpack.c.l.b16 %v3905
    %v3946 = vunpack.c.l.b16 %v3906
    %v3947 = vunpack.c.l.b16 %v3907
    %v3948 = vunpack.c.l.b16 %v3908
    %v3949 = vpack.c.b16 %v3934, %v3933
    %v3950 = vpack.c.b16 %v3936, %v3935
    %v3951 = vpack.c.b16 %v3938, %v3937
    %v3952 = vpack.c.b16 %v3940, %v3939
    %v3953 = vpack.c.b16 %v3942, %v3941
    %v3954 = vpack.c.b16 %v3944, %v3943
    %v3955 = vpack.c.b16 %v3946, %v3945
    %v3956 = vpack.c.b16 %v3948, %v3947
    %3965 = vmatprep.subr.bf16.mxu0 0
    %3966 = vmatpush1.bf16.msra.mxu0 %v3949
    %3967 = vmatprep.subr.bf16.mxu0 0
    %3968 = vmatpush1.bf16.msra.mxu0 %v3950
    %3969 = vmatprep.subr.bf16.mxu0 0
    %3970 = vmatpush1.bf16.msra.mxu0 %v3951
    %3971 = vmatprep.subr.bf16.mxu0 0
    %3972 = vmatpush1.bf16.msra.mxu0 %v3952
    %3973 = vmatprep.subr.bf16.mxu0 0
    %3974 = vmatpush1.bf16.msra.mxu0 %v3953
    %3975 = vmatprep.subr.bf16.mxu0 0
    %3976 = vmatpush1.bf16.msra.mxu0 %v3954
    %3977 = vmatprep.subr.bf16.mxu0 0
    %3978 = vmatpush1.bf16.msra.mxu0 %v3955
    %3979 = vmatprep.subr.bf16.mxu0 0
    %3980 = vmatpush1.bf16.msra.mxu0 %v3956
    %3981 = vmatprep.subr.bf16.mxu0 0
    %3982 = vmatpush1.bf16.msra.mxu0 0
    %3983 = vmatprep.subr.bf16.mxu0 0
    %3984 = vmatpush1.bf16.msra.mxu0 0
    %3985 = vmatprep.subr.bf16.mxu0 0
    %3986 = vmatpush1.bf16.msra.mxu0 0
    %3987 = vmatprep.subr.bf16.mxu0 0
    %3988 = vmatpush1.bf16.msra.mxu0 0
    %3989 = vmatprep.subr.bf16.mxu0 0
    %3990 = vmatpush1.bf16.msra.mxu0 0
    %3991 = vmatprep.subr.bf16.mxu0 0
    %3992 = vmatpush1.bf16.msra.mxu0 0
    %3993 = vmatprep.subr.bf16.mxu0 0
    %3994 = vmatpush1.bf16.msra.mxu0 0
    %3995 = vmatprep.subr.bf16.mxu0 0
    %3996 = vmatpush1.bf16.msra.mxu0 0
    %3997 = vmatprep.mubr.bf16.mxu0 0
    %3998 = vmatmul.mubr.bf16.gmra.mrb[0].mxu0 %v3910
    %v3999 = vpop.f32.mrb[0].mxu0
    %v4000 = vadd.f32 %v3915, %v3999
    %v4001 = vpop.f32.mrb[0].mxu0
    %v4002 = vpop.f32.mrb[0].mxu0
    %v4003 = vadd.f32 %v3915, %v4002
    %v4004 = vpop.f32.mrb[0].mxu0
    %4005 = vdwg.mxu0
    %4006 = vst [vmem:[#allocation11] sm:$0xff] %v4000
    %4007 = vst [vmem:[#allocation11 + $0x8] sm:$0xff] %v4003
    // Predicated region
    $region90: #{bert_encoder_forward.1} parent=1 // pred_check
      _
    $region91: #{bert_encoder_forward.1} parent=1 // pred_check_branch
      %4009 = sbr.rel (0) target = $region93
    $region92: #{bert_encoder_forward.1} parent=1 // pred_region
      %s4011 = ssub.s32 256, 256
      %4012 = vsyncadd [#allocation5], %s4011
      %s4013 = sshll.u32 [#allocation11], 4
      %s4014 = int_to_ptr.vmem [resolvable:$true] %s4013
      %4019 = dma.vmem_to_hbm [thread:$0]  %s4014, 256, %s18, [#allocation5], 128, 128, 8
    $region93: #{bert_encoder_forward.1} parent=1 // pred_fallthru
      _
    // Predicated region
    $region94: #{bert_encoder_forward.1} parent=1 // pred_check
      _
    $region95: #{bert_encoder_forward.1} parent=1 // pred_check_branch
      %4021 = sbr.rel (0) target = $region97
    $region96: #{bert_encoder_forward.1} parent=1 // pred_region
      %4022 = dma.done [#allocation5], 256
    $region97: #{bert_encoder_forward.1} parent=1 // pred_fallthru
      _
    %4023 = vsyncpa [#allocation4], 1
    %4024 = vsyncpa [#allocation9], 1
    %4025 = vsyncpa [#allocation5], 1
    %4026 = vsyncpa [#allocation6], 1

</llo_original>
